<compile_context>
chip_gen: v7x
topology: tpu7x:2x2x1
jax: 0.10.0
libtpu: 0.0.40
codegen_flags: <defaults>
</compile_context>

<pallas_src>
import jax
import jax.numpy as jnp
from jax.experimental import pallas as pl
from jax.experimental.pallas import tpu as pltpu

# ----------------------------- static problem config ---------------------------
BETA = 4.0                       # soft-min temperature (module-level `beta`)
H_RECT = 1.0                     # rectangle height H
L_RECT = 2.0                     # rectangle length L
DISK_RADIUS = 0.1
DISK_CENTERS_C = [(0.5, 0.5), (1.0, 0.5)]        # "c" disks
DISK_CENTERS_W = [(1.5, 0.5)]                    # "w" disks
DISK_CENTERS = DISK_CENTERS_C + DISK_CENTERS_W
# Robin data per boundary piece (a=b=1): outer -> 0.1, c-disks -> 5.0, w-disks -> 1.0
ROBIN_C = [0.1] + [5.0] * len(DISK_CENTERS_C) + [1.0] * len(DISK_CENTERS_W)
NUM_BND = 1 + len(DISK_CENTERS)                  # outer rectangle + all disks (= 4)
EPS2 = 1e-12

MAIN_DIMS = [3] + 4 * [50] + [3]                 # N_main  = FNN([3] + 4*[50] + [3], tanh)
BND_DIMS = [3] + 3 * [20] + [3]                  # per-boundary FNN([3] + 3*[20] + [3], tanh)

NB_WIDTH = (len(BND_DIMS) and BND_DIMS[1]) * NUM_BND    # 80 fused boundary hidden rows
NM_WIDTH = MAIN_DIMS[1]                                 # 50 main hidden rows
FUSED_WIDTH = NB_WIDTH + NM_WIDTH                       # 130 fused trunk rows


# ----------------------------- deterministic parameters ------------------------
def _glorot_normal(key, fan_in, fan_out):
    std = (2.0 / (fan_in + fan_out)) ** 0.5
    return std * jax.random.normal(key, (fan_in, fan_out), dtype=jnp.float32)


def init_params(key):
    keys = jax.random.split(key, 64)
    ki = iter(range(64))
    main_w, main_b = [], []
    for i in range(len(MAIN_DIMS) - 1):
        main_w.append(_glorot_normal(keys[next(ki)], MAIN_DIMS[i], MAIN_DIMS[i + 1]))
        main_b.append(jnp.zeros((1, MAIN_DIMS[i + 1]), jnp.float32))
    bnd_w, bnd_b = [], []
    for li in range(len(BND_DIMS) - 1):
        ws = [_glorot_normal(keys[next(ki)], BND_DIMS[li], BND_DIMS[li + 1])
              for _ in range(NUM_BND)]
        bnd_w.append(jnp.stack(ws, axis=0))                               # (K, din, dout)
        bnd_b.append(jnp.zeros((NUM_BND, 1, BND_DIMS[li + 1]), jnp.float32))  # (K, 1, dout)
    return main_w, main_b, bnd_w, bnd_b


def pack_params(main_w, main_b, bnd_w, bnd_b):
    """Pack main + 4 boundary FNNs into a few feature-major slabs (plain JAX glue)."""
    K = NUM_BND
    f32, bf16 = jnp.float32, jnp.bfloat16

    # feature-major: out = W @ h  with  W : (dout, din)
    wm = [w.T for w in main_w]
    bm = [b.reshape(-1, 1) for b in main_b]
    wb = [[bnd_w[l][k].T for k in range(K)] for l in range(4)]
    bb = [[bnd_b[l][k].reshape(-1, 1) for k in range(K)] for l in range(4)]

    def blockdiag(blocks):
        dout = sum(b.shape[0] for b in blocks)
        din = sum(b.shape[1] for b in blocks)
        out = jnp.zeros((dout, din), f32)
        r = c = 0
        for b in blocks:
            out = out.at[r:r + b.shape[0], c:c + b.shape[1]].set(b)
            r += b.shape[0]
            c += b.shape[1]
        return out

    # fused trunk 3 -> 130 -> 130 -> 130, rows ordered [boundary(80); main(50)]
    w_first = jnp.concatenate(
        [jnp.concatenate([wb[0][k] for k in range(K)], axis=0), wm[0]], axis=0)   # (130, 3) f32
    b_hid = jnp.stack(
        [jnp.concatenate([jnp.concatenate([bb[l][k] for k in range(K)], axis=0), bm[l]], axis=0)
         for l in (0, 1, 2)], axis=0)                                              # (3, 130, 1) f32
    w_hid = jnp.stack(
        [blockdiag([blockdiag([wb[l][k] for k in range(K)]), wm[l]])
         for l in (1, 2)], axis=0).astype(bf16)                                    # (2, 130, 130) bf16

    # main tail: 4th hidden layer + linear head
    wm4, bm4 = wm[3].astype(bf16), bm[3]          # (50, 50) bf16, (50, 1) f32
    wml, bml = wm[4].astype(bf16), bm[4]          # (3, 50)  bf16, (3, 1)  f32

    # fused boundary head: 8 rows [p1_0..p1_3, p2_0..p2_3]; per-boundary output 0 (unused) dropped
    wbl = jnp.zeros((2 * K, NB_WIDTH), f32)
    bbl = jnp.zeros((2 * K, 1), f32)
    hw = BND_DIMS[1]                              # 20
    for k in range(K):
        wbl = wbl.at[k, hw * k:hw * (k + 1)].set(wb[3][k][1, :])        # p1 row
        wbl = wbl.at[K + k, hw * k:hw * (k + 1)].set(wb[3][k][2, :])    # p2 row
        bbl = bbl.at[k, 0].set(bb[3][k][1, 0])
        bbl = bbl.at[K + k, 0].set(bb[3][k][2, 0])
    wbl = wbl.astype(bf16)

    return (w_first, w_hid, b_hid, wm4, bm4, wml, bml, wbl, bbl)


# ----------------------------- the Pallas kernel --------------------------------
def _hcnn_kernel(xT_ref,
                 w_first_ref, w_hid_ref, b_hid_ref,
                 wm4_ref, bm4_ref, wml_ref, bml_ref, wbl_ref, bbl_ref,
                 out_ref):
    f32, bf16 = jnp.float32, jnp.bfloat16

    def _col(vals):  # small (n,1) column constant built from splats (safe lowering)
        return jnp.concatenate([jnp.full((1, 1), float(v), f32) for v in vals], axis=0)

    xT = xT_ref[...]                               # (3, TB) : rows = [x, y, t]
    x1 = xT[0:1, :]
    x2 = xT[1:2, :]
    t = xT[2:3, :]

    # ---- fused trunk: block-diag [boundary(80); main(50)] : 3 -> 130 -> 130 -> 130 ----
    b_hid = b_hid_ref[...]
    # first layer kept in f32 (coordinate precision), hidden layers bf16 MXU / f32 acc
    h = jnp.tanh(jnp.dot(w_first_ref[...], xT, preferred_element_type=f32) + b_hid[0])
    w_hid = w_hid_ref[...]
    for li in range(2):
        h = jnp.tanh(jnp.dot(w_hid[li], h.astype(bf16),
                             preferred_element_type=f32) + b_hid[li + 1])          # (130, TB)

    h_bf = h.astype(bf16)
    g_bnd = h_bf[0:NB_WIDTH, :]                    # (80, TB)   (split at 80: 8/16-aligned)
    h_main = h_bf[NB_WIDTH:FUSED_WIDTH, :]         # (50, TB)

    # boundary heads -> rows [p1_0..p1_3, p2_0..p2_3]
    gout = jnp.dot(wbl_ref[...], g_bnd, preferred_element_type=f32) + bbl_ref[...]  # (8, TB)

    # main tail: extra hidden layer + linear head
    h4 = jnp.tanh(jnp.dot(wm4_ref[...], h_main, preferred_element_type=f32) + bm4_ref[...])
    n_main = jnp.dot(wml_ref[...], h4.astype(bf16),
                     preferred_element_type=f32) + bml_ref[...]                      # (3, TB)

    # ---- geometry: l_k and outward normals, stacked sublane-dense -----------------
    # outer rectangle [0,L]x[0,H]: soft-min (M) over the 4 edge distances
    xy = xT[0:2, :]                                                       # (2, TB): [x, y]
    edges = jnp.concatenate([xy, _col([L_RECT, H_RECT]) - xy], axis=0)    # (4, TB): [x, y, L-x, H-y]
    nbr = -BETA * edges
    nmax_r = jnp.max(nbr, axis=0, keepdims=True)
    esr = jnp.exp(nbr - nmax_r)
    ssum_r = jnp.sum(esr, axis=0, keepdims=True)
    inv_ssum_r = pl.reciprocal(ssum_r, approx=True)
    l_rect = (nmax_r + jnp.log(ssum_r)) * (-1.0 / BETA)                   # (1, TB)
    # TODO(synk): NormalFunctionRectangle source unavailable; reconstructed as
    #             softmax-blended outward edge normals.
    dn = (esr[2:4, :] - esr[0:2, :]) * inv_ssum_r                         # (2, TB): [n1, n2]
    inv_nn = jax.lax.rsqrt(jnp.sum(dn * dn, axis=0, keepdims=True) + EPS2)
    n_rect = dn * inv_nn                                                  # (2, TB)

    # the 3 disks, vectorized over centers
    dx = x1 - _col([c[0] for c in DISK_CENTERS])                          # (3, TB)
    dy = x2 - _col([c[1] for c in DISK_CENTERS])
    r2 = dx * dx + dy * dy
    inv_dist = jax.lax.rsqrt(r2 + EPS2)
    dist = r2 * inv_dist
    # TODO(synk): LFunctionDisk's normalization via sampled boundary points X not
    #             reproduced (class source unavailable); using |dist - r|.
    l_disk = jnp.abs(dist - DISK_RADIUS)
    n1_disk = dx * inv_dist
    n2_disk = dy * inv_dist

    l_all = jnp.concatenate([l_rect, l_disk], axis=0)                     # (4, TB)
    n1_all = jnp.concatenate([n_rect[0:1, :], n1_disk], axis=0)           # (4, TB)
    n2_all = jnp.concatenate([n_rect[1:2, :], n2_disk], axis=0)           # (4, TB)

    # ---- M(l) = logsumexp(-beta*l)/(-beta) and partition-of-unity weights ---------
    neg = -BETA * l_all
    nmax = jnp.max(neg, axis=0, keepdims=True)
    es = jnp.exp(neg - nmax)
    ssum = jnp.sum(es, axis=0, keepdims=True)
    m = (nmax + jnp.log(ssum)) * (-1.0 / BETA)                            # (1, TB)
    w = es * pl.reciprocal(ssum, approx=False)                            # exact: sum_k w_k == 1

    # ---- Robin-constrained boundary values, stacked (4, TB) -----------------------
    p1 = gout[0:NUM_BND, :]
    p2 = gout[NUM_BND:2 * NUM_BND, :]
    # TODO(synk): HardConstraintRobin2D.get_u/get_p_* reconstructed:
    #             Robin BC  a*u + b*(p.n) = c  with a=b=1  =>  u = c - (p1*n1 + p2*n2)
    u = _col(ROBIN_C) - (p1 * n1_all + p2 * n2_all)                       # (4, TB)

    # TODO(synk): HardConstraintCollector source unavailable; reconstructed as
    #             u_hat_idx = sum_k w_k * branch_k_idx + M(l) * N_main[idx]
    u_sum = jnp.sum(w * u, axis=0, keepdims=True)
    p1_sum = jnp.sum(w * p1, axis=0, keepdims=True)
    p2_sum = jnp.sum(w * p2, axis=0, keepdims=True)

    # forward(): blend T with exp(-10*t); direct row stores (no concat relayout)
    out_t = m * n_main[0:1, :] + u_sum
    time_factor = jnp.exp(-10.0 * t)
    out_ref[0:1, :] = out_t * (1.0 - time_factor) + 0.1 * time_factor
    out_ref[1:2, :] = m * n_main[1:2, :] + p1_sum
    out_ref[2:3, :] = m * n_main[2:3, :] + p2_sum


# ----------------------------- wrapper -------------------------------------------
def _round_up(v, m):
    return ((v + m - 1) // m) * m


def hcnn_forward(x, packed, *, block_n=None):
    n = x.shape[0]
    if block_n is None:
        # multiple of 256 (MXU lane blocks); big enough to amortize ~0.35 us/step
        # overhead, >= 2 grid steps so v7x's two TensorCores both get work, capped
        # at 4096 so activations stay far under v5e's 16 MiB scoped-VMEM default.
        block_n = min(4096, max(256, _round_up(pl.cdiv(n, 2), 256)))
    n_pad = _round_up(n, block_n)
    xT = x.T                                              # feature-major (3, N)
    if n_pad != n:
        xT = jnp.pad(xT, ((0, 0), (0, n_pad - n)))

    def full_spec(a):
        nd = a.ndim
        return pl.BlockSpec(a.shape, lambda i, _nd=nd: (0,) * _nd)

    weight_specs = [full_spec(a) for a in packed]

    outT = pl.pallas_call(
        _hcnn_kernel,
        out_shape=jax.ShapeDtypeStruct((3, n_pad), jnp.float32),
        grid_spec=pltpu.PrefetchScalarGridSpec(
            num_scalar_prefetch=0,
            grid=(n_pad // block_n,),
            in_specs=[pl.BlockSpec((3, block_n), lambda i: (0, i))] + weight_specs,
            out_specs=pl.BlockSpec((3, block_n), lambda i: (0, i)),
        ),
        compiler_params=pltpu.CompilerParams(dimension_semantics=("parallel",)),
    )(xT, *packed)
    return outT[:, :n].T                                  # back to (N, 3)


# ----------------------------- demo ----------------------------------------------
if __name__ == "__main__":
    key = jax.random.PRNGKey(0)
    kp, kx = jax.random.split(key)
    main_w, main_b, bnd_w, bnd_b = init_params(kp)
    packed = pack_params(main_w, main_b, bnd_w, bnd_b)

    n = 1024                      # auto block_n -> 512: 2 grid steps (both v7x TCs busy)
    u = jax.random.uniform(kx, (n, 3), dtype=jnp.float32)
    # collocation points: (x, y) in the rectangle [0,L]x[0,H], t in [0,1]
    x = jnp.stack([u[:, 0] * L_RECT, u[:, 1] * H_RECT, u[:, 2]], axis=1)

    out = hcnn_forward(x, packed)
    jax.block_until_ready(out)

    assert out.shape == (n, 3) and out.dtype == jnp.float32
    assert bool(jnp.all(jnp.isfinite(out)))
    print("KERNEL_OK")
</pallas_src>

<mosaic_0001>
module attributes {stable_mosaic.version = 11 : i64} {
  func.func @_hcnn_kernel(%arg0: i32, %arg1: memref<3x512xf32, #tpu.memory_space<vmem>>, %arg2: memref<130x3xf32, #tpu.memory_space<vmem>>, %arg3: memref<2x130x130xbf16, #tpu.memory_space<vmem>>, %arg4: memref<3x130x1xf32, #tpu.memory_space<vmem>>, %arg5: memref<50x50xbf16, #tpu.memory_space<vmem>>, %arg6: memref<50x1xf32, #tpu.memory_space<vmem>>, %arg7: memref<3x50xbf16, #tpu.memory_space<vmem>>, %arg8: memref<3x1xf32, #tpu.memory_space<vmem>>, %arg9: memref<8x80xbf16, #tpu.memory_space<vmem>>, %arg10: memref<8x1xf32, #tpu.memory_space<vmem>>, %arg11: memref<3x512xf32, #tpu.memory_space<vmem>>) attributes {dimension_semantics = [#tpu.dimension_semantics<parallel>], iteration_bounds = array<i64: 2>, scalar_prefetch = 0 : i64, scratch_operands = 0 : i64, tpu.core_type = #tpu.core_type<tc>, window_params = [{transform_indices = @transform_0, window_bounds = array<i64: 3, 512>}, {pipeline_mode = #tpu.pipeline_mode<synchronous>, transform_indices = @transform_1, window_bounds = array<i64: 130, 3>}, {pipeline_mode = #tpu.pipeline_mode<synchronous>, transform_indices = @transform_2, window_bounds = array<i64: 2, 130, 130>}, {pipeline_mode = #tpu.pipeline_mode<synchronous>, transform_indices = @transform_3, window_bounds = array<i64: 3, 130, 1>}, {pipeline_mode = #tpu.pipeline_mode<synchronous>, transform_indices = @transform_4, window_bounds = array<i64: 50, 50>}, {pipeline_mode = #tpu.pipeline_mode<synchronous>, transform_indices = @transform_5, window_bounds = array<i64: 50, 1>}, {pipeline_mode = #tpu.pipeline_mode<synchronous>, transform_indices = @transform_6, window_bounds = array<i64: 3, 50>}, {pipeline_mode = #tpu.pipeline_mode<synchronous>, transform_indices = @transform_7, window_bounds = array<i64: 3, 1>}, {pipeline_mode = #tpu.pipeline_mode<synchronous>, transform_indices = @transform_8, window_bounds = array<i64: 8, 80>}, {pipeline_mode = #tpu.pipeline_mode<synchronous>, transform_indices = @transform_9, window_bounds = array<i64: 8, 1>}, {transform_indices = @transform_10, window_bounds = array<i64: 3, 512>}]} {
    %c0 = arith.constant 0 : index
    %c0_0 = arith.constant 0 : index
    %0 = vector.load %arg1[%c0, %c0_0] : memref<3x512xf32, #tpu.memory_space<vmem>>, vector<3x512xf32>
    %1 = vector.extract_strided_slice %0 {offsets = [0, 0], sizes = [1, 512], strides = [1, 1]} : vector<3x512xf32> to vector<1x512xf32>
    %2 = vector.extract_strided_slice %0 {offsets = [1, 0], sizes = [1, 512], strides = [1, 1]} : vector<3x512xf32> to vector<1x512xf32>
    %3 = vector.extract_strided_slice %0 {offsets = [2, 0], sizes = [1, 512], strides = [1, 1]} : vector<3x512xf32> to vector<1x512xf32>
    %c0_1 = arith.constant 0 : index
    %c0_2 = arith.constant 0 : index
    %c0_3 = arith.constant 0 : index
    %4 = vector.load %arg4[%c0_1, %c0_2, %c0_3] : memref<3x130x1xf32, #tpu.memory_space<vmem>>, vector<3x130x1xf32>
    %c0_4 = arith.constant 0 : index
    %c0_5 = arith.constant 0 : index
    %5 = vector.load %arg2[%c0_4, %c0_5] : memref<130x3xf32, #tpu.memory_space<vmem>>, vector<130x3xf32>
    %cst = arith.constant dense<0.000000e+00> : vector<130x512xf32>
    %6 = tpu.matmul %5, %0, %cst {dimension_numbers = #tpu.dot_dimension_numbers<[1], [0], [0], [1], [0, 0, 1, 1], [], []>} : vector<130x3xf32>, vector<3x512xf32>, vector<130x512xf32> -> vector<130x512xf32>
    %7 = vector.extract_strided_slice %4 {offsets = [0, 0, 0], sizes = [1, 130, 1], strides = [1, 1, 1]} : vector<3x130x1xf32> to vector<1x130x1xf32>
    %8 = vector.shape_cast %7 : vector<1x130x1xf32> to vector<130x1xf32>
    %9 = vector.broadcast %8 : vector<130x1xf32> to vector<130x512xf32>
    %10 = arith.addf %6, %9 : vector<130x512xf32>
    %11 = math.tanh %10 : vector<130x512xf32>
    %c0_6 = arith.constant 0 : index
    %c0_7 = arith.constant 0 : index
    %c0_8 = arith.constant 0 : index
    %12 = vector.load %arg3[%c0_6, %c0_7, %c0_8] : memref<2x130x130xbf16, #tpu.memory_space<vmem>>, vector<2x130x130xbf16>
    %13 = vector.extract_strided_slice %12 {offsets = [0, 0, 0], sizes = [1, 130, 130], strides = [1, 1, 1]} : vector<2x130x130xbf16> to vector<1x130x130xbf16>
    %14 = vector.shape_cast %13 : vector<1x130x130xbf16> to vector<130x130xbf16>
    %15 = arith.truncf %11 : vector<130x512xf32> to vector<130x512xbf16>
    %cst_9 = arith.constant dense<0.000000e+00> : vector<130x512xf32>
    %16 = tpu.matmul %14, %15, %cst_9 {dimension_numbers = #tpu.dot_dimension_numbers<[1], [0], [0], [1], [0, 0, 1, 1], [], []>} : vector<130x130xbf16>, vector<130x512xbf16>, vector<130x512xf32> -> vector<130x512xf32>
    %17 = vector.extract_strided_slice %4 {offsets = [1, 0, 0], sizes = [1, 130, 1], strides = [1, 1, 1]} : vector<3x130x1xf32> to vector<1x130x1xf32>
    %18 = vector.shape_cast %17 : vector<1x130x1xf32> to vector<130x1xf32>
    %19 = vector.broadcast %18 : vector<130x1xf32> to vector<130x512xf32>
    %20 = arith.addf %16, %19 : vector<130x512xf32>
    %21 = math.tanh %20 : vector<130x512xf32>
    %22 = vector.extract_strided_slice %12 {offsets = [1, 0, 0], sizes = [1, 130, 130], strides = [1, 1, 1]} : vector<2x130x130xbf16> to vector<1x130x130xbf16>
    %23 = vector.shape_cast %22 : vector<1x130x130xbf16> to vector<130x130xbf16>
    %24 = arith.truncf %21 : vector<130x512xf32> to vector<130x512xbf16>
    %cst_10 = arith.constant dense<0.000000e+00> : vector<130x512xf32>
    %25 = tpu.matmul %23, %24, %cst_10 {dimension_numbers = #tpu.dot_dimension_numbers<[1], [0], [0], [1], [0, 0, 1, 1], [], []>} : vector<130x130xbf16>, vector<130x512xbf16>, vector<130x512xf32> -> vector<130x512xf32>
    %26 = vector.extract_strided_slice %4 {offsets = [2, 0, 0], sizes = [1, 130, 1], strides = [1, 1, 1]} : vector<3x130x1xf32> to vector<1x130x1xf32>
    %27 = vector.shape_cast %26 : vector<1x130x1xf32> to vector<130x1xf32>
    %28 = vector.broadcast %27 : vector<130x1xf32> to vector<130x512xf32>
    %29 = arith.addf %25, %28 : vector<130x512xf32>
    %30 = math.tanh %29 : vector<130x512xf32>
    %31 = arith.truncf %30 : vector<130x512xf32> to vector<130x512xbf16>
    %32 = vector.extract_strided_slice %31 {offsets = [0, 0], sizes = [80, 512], strides = [1, 1]} : vector<130x512xbf16> to vector<80x512xbf16>
    %33 = vector.extract_strided_slice %31 {offsets = [80, 0], sizes = [50, 512], strides = [1, 1]} : vector<130x512xbf16> to vector<50x512xbf16>
    %c0_11 = arith.constant 0 : index
    %c0_12 = arith.constant 0 : index
    %34 = vector.load %arg9[%c0_11, %c0_12] : memref<8x80xbf16, #tpu.memory_space<vmem>>, vector<8x80xbf16>
    %cst_13 = arith.constant dense<0.000000e+00> : vector<8x512xf32>
    %35 = tpu.matmul %34, %32, %cst_13 {dimension_numbers = #tpu.dot_dimension_numbers<[1], [0], [0], [1], [0, 0, 1, 1], [], []>} : vector<8x80xbf16>, vector<80x512xbf16>, vector<8x512xf32> -> vector<8x512xf32>
    %c0_14 = arith.constant 0 : index
    %c0_15 = arith.constant 0 : index
    %36 = vector.load %arg10[%c0_14, %c0_15] : memref<8x1xf32, #tpu.memory_space<vmem>>, vector<8x1xf32>
    %37 = vector.broadcast %36 : vector<8x1xf32> to vector<8x512xf32>
    %38 = arith.addf %35, %37 : vector<8x512xf32>
    %c0_16 = arith.constant 0 : index
    %c0_17 = arith.constant 0 : index
    %39 = vector.load %arg5[%c0_16, %c0_17] : memref<50x50xbf16, #tpu.memory_space<vmem>>, vector<50x50xbf16>
    %cst_18 = arith.constant dense<0.000000e+00> : vector<50x512xf32>
    %40 = tpu.matmul %39, %33, %cst_18 {dimension_numbers = #tpu.dot_dimension_numbers<[1], [0], [0], [1], [0, 0, 1, 1], [], []>} : vector<50x50xbf16>, vector<50x512xbf16>, vector<50x512xf32> -> vector<50x512xf32>
    %c0_19 = arith.constant 0 : index
    %c0_20 = arith.constant 0 : index
    %41 = vector.load %arg6[%c0_19, %c0_20] : memref<50x1xf32, #tpu.memory_space<vmem>>, vector<50x1xf32>
    %42 = vector.broadcast %41 : vector<50x1xf32> to vector<50x512xf32>
    %43 = arith.addf %40, %42 : vector<50x512xf32>
    %44 = math.tanh %43 : vector<50x512xf32>
    %c0_21 = arith.constant 0 : index
    %c0_22 = arith.constant 0 : index
    %45 = vector.load %arg7[%c0_21, %c0_22] : memref<3x50xbf16, #tpu.memory_space<vmem>>, vector<3x50xbf16>
    %46 = arith.truncf %44 : vector<50x512xf32> to vector<50x512xbf16>
    %cst_23 = arith.constant dense<0.000000e+00> : vector<3x512xf32>
    %47 = tpu.matmul %45, %46, %cst_23 {dimension_numbers = #tpu.dot_dimension_numbers<[1], [0], [0], [1], [0, 0, 1, 1], [], []>} : vector<3x50xbf16>, vector<50x512xbf16>, vector<3x512xf32> -> vector<3x512xf32>
    %c0_24 = arith.constant 0 : index
    %c0_25 = arith.constant 0 : index
    %48 = vector.load %arg8[%c0_24, %c0_25] : memref<3x1xf32, #tpu.memory_space<vmem>>, vector<3x1xf32>
    %49 = vector.broadcast %48 : vector<3x1xf32> to vector<3x512xf32>
    %50 = arith.addf %47, %49 : vector<3x512xf32>
    %51 = vector.extract_strided_slice %0 {offsets = [0, 0], sizes = [2, 512], strides = [1, 1]} : vector<3x512xf32> to vector<2x512xf32>
    %cst_26 = arith.constant 2.000000e+00 : f32
    %52 = vector.broadcast %cst_26 : f32 to vector<1x1xf32>
    %cst_27 = arith.constant 1.000000e+00 : f32
    %53 = vector.broadcast %cst_27 : f32 to vector<1x1xf32>
    %54 = tpu.concatenate %52, %53 in 0 : vector<1x1xf32>, vector<1x1xf32> -> vector<2x1xf32>
    %55 = vector.broadcast %54 : vector<2x1xf32> to vector<2x512xf32>
    %56 = arith.subf %55, %51 : vector<2x512xf32>
    %57 = tpu.concatenate %51, %56 in 0 : vector<2x512xf32>, vector<2x512xf32> -> vector<4x512xf32>
    %cst_28 = arith.constant -4.000000e+00 : f32
    %58 = vector.broadcast %cst_28 : f32 to vector<4x512xf32>
    %59 = arith.mulf %58, %57 : vector<4x512xf32>
    %cst_29 = arith.constant dense<0xFF800000> : vector<512xf32>
    %60 = vector.multi_reduction <maximumf>, %59, %cst_29 [0] : vector<4x512xf32> to vector<512xf32>
    %61 = vector.shape_cast %60 : vector<512xf32> to vector<1x512xf32>
    %62 = vector.broadcast %61 : vector<1x512xf32> to vector<4x512xf32>
    %63 = arith.subf %59, %62 : vector<4x512xf32>
    %64 = math.exp %63 : vector<4x512xf32>
    %cst_30 = arith.constant dense<0.000000e+00> : vector<512xf32>
    %65 = vector.multi_reduction <add>, %64, %cst_30 [0] : vector<4x512xf32> to vector<512xf32>
    %66 = vector.shape_cast %65 : vector<512xf32> to vector<1x512xf32>
    %67 = tpu.reciprocal %66 {approx = true} : vector<1x512xf32> -> vector<1x512xf32>
    %68 = math.log %66 : vector<1x512xf32>
    %69 = arith.addf %61, %68 : vector<1x512xf32>
    %cst_31 = arith.constant -2.500000e-01 : f32
    %70 = vector.broadcast %cst_31 : f32 to vector<1x512xf32>
    %71 = arith.mulf %69, %70 : vector<1x512xf32>
    %72 = vector.extract_strided_slice %64 {offsets = [2, 0], sizes = [2, 512], strides = [1, 1]} : vector<4x512xf32> to vector<2x512xf32>
    %73 = vector.extract_strided_slice %64 {offsets = [0, 0], sizes = [2, 512], strides = [1, 1]} : vector<4x512xf32> to vector<2x512xf32>
    %74 = arith.subf %72, %73 : vector<2x512xf32>
    %75 = vector.broadcast %67 : vector<1x512xf32> to vector<2x512xf32>
    %76 = arith.mulf %74, %75 : vector<2x512xf32>
    %77 = arith.mulf %76, %76 : vector<2x512xf32>
    %cst_32 = arith.constant dense<0.000000e+00> : vector<512xf32>
    %78 = vector.multi_reduction <add>, %77, %cst_32 [0] : vector<2x512xf32> to vector<512xf32>
    %79 = vector.shape_cast %78 : vector<512xf32> to vector<1x512xf32>
    %cst_33 = arith.constant 9.99999996E-13 : f32
    %80 = vector.broadcast %cst_33 : f32 to vector<1x512xf32>
    %81 = arith.addf %79, %80 : vector<1x512xf32>
    %82 = math.rsqrt %81 : vector<1x512xf32>
    %83 = vector.broadcast %82 : vector<1x512xf32> to vector<2x512xf32>
    %84 = arith.mulf %76, %83 : vector<2x512xf32>
    %cst_34 = arith.constant 5.000000e-01 : f32
    %85 = vector.broadcast %cst_34 : f32 to vector<1x1xf32>
    %cst_35 = arith.constant 1.000000e+00 : f32
    %86 = vector.broadcast %cst_35 : f32 to vector<1x1xf32>
    %cst_36 = arith.constant 1.500000e+00 : f32
    %87 = vector.broadcast %cst_36 : f32 to vector<1x1xf32>
    %88 = tpu.concatenate %85, %86, %87 in 0 : vector<1x1xf32>, vector<1x1xf32>, vector<1x1xf32> -> vector<3x1xf32>
    %89 = vector.broadcast %1 : vector<1x512xf32> to vector<3x512xf32>
    %90 = vector.broadcast %88 : vector<3x1xf32> to vector<3x512xf32>
    %91 = arith.subf %89, %90 : vector<3x512xf32>
    %cst_37 = arith.constant 5.000000e-01 : f32
    %92 = vector.broadcast %cst_37 : f32 to vector<1x1xf32>
    %cst_38 = arith.constant 5.000000e-01 : f32
    %93 = vector.broadcast %cst_38 : f32 to vector<1x1xf32>
    %cst_39 = arith.constant 5.000000e-01 : f32
    %94 = vector.broadcast %cst_39 : f32 to vector<1x1xf32>
    %95 = tpu.concatenate %92, %93, %94 in 0 : vector<1x1xf32>, vector<1x1xf32>, vector<1x1xf32> -> vector<3x1xf32>
    %96 = vector.broadcast %2 : vector<1x512xf32> to vector<3x512xf32>
    %97 = vector.broadcast %95 : vector<3x1xf32> to vector<3x512xf32>
    %98 = arith.subf %96, %97 : vector<3x512xf32>
    %99 = arith.mulf %91, %91 : vector<3x512xf32>
    %100 = arith.mulf %98, %98 : vector<3x512xf32>
    %101 = arith.addf %99, %100 : vector<3x512xf32>
    %cst_40 = arith.constant 9.99999996E-13 : f32
    %102 = vector.broadcast %cst_40 : f32 to vector<3x512xf32>
    %103 = arith.addf %101, %102 : vector<3x512xf32>
    %104 = math.rsqrt %103 : vector<3x512xf32>
    %105 = arith.mulf %101, %104 : vector<3x512xf32>
    %cst_41 = arith.constant 1.000000e-01 : f32
    %106 = vector.broadcast %cst_41 : f32 to vector<3x512xf32>
    %107 = arith.subf %105, %106 : vector<3x512xf32>
    %108 = math.absf %107 : vector<3x512xf32>
    %109 = arith.mulf %91, %104 : vector<3x512xf32>
    %110 = arith.mulf %98, %104 : vector<3x512xf32>
    %111 = tpu.concatenate %71, %108 in 0 : vector<1x512xf32>, vector<3x512xf32> -> vector<4x512xf32>
    %112 = vector.extract_strided_slice %84 {offsets = [0, 0], sizes = [1, 512], strides = [1, 1]} : vector<2x512xf32> to vector<1x512xf32>
    %113 = tpu.concatenate %112, %109 in 0 : vector<1x512xf32>, vector<3x512xf32> -> vector<4x512xf32>
    %114 = vector.extract_strided_slice %84 {offsets = [1, 0], sizes = [1, 512], strides = [1, 1]} : vector<2x512xf32> to vector<1x512xf32>
    %115 = tpu.concatenate %114, %110 in 0 : vector<1x512xf32>, vector<3x512xf32> -> vector<4x512xf32>
    %cst_42 = arith.constant -4.000000e+00 : f32
    %116 = vector.broadcast %cst_42 : f32 to vector<4x512xf32>
    %117 = arith.mulf %116, %111 : vector<4x512xf32>
    %cst_43 = arith.constant dense<0xFF800000> : vector<512xf32>
    %118 = vector.multi_reduction <maximumf>, %117, %cst_43 [0] : vector<4x512xf32> to vector<512xf32>
    %119 = vector.shape_cast %118 : vector<512xf32> to vector<1x512xf32>
    %120 = vector.broadcast %119 : vector<1x512xf32> to vector<4x512xf32>
    %121 = arith.subf %117, %120 : vector<4x512xf32>
    %122 = math.exp %121 : vector<4x512xf32>
    %cst_44 = arith.constant dense<0.000000e+00> : vector<512xf32>
    %123 = vector.multi_reduction <add>, %122, %cst_44 [0] : vector<4x512xf32> to vector<512xf32>
    %124 = vector.shape_cast %123 : vector<512xf32> to vector<1x512xf32>
    %125 = math.log %124 : vector<1x512xf32>
    %126 = arith.addf %119, %125 : vector<1x512xf32>
    %cst_45 = arith.constant -2.500000e-01 : f32
    %127 = vector.broadcast %cst_45 : f32 to vector<1x512xf32>
    %128 = arith.mulf %126, %127 : vector<1x512xf32>
    %129 = tpu.reciprocal %124 : vector<1x512xf32> -> vector<1x512xf32>
    %130 = vector.broadcast %129 : vector<1x512xf32> to vector<4x512xf32>
    %131 = arith.mulf %122, %130 : vector<4x512xf32>
    %132 = vector.extract_strided_slice %38 {offsets = [0, 0], sizes = [4, 512], strides = [1, 1]} : vector<8x512xf32> to vector<4x512xf32>
    %133 = vector.extract_strided_slice %38 {offsets = [4, 0], sizes = [4, 512], strides = [1, 1]} : vector<8x512xf32> to vector<4x512xf32>
    %cst_46 = arith.constant 1.000000e-01 : f32
    %134 = vector.broadcast %cst_46 : f32 to vector<1x1xf32>
    %cst_47 = arith.constant 5.000000e+00 : f32
    %135 = vector.broadcast %cst_47 : f32 to vector<1x1xf32>
    %cst_48 = arith.constant 5.000000e+00 : f32
    %136 = vector.broadcast %cst_48 : f32 to vector<1x1xf32>
    %cst_49 = arith.constant 1.000000e+00 : f32
    %137 = vector.broadcast %cst_49 : f32 to vector<1x1xf32>
    %138 = tpu.concatenate %134, %135, %136, %137 in 0 : vector<1x1xf32>, vector<1x1xf32>, vector<1x1xf32>, vector<1x1xf32> -> vector<4x1xf32>
    %139 = arith.mulf %132, %113 : vector<4x512xf32>
    %140 = arith.mulf %133, %115 : vector<4x512xf32>
    %141 = arith.addf %139, %140 : vector<4x512xf32>
    %142 = vector.broadcast %138 : vector<4x1xf32> to vector<4x512xf32>
    %143 = arith.subf %142, %141 : vector<4x512xf32>
    %144 = arith.mulf %131, %143 : vector<4x512xf32>
    %cst_50 = arith.constant dense<0.000000e+00> : vector<512xf32>
    %145 = vector.multi_reduction <add>, %144, %cst_50 [0] : vector<4x512xf32> to vector<512xf32>
    %146 = vector.shape_cast %145 : vector<512xf32> to vector<1x512xf32>
    %147 = arith.mulf %131, %132 : vector<4x512xf32>
    %cst_51 = arith.constant dense<0.000000e+00> : vector<512xf32>
    %148 = vector.multi_reduction <add>, %147, %cst_51 [0] : vector<4x512xf32> to vector<512xf32>
    %149 = vector.shape_cast %148 : vector<512xf32> to vector<1x512xf32>
    %150 = arith.mulf %131, %133 : vector<4x512xf32>
    %cst_52 = arith.constant dense<0.000000e+00> : vector<512xf32>
    %151 = vector.multi_reduction <add>, %150, %cst_52 [0] : vector<4x512xf32> to vector<512xf32>
    %152 = vector.shape_cast %151 : vector<512xf32> to vector<1x512xf32>
    %153 = vector.extract_strided_slice %50 {offsets = [0, 0], sizes = [1, 512], strides = [1, 1]} : vector<3x512xf32> to vector<1x512xf32>
    %154 = arith.mulf %128, %153 : vector<1x512xf32>
    %155 = arith.addf %154, %146 : vector<1x512xf32>
    %cst_53 = arith.constant -1.000000e+01 : f32
    %156 = vector.broadcast %cst_53 : f32 to vector<1x512xf32>
    %157 = arith.mulf %156, %3 : vector<1x512xf32>
    %158 = math.exp %157 : vector<1x512xf32>
    %cst_54 = arith.constant 1.000000e+00 : f32
    %159 = vector.broadcast %cst_54 : f32 to vector<1x512xf32>
    %160 = arith.subf %159, %158 : vector<1x512xf32>
    %161 = arith.mulf %155, %160 : vector<1x512xf32>
    %cst_55 = arith.constant 1.000000e-01 : f32
    %162 = vector.broadcast %cst_55 : f32 to vector<1x512xf32>
    %163 = arith.mulf %162, %158 : vector<1x512xf32>
    %164 = arith.addf %161, %163 : vector<1x512xf32>
    %c0_56 = arith.constant 0 : index
    %c0_57 = arith.constant 0 : index
    %165 = vector.load %arg11[%c0_56, %c0_57] : memref<3x512xf32, #tpu.memory_space<vmem>>, vector<1x512xf32>
    tpu.vector_store %arg11[%c0_56, %c0_57], %164 {strides = array<i32>} : memref<3x512xf32, #tpu.memory_space<vmem>>, vector<1x512xf32>,
    %166 = vector.extract_strided_slice %50 {offsets = [1, 0], sizes = [1, 512], strides = [1, 1]} : vector<3x512xf32> to vector<1x512xf32>
    %167 = arith.mulf %128, %166 : vector<1x512xf32>
    %168 = arith.addf %167, %149 : vector<1x512xf32>
    %c1 = arith.constant 1 : index
    %c0_58 = arith.constant 0 : index
    %169 = vector.load %arg11[%c1, %c0_58] : memref<3x512xf32, #tpu.memory_space<vmem>>, vector<1x512xf32>
    tpu.vector_store %arg11[%c1, %c0_58], %168 {strides = array<i32>} : memref<3x512xf32, #tpu.memory_space<vmem>>, vector<1x512xf32>,
    %170 = vector.extract_strided_slice %50 {offsets = [2, 0], sizes = [1, 512], strides = [1, 1]} : vector<3x512xf32> to vector<1x512xf32>
    %171 = arith.mulf %128, %170 : vector<1x512xf32>
    %172 = arith.addf %171, %152 : vector<1x512xf32>
    %c2 = arith.constant 2 : index
    %c0_59 = arith.constant 0 : index
    %173 = vector.load %arg11[%c2, %c0_59] : memref<3x512xf32, #tpu.memory_space<vmem>>, vector<1x512xf32>
    tpu.vector_store %arg11[%c2, %c0_59], %172 {strides = array<i32>} : memref<3x512xf32, #tpu.memory_space<vmem>>, vector<1x512xf32>,
    return
  }
  func.func @transform_0(%arg0: i32) -> (i32, i32) {
    %c0_i32 = arith.constant 0 : i32
    %c0_i32_0 = arith.constant 0 : i32
    return %c0_i32, %arg0 : i32, i32
  }
  func.func @transform_1(%arg0: i32) -> (i32, i32) {
    %c0_i32 = arith.constant 0 : i32
    %c0_i32_0 = arith.constant 0 : i32
    %c0_i32_1 = arith.constant 0 : i32
    return %c0_i32, %c0_i32_0 : i32, i32
  }
  func.func @transform_2(%arg0: i32) -> (i32, i32, i32) {
    %c0_i32 = arith.constant 0 : i32
    %c0_i32_0 = arith.constant 0 : i32
    %c0_i32_1 = arith.constant 0 : i32
    %c0_i32_2 = arith.constant 0 : i32
    return %c0_i32, %c0_i32_0, %c0_i32_1 : i32, i32, i32
  }
  func.func @transform_3(%arg0: i32) -> (i32, i32, i32) {
    %c0_i32 = arith.constant 0 : i32
    %c0_i32_0 = arith.constant 0 : i32
    %c0_i32_1 = arith.constant 0 : i32
    %c0_i32_2 = arith.constant 0 : i32
    return %c0_i32, %c0_i32_0, %c0_i32_1 : i32, i32, i32
  }
  func.func @transform_4(%arg0: i32) -> (i32, i32) {
    %c0_i32 = arith.constant 0 : i32
    %c0_i32_0 = arith.constant 0 : i32
    %c0_i32_1 = arith.constant 0 : i32
    return %c0_i32, %c0_i32_0 : i32, i32
  }
  func.func @transform_5(%arg0: i32) -> (i32, i32) {
    %c0_i32 = arith.constant 0 : i32
    %c0_i32_0 = arith.constant 0 : i32
    %c0_i32_1 = arith.constant 0 : i32
    return %c0_i32, %c0_i32_0 : i32, i32
  }
  func.func @transform_6(%arg0: i32) -> (i32, i32) {
    %c0_i32 = arith.constant 0 : i32
    %c0_i32_0 = arith.constant 0 : i32
    %c0_i32_1 = arith.constant 0 : i32
    return %c0_i32, %c0_i32_0 : i32, i32
  }
  func.func @transform_7(%arg0: i32) -> (i32, i32) {
    %c0_i32 = arith.constant 0 : i32
    %c0_i32_0 = arith.constant 0 : i32
    %c0_i32_1 = arith.constant 0 : i32
    return %c0_i32, %c0_i32_0 : i32, i32
  }
  func.func @transform_8(%arg0: i32) -> (i32, i32) {
    %c0_i32 = arith.constant 0 : i32
    %c0_i32_0 = arith.constant 0 : i32
    %c0_i32_1 = arith.constant 0 : i32
    return %c0_i32, %c0_i32_0 : i32, i32
  }
  func.func @transform_9(%arg0: i32) -> (i32, i32) {
    %c0_i32 = arith.constant 0 : i32
    %c0_i32_0 = arith.constant 0 : i32
    %c0_i32_1 = arith.constant 0 : i32
    return %c0_i32, %c0_i32_0 : i32, i32
  }
  func.func @transform_10(%arg0: i32) -> (i32, i32) {
    %c0_i32 = arith.constant 0 : i32
    %c0_i32_0 = arith.constant 0 : i32
    return %c0_i32, %arg0 : i32, i32
  }
}

</mosaic_0001>

<llo_original>
// kernel: tpu_custom_call.1
$region0: #{tpu_custom_call.1}
  #allocation0 [shape = 'u32[]', space=smem, size = 0x4, offset = 0x4, fixed_abs, tag = 'smem constant byte address 0x4 - core index']
  #allocation1 [shape = 'u32[144,128]{1,0:T(1,128)}', space=vmem, size = 0x12000, scoped, tag = 'internal scratch']
  %s0 = inlined_call_operand.vmem [shape: f32[3,1024], index: 0, kind: input, shape index: {}]
  %s1 = inlined_call_operand.vmem [shape: f32[130,3], index: 1, kind: input, shape index: {}]
  %s2 = inlined_call_operand.vmem [shape: bf16[2,130,130], index: 2, kind: input, shape index: {}]
  %s3 = inlined_call_operand.vmem [shape: f32[3,130,1], index: 3, kind: input, shape index: {}]
  %s4 = inlined_call_operand.vmem [shape: bf16[50,50], index: 4, kind: input, shape index: {}]
  %s5 = inlined_call_operand.vmem [shape: f32[50,1], index: 5, kind: input, shape index: {}]
  %s6 = inlined_call_operand.vmem [shape: bf16[3,50], index: 6, kind: input, shape index: {}]
  %s7 = inlined_call_operand.vmem [shape: f32[3,1], index: 7, kind: input, shape index: {}]
  %s8 = inlined_call_operand.vmem [shape: bf16[8,80], index: 8, kind: input, shape index: {}]
  %s9 = inlined_call_operand.vmem [shape: f32[8,1], index: 9, kind: input, shape index: {}]
  %s10 = inlined_call_operand.hbm [shape: f32[3,1024], index: 10, kind: output, shape index: {}]
  %s11 = sld [smem:[#allocation0]]
  $region73: #{tpu_custom_call.1} parent=0
    _
  %s13 = ssub.s32 1, %s11
  %s14 = scalar_select 0, %s13, %s11
  $region1: #{tpu_custom_call.1} parent=0
    #allocation2 [shape = 'u8[16384]{0}', space=vmem, size = 0x4000, scoped, tag = 'output window, operand 0']
    #allocation3 [shape = 's32[2]{0}', space=sflag, size = 0x8, scoped, tag = 'scoped memory for tpu_custom_call.1']
    %15 = vsyncpa [#allocation3], 0
    %s16 = scalar_lea.sflag [#allocation3], 1
    %17 = vsyncpa %s16, 0
    loop: start=0, step=1, limit=4
    $region2: #{tpu_custom_call.1} parent=1 // loop_pre_header
      _
    $region3: #{tpu_custom_call.1} parent=1 // loop_header
      %s19 = sphi 0, %s23
      %p20 = scmp.ge.s32.totalorder %s19, 4
      %s29 = sphi 0, %s31
      %s32 = sphi 0, %s29
      %s33 = sphi 0, %s32
      %s49 = sphi 0, %s33
      %s53 = sphi 0, %s53
      %s55 = sphi 0, %s53
      %s56 = sphi 0, %s55
      %s70 = sphi 0, %s56
      %s74 = sphi 0, %s74
      %s76 = sphi 0, %s74
      %s77 = sphi 0, %s76
      %s91 = sphi 0, %s77
      %s95 = sphi 0, %s95
      %s97 = sphi 0, %s95
      %s98 = sphi 0, %s97
      %s112 = sphi 0, %s98
      %s116 = sphi 0, %s116
      %s118 = sphi 0, %s116
      %s119 = sphi 0, %s118
      %s133 = sphi 0, %s119
      %s137 = sphi 0, %s137
      %s139 = sphi 0, %s137
      %s140 = sphi 0, %s139
      %s154 = sphi 0, %s140
      %s158 = sphi 0, %s158
      %s160 = sphi 0, %s158
      %s161 = sphi 0, %s160
      %s175 = sphi 0, %s161
      %s179 = sphi 0, %s179
      %s181 = sphi 0, %s179
      %s182 = sphi 0, %s181
      %s196 = sphi 0, %s182
      %s200 = sphi 0, %s200
      %s202 = sphi 0, %s200
      %s203 = sphi 0, %s202
      %s217 = sphi 0, %s203
      %s221 = sphi 0, %s221
      %s223 = sphi 0, %s221
      %s224 = sphi 0, %s223
      %s238 = sphi 0, %s224
      %s244 = sphi 0, %s246
      %s247 = sphi 0, %s244
      %s248 = sphi 0, %s247
      %s264 = sphi 0, %s248
    $region4: #{tpu_custom_call.1} parent=1 // loop_header_branch
      %22 = sbr.rel (%p20) target = $region8
    $region5: #{tpu_custom_call.1} parent=1 // loop_body
      %s24 = ssub.s32 %s19, 1
      %s25 = ssub.s32 %s19, 2
      %s26 = sadd.s32 %s19, 1
      %s27 = ssub.s32 %s19, %s26
      %p28 = scmp.eq.s32.totalorder %s27, 0
      %s30 = sadd.s32 %s29, 1
      %s31 = scalar_select %p28, %s29, %s30
      %p34 = pneg %p28
      %p35 = scmp.eq.s32.totalorder %s19, 1
      %p36 = por %p34, %p35
      %p37 = scmp.ne.s32.totalorder %s29, %s32
      %p38 = scmp.eq.s32.totalorder %s19, 0
      %p39 = por %p37, %p38
      %p40 = scmp.ne.s32.totalorder %s29, %s32
      %p41 = scmp.eq.s32.totalorder %s24, 1
      %p42 = por %p40, %p41
      %p43 = scmp.ne.s32.totalorder %s32, %s33
      %p44 = scmp.eq.s32.totalorder %s24, 0
      %p45 = por %p43, %p44
      %p46 = scmp.ne.s32.totalorder %s32, %s33
      %p47 = scmp.eq.s32.totalorder %s25, 1
      %p48 = por %p46, %p47
      %p50 = scmp.ne.s32.totalorder %s33, %s49
      %p51 = scmp.eq.s32.totalorder %s25, 0
      %p52 = por %p50, %p51
      %s54 = sadd.s32 %s53, 1
      %p57 = scmp.eq.s32.totalorder %s19, 1
      %p58 = scmp.ne.s32.totalorder %s53, %s55
      %p59 = scmp.eq.s32.totalorder %s19, 0
      %p60 = por %p58, %p59
      %p61 = scmp.ne.s32.totalorder %s53, %s55
      %p62 = scmp.eq.s32.totalorder %s24, 1
      %p63 = por %p61, %p62
      %p64 = scmp.ne.s32.totalorder %s55, %s56
      %p65 = scmp.eq.s32.totalorder %s24, 0
      %p66 = por %p64, %p65
      %p67 = scmp.ne.s32.totalorder %s55, %s56
      %p68 = scmp.eq.s32.totalorder %s25, 1
      %p69 = por %p67, %p68
      %p71 = scmp.ne.s32.totalorder %s56, %s70
      %p72 = scmp.eq.s32.totalorder %s25, 0
      %p73 = por %p71, %p72
      %s75 = sadd.s32 %s74, 1
      %p78 = scmp.eq.s32.totalorder %s19, 1
      %p79 = scmp.ne.s32.totalorder %s74, %s76
      %p80 = scmp.eq.s32.totalorder %s19, 0
      %p81 = por %p79, %p80
      %p82 = scmp.ne.s32.totalorder %s74, %s76
      %p83 = scmp.eq.s32.totalorder %s24, 1
      %p84 = por %p82, %p83
      %p85 = scmp.ne.s32.totalorder %s76, %s77
      %p86 = scmp.eq.s32.totalorder %s24, 0
      %p87 = por %p85, %p86
      %p88 = scmp.ne.s32.totalorder %s76, %s77
      %p89 = scmp.eq.s32.totalorder %s25, 1
      %p90 = por %p88, %p89
      %p92 = scmp.ne.s32.totalorder %s77, %s91
      %p93 = scmp.eq.s32.totalorder %s25, 0
      %p94 = por %p92, %p93
      %s96 = sadd.s32 %s95, 1
      %p99 = scmp.eq.s32.totalorder %s19, 1
      %p100 = scmp.ne.s32.totalorder %s95, %s97
      %p101 = scmp.eq.s32.totalorder %s19, 0
      %p102 = por %p100, %p101
      %p103 = scmp.ne.s32.totalorder %s95, %s97
      %p104 = scmp.eq.s32.totalorder %s24, 1
      %p105 = por %p103, %p104
      %p106 = scmp.ne.s32.totalorder %s97, %s98
      %p107 = scmp.eq.s32.totalorder %s24, 0
      %p108 = por %p106, %p107
      %p109 = scmp.ne.s32.totalorder %s97, %s98
      %p110 = scmp.eq.s32.totalorder %s25, 1
      %p111 = por %p109, %p110
      %p113 = scmp.ne.s32.totalorder %s98, %s112
      %p114 = scmp.eq.s32.totalorder %s25, 0
      %p115 = por %p113, %p114
      %s117 = sadd.s32 %s116, 1
      %p120 = scmp.eq.s32.totalorder %s19, 1
      %p121 = scmp.ne.s32.totalorder %s116, %s118
      %p122 = scmp.eq.s32.totalorder %s19, 0
      %p123 = por %p121, %p122
      %p124 = scmp.ne.s32.totalorder %s116, %s118
      %p125 = scmp.eq.s32.totalorder %s24, 1
      %p126 = por %p124, %p125
      %p127 = scmp.ne.s32.totalorder %s118, %s119
      %p128 = scmp.eq.s32.totalorder %s24, 0
      %p129 = por %p127, %p128
      %p130 = scmp.ne.s32.totalorder %s118, %s119
      %p131 = scmp.eq.s32.totalorder %s25, 1
      %p132 = por %p130, %p131
      %p134 = scmp.ne.s32.totalorder %s119, %s133
      %p135 = scmp.eq.s32.totalorder %s25, 0
      %p136 = por %p134, %p135
      %s138 = sadd.s32 %s137, 1
      %p141 = scmp.eq.s32.totalorder %s19, 1
      %p142 = scmp.ne.s32.totalorder %s137, %s139
      %p143 = scmp.eq.s32.totalorder %s19, 0
      %p144 = por %p142, %p143
      %p145 = scmp.ne.s32.totalorder %s137, %s139
      %p146 = scmp.eq.s32.totalorder %s24, 1
      %p147 = por %p145, %p146
      %p148 = scmp.ne.s32.totalorder %s139, %s140
      %p149 = scmp.eq.s32.totalorder %s24, 0
      %p150 = por %p148, %p149
      %p151 = scmp.ne.s32.totalorder %s139, %s140
      %p152 = scmp.eq.s32.totalorder %s25, 1
      %p153 = por %p151, %p152
      %p155 = scmp.ne.s32.totalorder %s140, %s154
      %p156 = scmp.eq.s32.totalorder %s25, 0
      %p157 = por %p155, %p156
      %s159 = sadd.s32 %s158, 1
      %p162 = scmp.eq.s32.totalorder %s19, 1
      %p163 = scmp.ne.s32.totalorder %s158, %s160
      %p164 = scmp.eq.s32.totalorder %s19, 0
      %p165 = por %p163, %p164
      %p166 = scmp.ne.s32.totalorder %s158, %s160
      %p167 = scmp.eq.s32.totalorder %s24, 1
      %p168 = por %p166, %p167
      %p169 = scmp.ne.s32.totalorder %s160, %s161
      %p170 = scmp.eq.s32.totalorder %s24, 0
      %p171 = por %p169, %p170
      %p172 = scmp.ne.s32.totalorder %s160, %s161
      %p173 = scmp.eq.s32.totalorder %s25, 1
      %p174 = por %p172, %p173
      %p176 = scmp.ne.s32.totalorder %s161, %s175
      %p177 = scmp.eq.s32.totalorder %s25, 0
      %p178 = por %p176, %p177
      %s180 = sadd.s32 %s179, 1
      %p183 = scmp.eq.s32.totalorder %s19, 1
      %p184 = scmp.ne.s32.totalorder %s179, %s181
      %p185 = scmp.eq.s32.totalorder %s19, 0
      %p186 = por %p184, %p185
      %p187 = scmp.ne.s32.totalorder %s179, %s181
      %p188 = scmp.eq.s32.totalorder %s24, 1
      %p189 = por %p187, %p188
      %p190 = scmp.ne.s32.totalorder %s181, %s182
      %p191 = scmp.eq.s32.totalorder %s24, 0
      %p192 = por %p190, %p191
      %p193 = scmp.ne.s32.totalorder %s181, %s182
      %p194 = scmp.eq.s32.totalorder %s25, 1
      %p195 = por %p193, %p194
      %p197 = scmp.ne.s32.totalorder %s182, %s196
      %p198 = scmp.eq.s32.totalorder %s25, 0
      %p199 = por %p197, %p198
      %s201 = sadd.s32 %s200, 1
      %p204 = scmp.eq.s32.totalorder %s19, 1
      %p205 = scmp.ne.s32.totalorder %s200, %s202
      %p206 = scmp.eq.s32.totalorder %s19, 0
      %p207 = por %p205, %p206
      %p208 = scmp.ne.s32.totalorder %s200, %s202
      %p209 = scmp.eq.s32.totalorder %s24, 1
      %p210 = por %p208, %p209
      %p211 = scmp.ne.s32.totalorder %s202, %s203
      %p212 = scmp.eq.s32.totalorder %s24, 0
      %p213 = por %p211, %p212
      %p214 = scmp.ne.s32.totalorder %s202, %s203
      %p215 = scmp.eq.s32.totalorder %s25, 1
      %p216 = por %p214, %p215
      %p218 = scmp.ne.s32.totalorder %s203, %s217
      %p219 = scmp.eq.s32.totalorder %s25, 0
      %p220 = por %p218, %p219
      %s222 = sadd.s32 %s221, 1
      %p225 = scmp.eq.s32.totalorder %s19, 1
      %p226 = scmp.ne.s32.totalorder %s221, %s223
      %p227 = scmp.eq.s32.totalorder %s19, 0
      %p228 = por %p226, %p227
      %p229 = scmp.ne.s32.totalorder %s221, %s223
      %p230 = scmp.eq.s32.totalorder %s24, 1
      %p231 = por %p229, %p230
      %p232 = scmp.ne.s32.totalorder %s223, %s224
      %p233 = scmp.eq.s32.totalorder %s24, 0
      %p234 = por %p232, %p233
      %p235 = scmp.ne.s32.totalorder %s223, %s224
      %p236 = scmp.eq.s32.totalorder %s25, 1
      %p237 = por %p235, %p236
      %p239 = scmp.ne.s32.totalorder %s224, %s238
      %p240 = scmp.eq.s32.totalorder %s25, 0
      %p241 = por %p239, %p240
      %s242 = ssub.s32 %s19, %s26
      %p243 = scmp.eq.s32.totalorder %s242, 0
      %s245 = sadd.s32 %s244, 1
      %s246 = scalar_select %p243, %s244, %s245
      %p249 = pneg %p243
      %p250 = scmp.eq.s32.totalorder %s19, 1
      %p251 = por %p249, %p250
      %p252 = scmp.ne.s32.totalorder %s244, %s247
      %p253 = scmp.eq.s32.totalorder %s19, 0
      %p254 = por %p252, %p253
      %p255 = scmp.ne.s32.totalorder %s244, %s247
      %p256 = scmp.eq.s32.totalorder %s24, 1
      %p257 = por %p255, %p256
      %p258 = scmp.ne.s32.totalorder %s247, %s248
      %p259 = scmp.eq.s32.totalorder %s24, 0
      %p260 = por %p258, %p259
      %p261 = scmp.ne.s32.totalorder %s247, %s248
      %p262 = scmp.eq.s32.totalorder %s25, 1
      %p263 = por %p261, %p262
      %p265 = scmp.ne.s32.totalorder %s248, %s264
      %p266 = scmp.eq.s32.totalorder %s25, 0
      %p267 = por %p265, %p266
      %p268 = scmp.le.s32.totalorder 1, %s19
      %p269 = scmp.lt.s32.totalorder %s19, 3
      %p270 = pnand %p268, %p269
      %p271 = pneg %p270
      // Predicated region
      $region9: #{tpu_custom_call.1} parent=5 // pred_check
        _
      $region10: #{tpu_custom_call.1} parent=5 // pred_check_branch
        %273 = sbr.rel (%p270) target = $region12
      $region11: #{tpu_custom_call.1} parent=5 // pred_region
        %s274 = ssub.s32 %s19, 1
        // Predicated region
        $region13: #{tpu_custom_call.1} parent=11 // pred_check
          %p275 = pneg %p66
        $region14: #{tpu_custom_call.1} parent=11 // pred_check_branch
          %277 = sbr.rel (%p275) target = $region16
        $region15: #{tpu_custom_call.1} parent=11 // pred_region
          _
        $region16: #{tpu_custom_call.1} parent=11 // pred_fallthru
          _
        // Predicated region
        $region17: #{tpu_custom_call.1} parent=11 // pred_check
          %p278 = pneg %p87
        $region18: #{tpu_custom_call.1} parent=11 // pred_check_branch
          %280 = sbr.rel (%p278) target = $region20
        $region19: #{tpu_custom_call.1} parent=11 // pred_region
          _
        $region20: #{tpu_custom_call.1} parent=11 // pred_fallthru
          _
        // Predicated region
        $region21: #{tpu_custom_call.1} parent=11 // pred_check
          %p281 = pneg %p108
        $region22: #{tpu_custom_call.1} parent=11 // pred_check_branch
          %283 = sbr.rel (%p281) target = $region24
        $region23: #{tpu_custom_call.1} parent=11 // pred_region
          _
        $region24: #{tpu_custom_call.1} parent=11 // pred_fallthru
          _
        // Predicated region
        $region25: #{tpu_custom_call.1} parent=11 // pred_check
          %p284 = pneg %p129
        $region26: #{tpu_custom_call.1} parent=11 // pred_check_branch
          %286 = sbr.rel (%p284) target = $region28
        $region27: #{tpu_custom_call.1} parent=11 // pred_region
          _
        $region28: #{tpu_custom_call.1} parent=11 // pred_fallthru
          _
        // Predicated region
        $region29: #{tpu_custom_call.1} parent=11 // pred_check
          %p287 = pneg %p150
        $region30: #{tpu_custom_call.1} parent=11 // pred_check_branch
          %289 = sbr.rel (%p287) target = $region32
        $region31: #{tpu_custom_call.1} parent=11 // pred_region
          _
        $region32: #{tpu_custom_call.1} parent=11 // pred_fallthru
          _
        // Predicated region
        $region33: #{tpu_custom_call.1} parent=11 // pred_check
          %p290 = pneg %p171
        $region34: #{tpu_custom_call.1} parent=11 // pred_check_branch
          %292 = sbr.rel (%p290) target = $region36
        $region35: #{tpu_custom_call.1} parent=11 // pred_region
          _
        $region36: #{tpu_custom_call.1} parent=11 // pred_fallthru
          _
        // Predicated region
        $region37: #{tpu_custom_call.1} parent=11 // pred_check
          %p293 = pneg %p192
        $region38: #{tpu_custom_call.1} parent=11 // pred_check_branch
          %295 = sbr.rel (%p293) target = $region40
        $region39: #{tpu_custom_call.1} parent=11 // pred_region
          _
        $region40: #{tpu_custom_call.1} parent=11 // pred_fallthru
          _
        // Predicated region
        $region41: #{tpu_custom_call.1} parent=11 // pred_check
          %p296 = pneg %p213
        $region42: #{tpu_custom_call.1} parent=11 // pred_check_branch
          %298 = sbr.rel (%p296) target = $region44
        $region43: #{tpu_custom_call.1} parent=11 // pred_region
          _
        $region44: #{tpu_custom_call.1} parent=11 // pred_fallthru
          _
        // Predicated region
        $region45: #{tpu_custom_call.1} parent=11 // pred_check
          %p299 = pneg %p234
        $region46: #{tpu_custom_call.1} parent=11 // pred_check_branch
          %301 = sbr.rel (%p299) target = $region48
        $region47: #{tpu_custom_call.1} parent=11 // pred_region
          _
        $region48: #{tpu_custom_call.1} parent=11 // pred_fallthru
          _
      $region12: #{tpu_custom_call.1} parent=5 // pred_fallthru
        _
      %p302 = scmp.lt.s32.totalorder %s19, 2
      // Predicated region
      $region49: #{tpu_custom_call.1} parent=5 // pred_check
        %p303 = pneg %p302
      $region50: #{tpu_custom_call.1} parent=5 // pred_check_branch
        %305 = sbr.rel (%p303) target = $region52
      $region51: #{tpu_custom_call.1} parent=5 // pred_region
        // Predicated region
        $region53: #{tpu_custom_call.1} parent=51 // pred_check
          %p306 = pneg %p39
        $region54: #{tpu_custom_call.1} parent=51 // pred_check_branch
          %308 = sbr.rel (%p306) target = $region56
        $region55: #{tpu_custom_call.1} parent=51 // pred_region
          %s309 = smul.u32 4, %s19
          %p310 = scmp.lt.s32.totalorder %s309, 7
          %s311 = scalar_select %p310, %s309, 7
          %s312 = smul.addr %s311, 4
          %s313 = scalar_lea.vmem %s0, %s312
          %s314 = smul.u32 4, %s19
        $region56: #{tpu_custom_call.1} parent=51 // pred_fallthru
          _
      $region52: #{tpu_custom_call.1} parent=5 // pred_fallthru
        _
      %p315 = scmp.le.s32.totalorder 1, %s19
      %p316 = scmp.lt.s32.totalorder %s19, 3
      %p317 = pnand %p315, %p316
      %p318 = pneg %p317
      // Predicated region
      $region57: #{tpu_custom_call.1} parent=5 // pred_check
        _
      $region58: #{tpu_custom_call.1} parent=5 // pred_check_branch
        %320 = sbr.rel (%p317) target = $region60
      $region59: #{tpu_custom_call.1} parent=5 // pred_region
        %s321 = ssub.s32 %s19, 1
        %s322 = smul.u32 4, %s24
        %p323 = scmp.lt.s32.totalorder %s322, 7
        %s324 = scalar_select %p323, %s322, 7
        %s325 = smul.addr %s324, 4
        %s326 = scalar_lea.vmem %s0, %s325
        %p327 = pneg %p45
        %p328 = pneg %p42
        %p329 = pneg %p66
        %p330 = pneg %p63
        %p331 = pneg %p87
        %p332 = pneg %p84
        %p333 = pneg %p108
        %p334 = pneg %p105
        %p335 = pneg %p129
        %p336 = pneg %p126
        %p337 = pneg %p150
        %p338 = pneg %p147
        %p339 = pneg %p171
        %p340 = pneg %p168
        %p341 = pneg %p192
        %p342 = pneg %p189
        %p343 = pneg %p213
        %p344 = pneg %p210
        %p345 = pneg %p234
        %p346 = pneg %p231
        %p347 = pneg %p260
        %p348 = pneg %p257
        %s349 = sand.u32 %s247, 1
        %s350 = scalar_lea.sflag [#allocation3], %s349
        %s351 = sand.u32 %s247, 1
        %s352 = smul.addr %s351, 16
        %s353 = scalar_lea.vmem [#allocation2], %s352
        %s354 = smul.u32 4, %s24
        %p355 = scmp.lt.s32.totalorder %s354, 7
        %s356 = scalar_select %p355, %s354, 7
        %s357 = smul.addr %s356, 4
        %s358 = scalar_lea.vmem %s0, %s357
        %s359 = smul.u32 4, %s24
        %s360 = smul.u32 4, %s24
        %v362 = vld [vmem:[%s358] sm:$0x77]
        %v363 = vld [vmem:[%s358 + $0x8] sm:$0x77]
        %v364 = vld [vmem:[%s3] sm:$0xff]
        %v365 = vld [vmem:[%s3 + $0x8] sm:$0xff]
        %v366 = vld [vmem:[%s3 + $0x10] sm:$0xff]
        %v367 = vld [vmem:[%s3 + $0x18] sm:$0xff]
        %v368 = vld [vmem:[%s3 + $0x20] sm:$0xff]
        %v369 = vld [vmem:[%s3 + $0x28] sm:$0xff]
        %v370 = vld [vmem:[%s3 + $0x30] sm:$0xff]
        %v371 = vld [vmem:[%s3 + $0x38] sm:$0xff]
        %v372 = vld [vmem:[%s3 + $0x40] sm:$0xff]
        %v373 = vld [vmem:[%s3 + $0x48] sm:$0xff]
        %v374 = vld [vmem:[%s3 + $0x50] sm:$0xff]
        %v375 = vld [vmem:[%s3 + $0x58] sm:$0xff]
        %v376 = vld [vmem:[%s3 + $0x60] sm:$0xff]
        %v377 = vld [vmem:[%s3 + $0x68] sm:$0xff]
        %v378 = vld [vmem:[%s3 + $0x70] sm:$0xff]
        %v379 = vld [vmem:[%s3 + $0x78] sm:$0xff]
        %v380 = vld [vmem:[%s3 + $0x80] sm:$0x3]
        %v381 = vld [vmem:[%s3 + $0x88] sm:$0xff]
        %v382 = vld [vmem:[%s3 + $0x90] sm:$0xff]
        %v383 = vld [vmem:[%s3 + $0x98] sm:$0xff]
        %v384 = vld [vmem:[%s3 + $0xa0] sm:$0xff]
        %v385 = vld [vmem:[%s3 + $0xa8] sm:$0xff]
        %v386 = vld [vmem:[%s3 + $0xb0] sm:$0xff]
        %v387 = vld [vmem:[%s3 + $0xb8] sm:$0xff]
        %v388 = vld [vmem:[%s3 + $0xc0] sm:$0xff]
        %v389 = vld [vmem:[%s3 + $0xc8] sm:$0xff]
        %v390 = vld [vmem:[%s3 + $0xd0] sm:$0xff]
        %v391 = vld [vmem:[%s3 + $0xd8] sm:$0xff]
        %v392 = vld [vmem:[%s3 + $0xe0] sm:$0xff]
        %v393 = vld [vmem:[%s3 + $0xe8] sm:$0xff]
        %v394 = vld [vmem:[%s3 + $0xf0] sm:$0xff]
        %v395 = vld [vmem:[%s3 + $0xf8] sm:$0xff]
        %v396 = vld [vmem:[%s3 + $0x100] sm:$0xff]
        %v397 = vld [vmem:[%s3 + $0x108] sm:$0x3]
        %v398 = vld [vmem:[%s3 + $0x110] sm:$0xff]
        %v399 = vld [vmem:[%s3 + $0x118] sm:$0xff]
        %v400 = vld [vmem:[%s3 + $0x120] sm:$0xff]
        %v401 = vld [vmem:[%s3 + $0x128] sm:$0xff]
        %v402 = vld [vmem:[%s3 + $0x130] sm:$0xff]
        %v403 = vld [vmem:[%s3 + $0x138] sm:$0xff]
        %v404 = vld [vmem:[%s3 + $0x140] sm:$0xff]
        %v405 = vld [vmem:[%s3 + $0x148] sm:$0xff]
        %v406 = vld [vmem:[%s3 + $0x150] sm:$0xff]
        %v407 = vld [vmem:[%s3 + $0x158] sm:$0xff]
        %v408 = vld [vmem:[%s3 + $0x160] sm:$0xff]
        %v409 = vld [vmem:[%s3 + $0x168] sm:$0xff]
        %v410 = vld [vmem:[%s3 + $0x170] sm:$0xff]
        %v411 = vld [vmem:[%s3 + $0x178] sm:$0xff]
        %v412 = vld [vmem:[%s3 + $0x180] sm:$0xff]
        %v413 = vld [vmem:[%s3 + $0x188] sm:$0xff]
        %v414 = vld [vmem:[%s3 + $0x190] sm:$0x3]
        %v415 = vld [vmem:[%s1] sm:$0xff]
        %v416 = vld [vmem:[%s1 + $0x8] sm:$0xff]
        %v417 = vld [vmem:[%s1 + $0x10] sm:$0xff]
        %v418 = vld [vmem:[%s1 + $0x18] sm:$0xff]
        %v419 = vld [vmem:[%s1 + $0x20] sm:$0xff]
        %v420 = vld [vmem:[%s1 + $0x28] sm:$0xff]
        %v421 = vld [vmem:[%s1 + $0x30] sm:$0xff]
        %v422 = vld [vmem:[%s1 + $0x38] sm:$0xff]
        %v423 = vld [vmem:[%s1 + $0x40] sm:$0xff]
        %v424 = vld [vmem:[%s1 + $0x48] sm:$0xff]
        %v425 = vld [vmem:[%s1 + $0x50] sm:$0xff]
        %v426 = vld [vmem:[%s1 + $0x58] sm:$0xff]
        %v427 = vld [vmem:[%s1 + $0x60] sm:$0xff]
        %v428 = vld [vmem:[%s1 + $0x68] sm:$0xff]
        %v429 = vld [vmem:[%s1 + $0x70] sm:$0xff]
        %v430 = vld [vmem:[%s1 + $0x78] sm:$0xff]
        %v431 = vld [vmem:[%s1 + $0x80] sm:$0x3]
        %433 = vset.pattern.permute.xlu0 0
        %434 = vperm.xlu0 %433, %v364
        %v435 = vpop.permute.xlu0 %434
        %438 = vset.pattern.permute.xlu0 0
        %439 = vperm.xlu0 %438, %v365
        %v440 = vpop.permute.xlu0 %439
        %443 = vset.pattern.permute.xlu0 0
        %444 = vperm.xlu0 %443, %v366
        %v445 = vpop.permute.xlu0 %444
        %448 = vset.pattern.permute.xlu0 0
        %449 = vperm.xlu0 %448, %v367
        %v450 = vpop.permute.xlu0 %449
        %453 = vset.pattern.permute.xlu0 0
        %454 = vperm.xlu0 %453, %v368
        %v455 = vpop.permute.xlu0 %454
        %458 = vset.pattern.permute.xlu0 0
        %459 = vperm.xlu0 %458, %v369
        %v460 = vpop.permute.xlu0 %459
        %463 = vset.pattern.permute.xlu0 0
        %464 = vperm.xlu0 %463, %v370
        %v465 = vpop.permute.xlu0 %464
        %468 = vset.pattern.permute.xlu0 0
        %469 = vperm.xlu0 %468, %v371
        %v470 = vpop.permute.xlu0 %469
        %473 = vset.pattern.permute.xlu0 0
        %474 = vperm.xlu0 %473, %v372
        %v475 = vpop.permute.xlu0 %474
        %478 = vset.pattern.permute.xlu0 0
        %479 = vperm.xlu0 %478, %v373
        %v480 = vpop.permute.xlu0 %479
        %483 = vset.pattern.permute.xlu0 0
        %484 = vperm.xlu0 %483, %v374
        %v485 = vpop.permute.xlu0 %484
        %488 = vset.pattern.permute.xlu0 0
        %489 = vperm.xlu0 %488, %v375
        %v490 = vpop.permute.xlu0 %489
        %493 = vset.pattern.permute.xlu0 0
        %494 = vperm.xlu0 %493, %v376
        %v495 = vpop.permute.xlu0 %494
        %498 = vset.pattern.permute.xlu0 0
        %499 = vperm.xlu0 %498, %v377
        %v500 = vpop.permute.xlu0 %499
        %503 = vset.pattern.permute.xlu0 0
        %504 = vperm.xlu0 %503, %v378
        %v505 = vpop.permute.xlu0 %504
        %508 = vset.pattern.permute.xlu0 0
        %509 = vperm.xlu0 %508, %v379
        %v510 = vpop.permute.xlu0 %509
        %513 = vset.pattern.permute.xlu0 0
        %514 = vperm.xlu0 %513, %v380
        %v515 = vpop.permute.xlu0 %514
        %v519 = vcombine.high %v362, %v362
        %v520 = vcombine.high %v363, %v363
        %vm521 = vcmask 23552
        %v523 = vsel %vm521, %v415, 0
        %v526 = vsel %vm521, %v416, 0
        %v529 = vsel %vm521, %v417, 0
        %v532 = vsel %vm521, %v418, 0
        %v535 = vsel %vm521, %v419, 0
        %v538 = vsel %vm521, %v420, 0
        %v541 = vsel %vm521, %v421, 0
        %v544 = vsel %vm521, %v422, 0
        %v547 = vsel %vm521, %v423, 0
        %v550 = vsel %vm521, %v424, 0
        %v553 = vsel %vm521, %v425, 0
        %v556 = vsel %vm521, %v426, 0
        %v559 = vsel %vm521, %v427, 0
        %v562 = vsel %vm521, %v428, 0
        %v565 = vsel %vm521, %v429, 0
        %v568 = vsel %vm521, %v430, 0
        %v571 = vsel %vm521, %v431, 0
        %vm573 = vcmask 1042432
        %v574 = vsel %vm573, %v362, 0
        %v576 = vsel %vm573, %v519, 0
        %v578 = vsel %vm573, %v363, 0
        %v580 = vsel %vm573, %v520, 0
        %582 = vmatprep.subr.mxu0 %v576
        %583 = vmatpush1.msra.mxu0 %v574
        %584 = vmatprep.subr.mxu0 0.0
        %585 = vmatpush1.msra.mxu0 0.0
        %586 = vmatprep.subr.mxu0 0.0
        %587 = vmatpush1.msra.mxu0 0.0
        %588 = vmatprep.subr.mxu0 0.0
        %589 = vmatpush1.msra.mxu0 0.0
        %590 = vmatprep.subr.mxu0 0.0
        %591 = vmatpush1.msra.mxu0 0.0
        %592 = vmatprep.subr.mxu0 0.0
        %593 = vmatpush1.msra.mxu0 0.0
        %594 = vmatprep.subr.mxu0 0.0
        %595 = vmatpush1.msra.mxu0 0.0
        %596 = vmatprep.subr.mxu0 0.0
        %597 = vmatpush1.msra.mxu0 0.0
        %598 = vmatprep.subr.mxu0 0.0
        %599 = vmatpush1.msra.mxu0 0.0
        %600 = vmatprep.subr.mxu0 0.0
        %601 = vmatpush1.msra.mxu0 0.0
        %602 = vmatprep.subr.mxu0 0.0
        %603 = vmatpush1.msra.mxu0 0.0
        %604 = vmatprep.subr.mxu0 0.0
        %605 = vmatpush1.msra.mxu0 0.0
        %606 = vmatprep.subr.mxu0 0.0
        %607 = vmatpush1.msra.mxu0 0.0
        %608 = vmatprep.subr.mxu0 0.0
        %609 = vmatpush1.msra.mxu0 0.0
        %610 = vmatprep.subr.mxu0 0.0
        %611 = vmatpush1.msra.mxu0 0.0
        %612 = vmatprep.subr.mxu0 0.0
        %613 = vmatpush1.msra.mxu0 0.0
        %614 = vmatprep.subr.mxu0 0.0
        %615 = vmatpush1.msra.mxu0 0.0
        %616 = vmatprep.subr.mxu0 0.0
        %617 = vmatpush1.msra.mxu0 0.0
        %618 = vmatprep.subr.mxu0 0.0
        %619 = vmatpush1.msra.mxu0 0.0
        %620 = vmatprep.subr.mxu0 0.0
        %621 = vmatpush1.msra.mxu0 0.0
        %622 = vmatprep.subr.mxu0 0.0
        %623 = vmatpush1.msra.mxu0 0.0
        %624 = vmatprep.subr.mxu0 0.0
        %625 = vmatpush1.msra.mxu0 0.0
        %626 = vmatprep.subr.mxu0 0.0
        %627 = vmatpush1.msra.mxu0 0.0
        %628 = vmatprep.subr.mxu0 0.0
        %629 = vmatpush1.msra.mxu0 0.0
        %630 = vmatprep.subr.mxu0 0.0
        %631 = vmatpush1.msra.mxu0 0.0
        %632 = vmatprep.subr.mxu0 0.0
        %633 = vmatpush1.msra.mxu0 0.0
        %634 = vmatprep.subr.mxu0 0.0
        %635 = vmatpush1.msra.mxu0 0.0
        %636 = vmatprep.subr.mxu0 0.0
        %637 = vmatpush1.msra.mxu0 0.0
        %638 = vmatprep.subr.mxu0 0.0
        %639 = vmatpush1.msra.mxu0 0.0
        %640 = vmatprep.subr.mxu0 0.0
        %641 = vmatpush1.msra.mxu0 0.0
        %642 = vmatprep.subr.mxu0 0.0
        %643 = vmatpush1.msra.mxu0 0.0
        %644 = vmatprep.subr.mxu0 0.0
        %645 = vmatpush1.msra.mxu0 0.0
        %646 = vmatprep.mubr.f32.mxu0 0.0
        %647 = vmatmul.mubr.f32.gmra.mrb[0].mxu0 %v523
        %v648 = vpop.f32.mrb[0].mxu0
        %v649 = vadd.f32 %v435, %v648
        %v650 = vpop.f32.mrb[0].mxu0
        %v651 = vadd.f32 %v435, %v650
        %652 = vmatprep.mubr.f32.mxu0 0.0
        %653 = vmatmul.mubr.f32.gmra.mrb[0].mxu0 %v526
        %v654 = vpop.f32.mrb[0].mxu0
        %v655 = vadd.f32 %v440, %v654
        %v656 = vpop.f32.mrb[0].mxu0
        %v657 = vadd.f32 %v440, %v656
        %658 = vmatprep.mubr.f32.mxu0 0.0
        %659 = vmatmul.mubr.f32.gmra.mrb[0].mxu0 %v529
        %v660 = vpop.f32.mrb[0].mxu0
        %v661 = vadd.f32 %v445, %v660
        %v662 = vpop.f32.mrb[0].mxu0
        %v663 = vadd.f32 %v445, %v662
        %664 = vmatprep.mubr.f32.mxu0 0.0
        %665 = vmatmul.mubr.f32.gmra.mrb[0].mxu0 %v532
        %v666 = vpop.f32.mrb[0].mxu0
        %v667 = vadd.f32 %v450, %v666
        %v668 = vpop.f32.mrb[0].mxu0
        %v669 = vadd.f32 %v450, %v668
        %670 = vmatprep.mubr.f32.mxu0 0.0
        %671 = vmatmul.mubr.f32.gmra.mrb[0].mxu0 %v535
        %v672 = vpop.f32.mrb[0].mxu0
        %v673 = vadd.f32 %v455, %v672
        %v674 = vpop.f32.mrb[0].mxu0
        %v675 = vadd.f32 %v455, %v674
        %676 = vmatprep.mubr.f32.mxu0 0.0
        %677 = vmatmul.mubr.f32.gmra.mrb[0].mxu0 %v538
        %v678 = vpop.f32.mrb[0].mxu0
        %v679 = vadd.f32 %v460, %v678
        %v680 = vpop.f32.mrb[0].mxu0
        %v681 = vadd.f32 %v460, %v680
        %682 = vmatprep.mubr.f32.mxu0 0.0
        %683 = vmatmul.mubr.f32.gmra.mrb[0].mxu0 %v541
        %v684 = vpop.f32.mrb[0].mxu0
        %v685 = vadd.f32 %v465, %v684
        %v686 = vpop.f32.mrb[0].mxu0
        %v687 = vadd.f32 %v465, %v686
        %688 = vmatprep.mubr.f32.mxu0 0.0
        %689 = vmatmul.mubr.f32.gmra.mrb[0].mxu0 %v544
        %v690 = vpop.f32.mrb[0].mxu0
        %v691 = vadd.f32 %v470, %v690
        %v692 = vpop.f32.mrb[0].mxu0
        %v693 = vadd.f32 %v470, %v692
        %694 = vmatprep.mubr.f32.mxu0 0.0
        %695 = vmatmul.mubr.f32.gmra.mrb[0].mxu0 %v547
        %v696 = vpop.f32.mrb[0].mxu0
        %v697 = vadd.f32 %v475, %v696
        %v698 = vpop.f32.mrb[0].mxu0
        %v699 = vadd.f32 %v475, %v698
        %700 = vmatprep.mubr.f32.mxu0 0.0
        %701 = vmatmul.mubr.f32.gmra.mrb[0].mxu0 %v550
        %v702 = vpop.f32.mrb[0].mxu0
        %v703 = vadd.f32 %v480, %v702
        %v704 = vpop.f32.mrb[0].mxu0
        %v705 = vadd.f32 %v480, %v704
        %706 = vmatprep.mubr.f32.mxu0 0.0
        %707 = vmatmul.mubr.f32.gmra.mrb[0].mxu0 %v553
        %v708 = vpop.f32.mrb[0].mxu0
        %v709 = vadd.f32 %v485, %v708
        %v710 = vpop.f32.mrb[0].mxu0
        %v711 = vadd.f32 %v485, %v710
        %712 = vmatprep.mubr.f32.mxu0 0.0
        %713 = vmatmul.mubr.f32.gmra.mrb[0].mxu0 %v556
        %v714 = vpop.f32.mrb[0].mxu0
        %v715 = vadd.f32 %v490, %v714
        %v716 = vpop.f32.mrb[0].mxu0
        %v717 = vadd.f32 %v490, %v716
        %718 = vmatprep.mubr.f32.mxu0 0.0
        %719 = vmatmul.mubr.f32.gmra.mrb[0].mxu0 %v559
        %v720 = vpop.f32.mrb[0].mxu0
        %v721 = vadd.f32 %v495, %v720
        %v722 = vpop.f32.mrb[0].mxu0
        %v723 = vadd.f32 %v495, %v722
        %724 = vmatprep.mubr.f32.mxu0 0.0
        %725 = vmatmul.mubr.f32.gmra.mrb[0].mxu0 %v562
        %v726 = vpop.f32.mrb[0].mxu0
        %v727 = vadd.f32 %v500, %v726
        %v728 = vpop.f32.mrb[0].mxu0
        %v729 = vadd.f32 %v500, %v728
        %730 = vmatprep.mubr.f32.mxu0 0.0
        %731 = vmatmul.mubr.f32.gmra.mrb[0].mxu0 %v565
        %v732 = vpop.f32.mrb[0].mxu0
        %v733 = vadd.f32 %v505, %v732
        %v734 = vpop.f32.mrb[0].mxu0
        %v735 = vadd.f32 %v505, %v734
        %736 = vmatprep.mubr.f32.mxu0 0.0
        %737 = vmatmul.mubr.f32.gmra.mrb[0].mxu0 %v568
        %v738 = vpop.f32.mrb[0].mxu0
        %v739 = vadd.f32 %v510, %v738
        %v740 = vpop.f32.mrb[0].mxu0
        %v741 = vadd.f32 %v510, %v740
        %742 = vmatprep.mubr.f32.mxu0 0.0
        %743 = vmatmul.mubr.f32.gmra.mrb[0].mxu0 %v571
        %v744 = vpop.f32.mrb[0].mxu0
        %v745 = vadd.f32 %v515, %v744
        %v746 = vpop.f32.mrb[0].mxu0
        %v747 = vadd.f32 %v515, %v746
        %748 = vdwg.mxu0
        %749 = vmatprep.subr.mxu0 %v580
        %750 = vmatpush1.msra.mxu0 %v578
        %751 = vmatprep.subr.mxu0 0.0
        %752 = vmatpush1.msra.mxu0 0.0
        %753 = vmatprep.subr.mxu0 0.0
        %754 = vmatpush1.msra.mxu0 0.0
        %755 = vmatprep.subr.mxu0 0.0
        %756 = vmatpush1.msra.mxu0 0.0
        %757 = vmatprep.subr.mxu0 0.0
        %758 = vmatpush1.msra.mxu0 0.0
        %759 = vmatprep.subr.mxu0 0.0
        %760 = vmatpush1.msra.mxu0 0.0
        %761 = vmatprep.subr.mxu0 0.0
        %762 = vmatpush1.msra.mxu0 0.0
        %763 = vmatprep.subr.mxu0 0.0
        %764 = vmatpush1.msra.mxu0 0.0
        %765 = vmatprep.subr.mxu0 0.0
        %766 = vmatpush1.msra.mxu0 0.0
        %767 = vmatprep.subr.mxu0 0.0
        %768 = vmatpush1.msra.mxu0 0.0
        %769 = vmatprep.subr.mxu0 0.0
        %770 = vmatpush1.msra.mxu0 0.0
        %771 = vmatprep.subr.mxu0 0.0
        %772 = vmatpush1.msra.mxu0 0.0
        %773 = vmatprep.subr.mxu0 0.0
        %774 = vmatpush1.msra.mxu0 0.0
        %775 = vmatprep.subr.mxu0 0.0
        %776 = vmatpush1.msra.mxu0 0.0
        %777 = vmatprep.subr.mxu0 0.0
        %778 = vmatpush1.msra.mxu0 0.0
        %779 = vmatprep.subr.mxu0 0.0
        %780 = vmatpush1.msra.mxu0 0.0
        %781 = vmatprep.subr.mxu0 0.0
        %782 = vmatpush1.msra.mxu0 0.0
        %783 = vmatprep.subr.mxu0 0.0
        %784 = vmatpush1.msra.mxu0 0.0
        %785 = vmatprep.subr.mxu0 0.0
        %786 = vmatpush1.msra.mxu0 0.0
        %787 = vmatprep.subr.mxu0 0.0
        %788 = vmatpush1.msra.mxu0 0.0
        %789 = vmatprep.subr.mxu0 0.0
        %790 = vmatpush1.msra.mxu0 0.0
        %791 = vmatprep.subr.mxu0 0.0
        %792 = vmatpush1.msra.mxu0 0.0
        %793 = vmatprep.subr.mxu0 0.0
        %794 = vmatpush1.msra.mxu0 0.0
        %795 = vmatprep.subr.mxu0 0.0
        %796 = vmatpush1.msra.mxu0 0.0
        %797 = vmatprep.subr.mxu0 0.0
        %798 = vmatpush1.msra.mxu0 0.0
        %799 = vmatprep.subr.mxu0 0.0
        %800 = vmatpush1.msra.mxu0 0.0
        %801 = vmatprep.subr.mxu0 0.0
        %802 = vmatpush1.msra.mxu0 0.0
        %803 = vmatprep.subr.mxu0 0.0
        %804 = vmatpush1.msra.mxu0 0.0
        %805 = vmatprep.subr.mxu0 0.0
        %806 = vmatpush1.msra.mxu0 0.0
        %807 = vmatprep.subr.mxu0 0.0
        %808 = vmatpush1.msra.mxu0 0.0
        %809 = vmatprep.subr.mxu0 0.0
        %810 = vmatpush1.msra.mxu0 0.0
        %811 = vmatprep.subr.mxu0 0.0
        %812 = vmatpush1.msra.mxu0 0.0
        %813 = vmatprep.mubr.f32.mxu0 0.0
        %814 = vmatmul.mubr.f32.gmra.mrb[0].mxu0 %v523
        %v815 = vpop.f32.mrb[0].mxu0
        %v816 = vadd.f32 %v435, %v815
        %v817 = vpop.f32.mrb[0].mxu0
        %v818 = vadd.f32 %v435, %v817
        %819 = vmatprep.mubr.f32.mxu0 0.0
        %820 = vmatmul.mubr.f32.gmra.mrb[0].mxu0 %v526
        %v821 = vpop.f32.mrb[0].mxu0
        %v822 = vadd.f32 %v440, %v821
        %v823 = vpop.f32.mrb[0].mxu0
        %v824 = vadd.f32 %v440, %v823
        %825 = vmatprep.mubr.f32.mxu0 0.0
        %826 = vmatmul.mubr.f32.gmra.mrb[0].mxu0 %v529
        %v827 = vpop.f32.mrb[0].mxu0
        %v828 = vadd.f32 %v445, %v827
        %v829 = vpop.f32.mrb[0].mxu0
        %v830 = vadd.f32 %v445, %v829
        %831 = vmatprep.mubr.f32.mxu0 0.0
        %832 = vmatmul.mubr.f32.gmra.mrb[0].mxu0 %v532
        %v833 = vpop.f32.mrb[0].mxu0
        %v834 = vadd.f32 %v450, %v833
        %v835 = vpop.f32.mrb[0].mxu0
        %v836 = vadd.f32 %v450, %v835
        %837 = vmatprep.mubr.f32.mxu0 0.0
        %838 = vmatmul.mubr.f32.gmra.mrb[0].mxu0 %v535
        %v839 = vpop.f32.mrb[0].mxu0
        %v840 = vadd.f32 %v455, %v839
        %v841 = vpop.f32.mrb[0].mxu0
        %v842 = vadd.f32 %v455, %v841
        %843 = vmatprep.mubr.f32.mxu0 0.0
        %844 = vmatmul.mubr.f32.gmra.mrb[0].mxu0 %v538
        %v845 = vpop.f32.mrb[0].mxu0
        %v846 = vadd.f32 %v460, %v845
        %v847 = vpop.f32.mrb[0].mxu0
        %v848 = vadd.f32 %v460, %v847
        %849 = vmatprep.mubr.f32.mxu0 0.0
        %850 = vmatmul.mubr.f32.gmra.mrb[0].mxu0 %v541
        %v851 = vpop.f32.mrb[0].mxu0
        %v852 = vadd.f32 %v465, %v851
        %v853 = vpop.f32.mrb[0].mxu0
        %v854 = vadd.f32 %v465, %v853
        %855 = vmatprep.mubr.f32.mxu0 0.0
        %856 = vmatmul.mubr.f32.gmra.mrb[0].mxu0 %v544
        %v857 = vpop.f32.mrb[0].mxu0
        %v858 = vadd.f32 %v470, %v857
        %v859 = vpop.f32.mrb[0].mxu0
        %v860 = vadd.f32 %v470, %v859
        %861 = vmatprep.mubr.f32.mxu0 0.0
        %862 = vmatmul.mubr.f32.gmra.mrb[0].mxu0 %v547
        %v863 = vpop.f32.mrb[0].mxu0
        %v864 = vadd.f32 %v475, %v863
        %v865 = vpop.f32.mrb[0].mxu0
        %v866 = vadd.f32 %v475, %v865
        %867 = vmatprep.mubr.f32.mxu0 0.0
        %868 = vmatmul.mubr.f32.gmra.mrb[0].mxu0 %v550
        %v869 = vpop.f32.mrb[0].mxu0
        %v870 = vadd.f32 %v480, %v869
        %v871 = vpop.f32.mrb[0].mxu0
        %v872 = vadd.f32 %v480, %v871
        %873 = vmatprep.mubr.f32.mxu0 0.0
        %874 = vmatmul.mubr.f32.gmra.mrb[0].mxu0 %v553
        %v875 = vpop.f32.mrb[0].mxu0
        %v876 = vadd.f32 %v485, %v875
        %v877 = vpop.f32.mrb[0].mxu0
        %v878 = vadd.f32 %v485, %v877
        %879 = vmatprep.mubr.f32.mxu0 0.0
        %880 = vmatmul.mubr.f32.gmra.mrb[0].mxu0 %v556
        %v881 = vpop.f32.mrb[0].mxu0
        %v882 = vadd.f32 %v490, %v881
        %v883 = vpop.f32.mrb[0].mxu0
        %v884 = vadd.f32 %v490, %v883
        %885 = vmatprep.mubr.f32.mxu0 0.0
        %886 = vmatmul.mubr.f32.gmra.mrb[0].mxu0 %v559
        %v887 = vpop.f32.mrb[0].mxu0
        %v888 = vadd.f32 %v495, %v887
        %v889 = vpop.f32.mrb[0].mxu0
        %v890 = vadd.f32 %v495, %v889
        %891 = vmatprep.mubr.f32.mxu0 0.0
        %892 = vmatmul.mubr.f32.gmra.mrb[0].mxu0 %v562
        %v893 = vpop.f32.mrb[0].mxu0
        %v894 = vadd.f32 %v500, %v893
        %v895 = vpop.f32.mrb[0].mxu0
        %v896 = vadd.f32 %v500, %v895
        %897 = vmatprep.mubr.f32.mxu0 0.0
        %898 = vmatmul.mubr.f32.gmra.mrb[0].mxu0 %v565
        %v899 = vpop.f32.mrb[0].mxu0
        %v900 = vadd.f32 %v505, %v899
        %v901 = vpop.f32.mrb[0].mxu0
        %v902 = vadd.f32 %v505, %v901
        %903 = vmatprep.mubr.f32.mxu0 0.0
        %904 = vmatmul.mubr.f32.gmra.mrb[0].mxu0 %v568
        %v905 = vpop.f32.mrb[0].mxu0
        %v906 = vadd.f32 %v510, %v905
        %v907 = vpop.f32.mrb[0].mxu0
        %v908 = vadd.f32 %v510, %v907
        %909 = vmatprep.mubr.f32.mxu0 0.0
        %910 = vmatmul.mubr.f32.gmra.mrb[0].mxu0 %v571
        %v911 = vpop.f32.mrb[0].mxu0
        %v912 = vadd.f32 %v515, %v911
        %v913 = vpop.f32.mrb[0].mxu0
        %v914 = vadd.f32 %v515, %v913
        %915 = vdwg.mxu0
        %v916 = vtanh.pop %v649
        %v917 = vtanh.pop %v651
        %v918 = vtanh.pop %v816
        %v919 = vtanh.pop %v818
        %v920 = vtanh.pop %v655
        %v921 = vtanh.pop %v657
        %v922 = vtanh.pop %v822
        %v923 = vtanh.pop %v824
        %v924 = vtanh.pop %v661
        %v925 = vtanh.pop %v663
        %v926 = vtanh.pop %v828
        %v927 = vtanh.pop %v830
        %v928 = vtanh.pop %v667
        %v929 = vtanh.pop %v669
        %v930 = vtanh.pop %v834
        %v931 = vtanh.pop %v836
        %v932 = vtanh.pop %v673
        %v933 = vtanh.pop %v675
        %v934 = vtanh.pop %v840
        %v935 = vtanh.pop %v842
        %v936 = vtanh.pop %v679
        %v937 = vtanh.pop %v681
        %v938 = vtanh.pop %v846
        %v939 = vtanh.pop %v848
        %v940 = vtanh.pop %v685
        %v941 = vtanh.pop %v687
        %v942 = vtanh.pop %v852
        %v943 = vtanh.pop %v854
        %v944 = vtanh.pop %v691
        %v945 = vtanh.pop %v693
        %v946 = vtanh.pop %v858
        %v947 = vtanh.pop %v860
        %v948 = vtanh.pop %v697
        %v949 = vtanh.pop %v699
        %v950 = vtanh.pop %v864
        %v951 = vtanh.pop %v866
        %v952 = vtanh.pop %v703
        %v953 = vtanh.pop %v705
        %v954 = vtanh.pop %v870
        %v955 = vtanh.pop %v872
        %v956 = vtanh.pop %v709
        %v957 = vtanh.pop %v711
        %v958 = vtanh.pop %v876
        %v959 = vtanh.pop %v878
        %v960 = vtanh.pop %v715
        %v961 = vtanh.pop %v717
        %v962 = vtanh.pop %v882
        %v963 = vtanh.pop %v884
        %v964 = vtanh.pop %v721
        %v965 = vtanh.pop %v723
        %v966 = vtanh.pop %v888
        %v967 = vtanh.pop %v890
        %v968 = vtanh.pop %v727
        %v969 = vtanh.pop %v729
        %v970 = vtanh.pop %v894
        %v971 = vtanh.pop %v896
        %v972 = vtanh.pop %v733
        %v973 = vtanh.pop %v735
        %v974 = vtanh.pop %v900
        %v975 = vtanh.pop %v902
        %v976 = vtanh.pop %v739
        %v977 = vtanh.pop %v741
        %v978 = vtanh.pop %v906
        %v979 = vtanh.pop %v908
        %v980 = vtanh.pop %v745
        %v981 = vtanh.pop %v747
        %v982 = vtanh.pop %v912
        %v983 = vtanh.pop %v914
        %v984 = vld [vmem:[%s2] sm:$0xff]
        %v985 = vld [vmem:[%s2 + $0x8] sm:$0xff]
        %v986 = vld [vmem:[%s2 + $0x10] sm:$0xff]
        %v987 = vld [vmem:[%s2 + $0x18] sm:$0xff]
        %v988 = vld [vmem:[%s2 + $0x20] sm:$0xff]
        %v989 = vld [vmem:[%s2 + $0x28] sm:$0xff]
        %v990 = vld [vmem:[%s2 + $0x30] sm:$0xff]
        %v991 = vld [vmem:[%s2 + $0x38] sm:$0xff]
        %v992 = vld [vmem:[%s2 + $0x40] sm:$0xff]
        %v993 = vld [vmem:[%s2 + $0x48] sm:$0xff]
        %v994 = vld [vmem:[%s2 + $0x50] sm:$0xff]
        %v995 = vld [vmem:[%s2 + $0x58] sm:$0xff]
        %v996 = vld [vmem:[%s2 + $0x60] sm:$0xff]
        %v997 = vld [vmem:[%s2 + $0x68] sm:$0xff]
        %v998 = vld [vmem:[%s2 + $0x70] sm:$0xff]
        %v999 = vld [vmem:[%s2 + $0x78] sm:$0xff]
        %v1000 = vld [vmem:[%s2 + $0x80] sm:$0x11]
        %v1001 = vld [vmem:[%s2 + $0x88] sm:$0xff]
        %v1002 = vld [vmem:[%s2 + $0x90] sm:$0xff]
        %v1003 = vld [vmem:[%s2 + $0x98] sm:$0xff]
        %v1004 = vld [vmem:[%s2 + $0xa0] sm:$0xff]
        %v1005 = vld [vmem:[%s2 + $0xa8] sm:$0xff]
        %v1006 = vld [vmem:[%s2 + $0xb0] sm:$0xff]
        %v1007 = vld [vmem:[%s2 + $0xb8] sm:$0xff]
        %v1008 = vld [vmem:[%s2 + $0xc0] sm:$0xff]
        %v1009 = vld [vmem:[%s2 + $0xc8] sm:$0xff]
        %v1010 = vld [vmem:[%s2 + $0xd0] sm:$0xff]
        %v1011 = vld [vmem:[%s2 + $0xd8] sm:$0xff]
        %v1012 = vld [vmem:[%s2 + $0xe0] sm:$0xff]
        %v1013 = vld [vmem:[%s2 + $0xe8] sm:$0xff]
        %v1014 = vld [vmem:[%s2 + $0xf0] sm:$0xff]
        %v1015 = vld [vmem:[%s2 + $0xf8] sm:$0xff]
        %v1016 = vld [vmem:[%s2 + $0x100] sm:$0xff]
        %v1017 = vld [vmem:[%s2 + $0x108] sm:$0x11]
        %v1018 = vpack.c.bf16 %v920, %v916
        %v1019 = vpack.c.bf16 %v921, %v917
        %v1020 = vpack.c.bf16 %v922, %v918
        %v1021 = vpack.c.bf16 %v923, %v919
        %v1022 = vpack.c.bf16 %v928, %v924
        %v1023 = vpack.c.bf16 %v929, %v925
        %v1024 = vpack.c.bf16 %v930, %v926
        %v1025 = vpack.c.bf16 %v931, %v927
        %v1026 = vpack.c.bf16 %v936, %v932
        %v1027 = vpack.c.bf16 %v937, %v933
        %v1028 = vpack.c.bf16 %v938, %v934
        %v1029 = vpack.c.bf16 %v939, %v935
        %v1030 = vpack.c.bf16 %v944, %v940
        %v1031 = vpack.c.bf16 %v945, %v941
        %v1032 = vpack.c.bf16 %v946, %v942
        %v1033 = vpack.c.bf16 %v947, %v943
        %v1034 = vpack.c.bf16 %v952, %v948
        %v1035 = vpack.c.bf16 %v953, %v949
        %v1036 = vpack.c.bf16 %v954, %v950
        %v1037 = vpack.c.bf16 %v955, %v951
        %v1038 = vpack.c.bf16 %v960, %v956
        %v1039 = vpack.c.bf16 %v961, %v957
        %v1040 = vpack.c.bf16 %v962, %v958
        %v1041 = vpack.c.bf16 %v963, %v959
        %v1042 = vpack.c.bf16 %v968, %v964
        %v1043 = vpack.c.bf16 %v969, %v965
        %v1044 = vpack.c.bf16 %v970, %v966
        %v1045 = vpack.c.bf16 %v971, %v967
        %v1046 = vpack.c.bf16 %v976, %v972
        %v1047 = vpack.c.bf16 %v977, %v973
        %v1048 = vpack.c.bf16 %v978, %v974
        %v1049 = vpack.c.bf16 %v979, %v975
        %v1050 = vpack.c.bf16 %v980, %v980
        %v1051 = vpack.c.bf16 %v981, %v981
        %v1052 = vpack.c.bf16 %v982, %v982
        %v1053 = vpack.c.bf16 %v983, %v983
        %1055 = vset.pattern.permute.xlu0 0
        %1056 = vperm.xlu0 %1055, %v381
        %v1057 = vpop.permute.xlu0 %1056
        %1060 = vset.pattern.permute.xlu0 0
        %1061 = vperm.xlu0 %1060, %v382
        %v1062 = vpop.permute.xlu0 %1061
        %1065 = vset.pattern.permute.xlu0 0
        %1066 = vperm.xlu0 %1065, %v383
        %v1067 = vpop.permute.xlu0 %1066
        %1070 = vset.pattern.permute.xlu0 0
        %1071 = vperm.xlu0 %1070, %v384
        %v1072 = vpop.permute.xlu0 %1071
        %1075 = vset.pattern.permute.xlu0 0
        %1076 = vperm.xlu0 %1075, %v385
        %v1077 = vpop.permute.xlu0 %1076
        %1080 = vset.pattern.permute.xlu0 0
        %1081 = vperm.xlu0 %1080, %v386
        %v1082 = vpop.permute.xlu0 %1081
        %1085 = vset.pattern.permute.xlu0 0
        %1086 = vperm.xlu0 %1085, %v387
        %v1087 = vpop.permute.xlu0 %1086
        %1090 = vset.pattern.permute.xlu0 0
        %1091 = vperm.xlu0 %1090, %v388
        %v1092 = vpop.permute.xlu0 %1091
        %1095 = vset.pattern.permute.xlu0 0
        %1096 = vperm.xlu0 %1095, %v389
        %v1097 = vpop.permute.xlu0 %1096
        %1100 = vset.pattern.permute.xlu0 0
        %1101 = vperm.xlu0 %1100, %v390
        %v1102 = vpop.permute.xlu0 %1101
        %1105 = vset.pattern.permute.xlu0 0
        %1106 = vperm.xlu0 %1105, %v391
        %v1107 = vpop.permute.xlu0 %1106
        %1110 = vset.pattern.permute.xlu0 0
        %1111 = vperm.xlu0 %1110, %v392
        %v1112 = vpop.permute.xlu0 %1111
        %1115 = vset.pattern.permute.xlu0 0
        %1116 = vperm.xlu0 %1115, %v393
        %v1117 = vpop.permute.xlu0 %1116
        %1120 = vset.pattern.permute.xlu0 0
        %1121 = vperm.xlu0 %1120, %v394
        %v1122 = vpop.permute.xlu0 %1121
        %1125 = vset.pattern.permute.xlu0 0
        %1126 = vperm.xlu0 %1125, %v395
        %v1127 = vpop.permute.xlu0 %1126
        %1130 = vset.pattern.permute.xlu0 0
        %1131 = vperm.xlu0 %1130, %v396
        %v1132 = vpop.permute.xlu0 %1131
        %1135 = vset.pattern.permute.xlu0 0
        %1136 = vperm.xlu0 %1135, %v397
        %v1137 = vpop.permute.xlu0 %1136
        %v1156 = vunpack.c.l.b16 %v984
        %v1157 = vunpack.c.h.b16 %v984
        %v1158 = vunpack.c.l.b16 %v985
        %v1159 = vunpack.c.h.b16 %v985
        %v1160 = vunpack.c.l.b16 %v986
        %v1161 = vunpack.c.h.b16 %v986
        %v1162 = vunpack.c.l.b16 %v987
        %v1163 = vunpack.c.h.b16 %v987
        %v1164 = vunpack.c.l.b16 %v988
        %v1165 = vunpack.c.h.b16 %v988
        %v1166 = vunpack.c.l.b16 %v989
        %v1167 = vunpack.c.h.b16 %v989
        %v1168 = vunpack.c.l.b16 %v990
        %v1169 = vunpack.c.h.b16 %v990
        %v1170 = vunpack.c.l.b16 %v991
        %v1171 = vunpack.c.h.b16 %v991
        %v1172 = vunpack.c.l.b16 %v992
        %v1173 = vunpack.c.h.b16 %v992
        %v1174 = vunpack.c.l.b16 %v993
        %v1175 = vunpack.c.h.b16 %v993
        %v1176 = vunpack.c.l.b16 %v994
        %v1177 = vunpack.c.h.b16 %v994
        %v1178 = vunpack.c.l.b16 %v995
        %v1179 = vunpack.c.h.b16 %v995
        %v1180 = vunpack.c.l.b16 %v996
        %v1181 = vunpack.c.h.b16 %v996
        %v1182 = vunpack.c.l.b16 %v997
        %v1183 = vunpack.c.h.b16 %v997
        %v1184 = vunpack.c.l.b16 %v998
        %v1185 = vunpack.c.h.b16 %v998
        %v1186 = vunpack.c.l.b16 %v999
        %v1187 = vunpack.c.h.b16 %v999
        %v1188 = vunpack.c.l.b16 %v1000
        %v1189 = vunpack.c.h.b16 %v1000
        %v1190 = vpack.c.b16 %v1158, %v1156
        %v1191 = vpack.c.b16 %v1159, %v1157
        %v1192 = vpack.c.b16 %v1162, %v1160
        %v1193 = vpack.c.b16 %v1163, %v1161
        %v1194 = vpack.c.b16 %v1166, %v1164
        %v1195 = vpack.c.b16 %v1167, %v1165
        %v1196 = vpack.c.b16 %v1170, %v1168
        %v1197 = vpack.c.b16 %v1171, %v1169
        %v1198 = vpack.c.b16 %v1174, %v1172
        %v1199 = vpack.c.b16 %v1175, %v1173
        %v1200 = vpack.c.b16 %v1178, %v1176
        %v1201 = vpack.c.b16 %v1179, %v1177
        %v1202 = vpack.c.b16 %v1182, %v1180
        %v1203 = vpack.c.b16 %v1183, %v1181
        %v1204 = vpack.c.b16 %v1186, %v1184
        %v1205 = vpack.c.b16 %v1187, %v1185
        %v1206 = vpack.c.b16 %v1188, %v1188
        %v1207 = vpack.c.b16 %v1189, %v1189
        %vm1217 = vcmask 15360
        %v1219 = vsel %vm1217, %v1191, 0
        %v1222 = vsel %vm1217, %v1193, 0
        %v1225 = vsel %vm1217, %v1195, 0
        %v1228 = vsel %vm1217, %v1197, 0
        %v1231 = vsel %vm1217, %v1199, 0
        %v1234 = vsel %vm1217, %v1201, 0
        %v1237 = vsel %vm1217, %v1203, 0
        %v1240 = vsel %vm1217, %v1205, 0
        %v1243 = vsel %vm1217, %v1207, 0
        %vm1245 = vcmask 1040384
        %v1247 = vsel %vm1245, %v1050, 0
        %v1250 = vsel %vm1245, %v1051, 0
        %v1253 = vsel %vm1245, %v1052, 0
        %v1256 = vsel %vm1245, %v1053, 0
        %1258 = vmatprep.subr.bf16.mxu0 %v1019
        %1259 = vmatpush1.bf16.msra.mxu0 %v1018
        %1260 = vmatprep.subr.bf16.mxu0 %v1023
        %1261 = vmatpush1.bf16.msra.mxu0 %v1022
        %1262 = vmatprep.subr.bf16.mxu0 %v1027
        %1263 = vmatpush1.bf16.msra.mxu0 %v1026
        %1264 = vmatprep.subr.bf16.mxu0 %v1031
        %1265 = vmatpush1.bf16.msra.mxu0 %v1030
        %1266 = vmatprep.subr.bf16.mxu0 %v1035
        %1267 = vmatpush1.bf16.msra.mxu0 %v1034
        %1268 = vmatprep.subr.bf16.mxu0 %v1039
        %1269 = vmatpush1.bf16.msra.mxu0 %v1038
        %1270 = vmatprep.subr.bf16.mxu0 %v1043
        %1271 = vmatpush1.bf16.msra.mxu0 %v1042
        %1272 = vmatprep.subr.bf16.mxu0 %v1047
        %1273 = vmatpush1.bf16.msra.mxu0 %v1046
        %1274 = vmatprep.subr.bf16.mxu0 %v1250
        %1275 = vmatpush1.bf16.msra.mxu0 %v1247
        %1276 = vmatprep.subr.bf16.mxu0 0
        %1277 = vmatpush1.bf16.msra.mxu0 0
        %1278 = vmatprep.subr.bf16.mxu0 0
        %1279 = vmatpush1.bf16.msra.mxu0 0
        %1280 = vmatprep.subr.bf16.mxu0 0
        %1281 = vmatpush1.bf16.msra.mxu0 0
        %1282 = vmatprep.subr.bf16.mxu0 0
        %1283 = vmatpush1.bf16.msra.mxu0 0
        %1284 = vmatprep.subr.bf16.mxu0 0
        %1285 = vmatpush1.bf16.msra.mxu0 0
        %1286 = vmatprep.subr.bf16.mxu0 0
        %1287 = vmatpush1.bf16.msra.mxu0 0
        %1288 = vmatprep.subr.bf16.mxu0 0
        %1289 = vmatpush1.bf16.msra.mxu0 0
        %1290 = vmatprep.mubr.bf16.mxu0 %v1219
        %1291 = vmatmul.mubr.bf16.gmra.mrb[0].mxu0 %v1190
        %v1292 = vpop.f32.mrb[0].mxu0
        %v1293 = vadd.f32 %v1057, %v1292
        %v1294 = vpop.f32.mrb[0].mxu0
        %v1295 = vadd.f32 %v1057, %v1294
        %v1296 = vpop.f32.mrb[0].mxu0
        %v1297 = vadd.f32 %v1062, %v1296
        %v1298 = vpop.f32.mrb[0].mxu0
        %v1299 = vadd.f32 %v1062, %v1298
        %1300 = vmatprep.mubr.bf16.mxu0 %v1222
        %1301 = vmatmul.mubr.bf16.gmra.mrb[0].mxu0 %v1192
        %v1302 = vpop.f32.mrb[0].mxu0
        %v1303 = vadd.f32 %v1067, %v1302
        %v1304 = vpop.f32.mrb[0].mxu0
        %v1305 = vadd.f32 %v1067, %v1304
        %v1306 = vpop.f32.mrb[0].mxu0
        %v1307 = vadd.f32 %v1072, %v1306
        %v1308 = vpop.f32.mrb[0].mxu0
        %v1309 = vadd.f32 %v1072, %v1308
        %1310 = vmatprep.mubr.bf16.mxu0 %v1225
        %1311 = vmatmul.mubr.bf16.gmra.mrb[0].mxu0 %v1194
        %v1312 = vpop.f32.mrb[0].mxu0
        %v1313 = vadd.f32 %v1077, %v1312
        %v1314 = vpop.f32.mrb[0].mxu0
        %v1315 = vadd.f32 %v1077, %v1314
        %v1316 = vpop.f32.mrb[0].mxu0
        %v1317 = vadd.f32 %v1082, %v1316
        %v1318 = vpop.f32.mrb[0].mxu0
        %v1319 = vadd.f32 %v1082, %v1318
        %1320 = vmatprep.mubr.bf16.mxu0 %v1228
        %1321 = vmatmul.mubr.bf16.gmra.mrb[0].mxu0 %v1196
        %v1322 = vpop.f32.mrb[0].mxu0
        %v1323 = vadd.f32 %v1087, %v1322
        %v1324 = vpop.f32.mrb[0].mxu0
        %v1325 = vadd.f32 %v1087, %v1324
        %v1326 = vpop.f32.mrb[0].mxu0
        %v1327 = vadd.f32 %v1092, %v1326
        %v1328 = vpop.f32.mrb[0].mxu0
        %v1329 = vadd.f32 %v1092, %v1328
        %1330 = vmatprep.mubr.bf16.mxu0 %v1231
        %1331 = vmatmul.mubr.bf16.gmra.mrb[0].mxu0 %v1198
        %v1332 = vpop.f32.mrb[0].mxu0
        %v1333 = vadd.f32 %v1097, %v1332
        %v1334 = vpop.f32.mrb[0].mxu0
        %v1335 = vadd.f32 %v1097, %v1334
        %v1336 = vpop.f32.mrb[0].mxu0
        %v1337 = vadd.f32 %v1102, %v1336
        %v1338 = vpop.f32.mrb[0].mxu0
        %v1339 = vadd.f32 %v1102, %v1338
        %1340 = vmatprep.mubr.bf16.mxu0 %v1234
        %1341 = vmatmul.mubr.bf16.gmra.mrb[0].mxu0 %v1200
        %v1342 = vpop.f32.mrb[0].mxu0
        %v1343 = vadd.f32 %v1107, %v1342
        %v1344 = vpop.f32.mrb[0].mxu0
        %v1345 = vadd.f32 %v1107, %v1344
        %v1346 = vpop.f32.mrb[0].mxu0
        %v1347 = vadd.f32 %v1112, %v1346
        %v1348 = vpop.f32.mrb[0].mxu0
        %v1349 = vadd.f32 %v1112, %v1348
        %1350 = vmatprep.mubr.bf16.mxu0 %v1237
        %1351 = vmatmul.mubr.bf16.gmra.mrb[0].mxu0 %v1202
        %v1352 = vpop.f32.mrb[0].mxu0
        %v1353 = vadd.f32 %v1117, %v1352
        %v1354 = vpop.f32.mrb[0].mxu0
        %v1355 = vadd.f32 %v1117, %v1354
        %v1356 = vpop.f32.mrb[0].mxu0
        %v1357 = vadd.f32 %v1122, %v1356
        %v1358 = vpop.f32.mrb[0].mxu0
        %v1359 = vadd.f32 %v1122, %v1358
        %1360 = vmatprep.mubr.bf16.mxu0 %v1240
        %1361 = vmatmul.mubr.bf16.gmra.mrb[0].mxu0 %v1204
        %v1362 = vpop.f32.mrb[0].mxu0
        %v1363 = vadd.f32 %v1127, %v1362
        %v1364 = vpop.f32.mrb[0].mxu0
        %v1365 = vadd.f32 %v1127, %v1364
        %v1366 = vpop.f32.mrb[0].mxu0
        %v1367 = vadd.f32 %v1132, %v1366
        %v1368 = vpop.f32.mrb[0].mxu0
        %v1369 = vadd.f32 %v1132, %v1368
        %1370 = vmatprep.mubr.bf16.mxu0 %v1243
        %1371 = vmatmul.mubr.bf16.gmra.mrb[0].mxu0 %v1206
        %v1372 = vpop.f32.mrb[0].mxu0
        %v1373 = vadd.f32 %v1137, %v1372
        %v1374 = vpop.f32.mrb[0].mxu0
        %v1375 = vadd.f32 %v1137, %v1374
        %v1376 = vpop.f32.mrb[0].mxu0
        %v1377 = vpop.f32.mrb[0].mxu0
        %1378 = vdwg.mxu0
        %1379 = vmatprep.subr.bf16.mxu0 %v1021
        %1380 = vmatpush1.bf16.msra.mxu0 %v1020
        %1381 = vmatprep.subr.bf16.mxu0 %v1025
        %1382 = vmatpush1.bf16.msra.mxu0 %v1024
        %1383 = vmatprep.subr.bf16.mxu0 %v1029
        %1384 = vmatpush1.bf16.msra.mxu0 %v1028
        %1385 = vmatprep.subr.bf16.mxu0 %v1033
        %1386 = vmatpush1.bf16.msra.mxu0 %v1032
        %1387 = vmatprep.subr.bf16.mxu0 %v1037
        %1388 = vmatpush1.bf16.msra.mxu0 %v1036
        %1389 = vmatprep.subr.bf16.mxu0 %v1041
        %1390 = vmatpush1.bf16.msra.mxu0 %v1040
        %1391 = vmatprep.subr.bf16.mxu0 %v1045
        %1392 = vmatpush1.bf16.msra.mxu0 %v1044
        %1393 = vmatprep.subr.bf16.mxu0 %v1049
        %1394 = vmatpush1.bf16.msra.mxu0 %v1048
        %1395 = vmatprep.subr.bf16.mxu0 %v1256
        %1396 = vmatpush1.bf16.msra.mxu0 %v1253
        %1397 = vmatprep.subr.bf16.mxu0 0
        %1398 = vmatpush1.bf16.msra.mxu0 0
        %1399 = vmatprep.subr.bf16.mxu0 0
        %1400 = vmatpush1.bf16.msra.mxu0 0
        %1401 = vmatprep.subr.bf16.mxu0 0
        %1402 = vmatpush1.bf16.msra.mxu0 0
        %1403 = vmatprep.subr.bf16.mxu0 0
        %1404 = vmatpush1.bf16.msra.mxu0 0
        %1405 = vmatprep.subr.bf16.mxu0 0
        %1406 = vmatpush1.bf16.msra.mxu0 0
        %1407 = vmatprep.subr.bf16.mxu0 0
        %1408 = vmatpush1.bf16.msra.mxu0 0
        %1409 = vmatprep.subr.bf16.mxu0 0
        %1410 = vmatpush1.bf16.msra.mxu0 0
        %1411 = vmatprep.mubr.bf16.mxu0 %v1219
        %1412 = vmatmul.mubr.bf16.gmra.mrb[0].mxu0 %v1190
        %v1413 = vpop.f32.mrb[0].mxu0
        %v1414 = vadd.f32 %v1057, %v1413
        %v1415 = vpop.f32.mrb[0].mxu0
        %v1416 = vadd.f32 %v1057, %v1415
        %v1417 = vpop.f32.mrb[0].mxu0
        %v1418 = vadd.f32 %v1062, %v1417
        %v1419 = vpop.f32.mrb[0].mxu0
        %v1420 = vadd.f32 %v1062, %v1419
        %1421 = vmatprep.mubr.bf16.mxu0 %v1222
        %1422 = vmatmul.mubr.bf16.gmra.mrb[0].mxu0 %v1192
        %v1423 = vpop.f32.mrb[0].mxu0
        %v1424 = vadd.f32 %v1067, %v1423
        %v1425 = vpop.f32.mrb[0].mxu0
        %v1426 = vadd.f32 %v1067, %v1425
        %v1427 = vpop.f32.mrb[0].mxu0
        %v1428 = vadd.f32 %v1072, %v1427
        %v1429 = vpop.f32.mrb[0].mxu0
        %v1430 = vadd.f32 %v1072, %v1429
        %1431 = vmatprep.mubr.bf16.mxu0 %v1225
        %1432 = vmatmul.mubr.bf16.gmra.mrb[0].mxu0 %v1194
        %v1433 = vpop.f32.mrb[0].mxu0
        %v1434 = vadd.f32 %v1077, %v1433
        %v1435 = vpop.f32.mrb[0].mxu0
        %v1436 = vadd.f32 %v1077, %v1435
        %v1437 = vpop.f32.mrb[0].mxu0
        %v1438 = vadd.f32 %v1082, %v1437
        %v1439 = vpop.f32.mrb[0].mxu0
        %v1440 = vadd.f32 %v1082, %v1439
        %1441 = vmatprep.mubr.bf16.mxu0 %v1228
        %1442 = vmatmul.mubr.bf16.gmra.mrb[0].mxu0 %v1196
        %v1443 = vpop.f32.mrb[0].mxu0
        %v1444 = vadd.f32 %v1087, %v1443
        %v1445 = vpop.f32.mrb[0].mxu0
        %v1446 = vadd.f32 %v1087, %v1445
        %v1447 = vpop.f32.mrb[0].mxu0
        %v1448 = vadd.f32 %v1092, %v1447
        %v1449 = vpop.f32.mrb[0].mxu0
        %v1450 = vadd.f32 %v1092, %v1449
        %1451 = vmatprep.mubr.bf16.mxu0 %v1231
        %1452 = vmatmul.mubr.bf16.gmra.mrb[0].mxu0 %v1198
        %v1453 = vpop.f32.mrb[0].mxu0
        %v1454 = vadd.f32 %v1097, %v1453
        %v1455 = vpop.f32.mrb[0].mxu0
        %v1456 = vadd.f32 %v1097, %v1455
        %v1457 = vpop.f32.mrb[0].mxu0
        %v1458 = vadd.f32 %v1102, %v1457
        %v1459 = vpop.f32.mrb[0].mxu0
        %v1460 = vadd.f32 %v1102, %v1459
        %1461 = vmatprep.mubr.bf16.mxu0 %v1234
        %1462 = vmatmul.mubr.bf16.gmra.mrb[0].mxu0 %v1200
        %v1463 = vpop.f32.mrb[0].mxu0
        %v1464 = vadd.f32 %v1107, %v1463
        %v1465 = vpop.f32.mrb[0].mxu0
        %v1466 = vadd.f32 %v1107, %v1465
        %v1467 = vpop.f32.mrb[0].mxu0
        %v1468 = vadd.f32 %v1112, %v1467
        %v1469 = vpop.f32.mrb[0].mxu0
        %v1470 = vadd.f32 %v1112, %v1469
        %1471 = vmatprep.mubr.bf16.mxu0 %v1237
        %1472 = vmatmul.mubr.bf16.gmra.mrb[0].mxu0 %v1202
        %v1473 = vpop.f32.mrb[0].mxu0
        %v1474 = vadd.f32 %v1117, %v1473
        %v1475 = vpop.f32.mrb[0].mxu0
        %v1476 = vadd.f32 %v1117, %v1475
        %v1477 = vpop.f32.mrb[0].mxu0
        %v1478 = vadd.f32 %v1122, %v1477
        %v1479 = vpop.f32.mrb[0].mxu0
        %v1480 = vadd.f32 %v1122, %v1479
        %1481 = vmatprep.mubr.bf16.mxu0 %v1240
        %1482 = vmatmul.mubr.bf16.gmra.mrb[0].mxu0 %v1204
        %v1483 = vpop.f32.mrb[0].mxu0
        %v1484 = vadd.f32 %v1127, %v1483
        %v1485 = vpop.f32.mrb[0].mxu0
        %v1486 = vadd.f32 %v1127, %v1485
        %v1487 = vpop.f32.mrb[0].mxu0
        %v1488 = vadd.f32 %v1132, %v1487
        %v1489 = vpop.f32.mrb[0].mxu0
        %v1490 = vadd.f32 %v1132, %v1489
        %1491 = vmatprep.mubr.bf16.mxu0 %v1243
        %1492 = vmatmul.mubr.bf16.gmra.mrb[0].mxu0 %v1206
        %v1493 = vpop.f32.mrb[0].mxu0
        %v1494 = vadd.f32 %v1137, %v1493
        %v1495 = vpop.f32.mrb[0].mxu0
        %v1496 = vadd.f32 %v1137, %v1495
        %v1497 = vpop.f32.mrb[0].mxu0
        %v1498 = vpop.f32.mrb[0].mxu0
        %1499 = vdwg.mxu0
        %v1500 = vtanh.pop %v1293
        %v1501 = vtanh.pop %v1295
        %v1502 = vtanh.pop %v1414
        %v1503 = vtanh.pop %v1416
        %v1504 = vtanh.pop %v1297
        %v1505 = vtanh.pop %v1299
        %v1506 = vtanh.pop %v1418
        %v1507 = vtanh.pop %v1420
        %v1508 = vtanh.pop %v1303
        %v1509 = vtanh.pop %v1305
        %v1510 = vtanh.pop %v1424
        %v1511 = vtanh.pop %v1426
        %v1512 = vtanh.pop %v1307
        %v1513 = vtanh.pop %v1309
        %v1514 = vtanh.pop %v1428
        %v1515 = vtanh.pop %v1430
        %v1516 = vtanh.pop %v1313
        %v1517 = vtanh.pop %v1315
        %v1518 = vtanh.pop %v1434
        %v1519 = vtanh.pop %v1436
        %v1520 = vtanh.pop %v1317
        %v1521 = vtanh.pop %v1319
        %v1522 = vtanh.pop %v1438
        %v1523 = vtanh.pop %v1440
        %v1524 = vtanh.pop %v1323
        %v1525 = vtanh.pop %v1325
        %v1526 = vtanh.pop %v1444
        %v1527 = vtanh.pop %v1446
        %v1528 = vtanh.pop %v1327
        %v1529 = vtanh.pop %v1329
        %v1530 = vtanh.pop %v1448
        %v1531 = vtanh.pop %v1450
        %v1532 = vtanh.pop %v1333
        %v1533 = vtanh.pop %v1335
        %v1534 = vtanh.pop %v1454
        %v1535 = vtanh.pop %v1456
        %v1536 = vtanh.pop %v1337
        %v1537 = vtanh.pop %v1339
        %v1538 = vtanh.pop %v1458
        %v1539 = vtanh.pop %v1460
        %v1540 = vtanh.pop %v1343
        %v1541 = vtanh.pop %v1345
        %v1542 = vtanh.pop %v1464
        %v1543 = vtanh.pop %v1466
        %v1544 = vtanh.pop %v1347
        %v1545 = vtanh.pop %v1349
        %v1546 = vtanh.pop %v1468
        %v1547 = vtanh.pop %v1470
        %v1548 = vtanh.pop %v1353
        %v1549 = vtanh.pop %v1355
        %v1550 = vtanh.pop %v1474
        %v1551 = vtanh.pop %v1476
        %v1552 = vtanh.pop %v1357
        %v1553 = vtanh.pop %v1359
        %v1554 = vtanh.pop %v1478
        %v1555 = vtanh.pop %v1480
        %v1556 = vtanh.pop %v1363
        %v1557 = vtanh.pop %v1365
        %v1558 = vtanh.pop %v1484
        %v1559 = vtanh.pop %v1486
        %v1560 = vtanh.pop %v1367
        %v1561 = vtanh.pop %v1369
        %v1562 = vtanh.pop %v1488
        %v1563 = vtanh.pop %v1490
        %v1564 = vtanh.pop %v1373
        %v1565 = vtanh.pop %v1375
        %v1566 = vtanh.pop %v1494
        %v1567 = vtanh.pop %v1496
        %v1568 = vpack.c.bf16 %v1504, %v1500
        %v1569 = vpack.c.bf16 %v1505, %v1501
        %v1570 = vpack.c.bf16 %v1506, %v1502
        %v1571 = vpack.c.bf16 %v1507, %v1503
        %v1572 = vpack.c.bf16 %v1512, %v1508
        %v1573 = vpack.c.bf16 %v1513, %v1509
        %v1574 = vpack.c.bf16 %v1514, %v1510
        %v1575 = vpack.c.bf16 %v1515, %v1511
        %v1576 = vpack.c.bf16 %v1520, %v1516
        %v1577 = vpack.c.bf16 %v1521, %v1517
        %v1578 = vpack.c.bf16 %v1522, %v1518
        %v1579 = vpack.c.bf16 %v1523, %v1519
        %v1580 = vpack.c.bf16 %v1528, %v1524
        %v1581 = vpack.c.bf16 %v1529, %v1525
        %v1582 = vpack.c.bf16 %v1530, %v1526
        %v1583 = vpack.c.bf16 %v1531, %v1527
        %v1584 = vpack.c.bf16 %v1536, %v1532
        %v1585 = vpack.c.bf16 %v1537, %v1533
        %v1586 = vpack.c.bf16 %v1538, %v1534
        %v1587 = vpack.c.bf16 %v1539, %v1535
        %v1588 = vpack.c.bf16 %v1544, %v1540
        %v1589 = vpack.c.bf16 %v1545, %v1541
        %v1590 = vpack.c.bf16 %v1546, %v1542
        %v1591 = vpack.c.bf16 %v1547, %v1543
        %v1592 = vpack.c.bf16 %v1552, %v1548
        %v1593 = vpack.c.bf16 %v1553, %v1549
        %v1594 = vpack.c.bf16 %v1554, %v1550
        %v1595 = vpack.c.bf16 %v1555, %v1551
        %v1596 = vpack.c.bf16 %v1560, %v1556
        %v1597 = vpack.c.bf16 %v1561, %v1557
        %v1598 = vpack.c.bf16 %v1562, %v1558
        %v1599 = vpack.c.bf16 %v1563, %v1559
        %v1600 = vpack.c.bf16 %v1564, %v1564
        %v1601 = vpack.c.bf16 %v1565, %v1565
        %v1602 = vpack.c.bf16 %v1566, %v1566
        %v1603 = vpack.c.bf16 %v1567, %v1567
        %1605 = vset.pattern.permute.xlu0 0
        %1606 = vperm.xlu0 %1605, %v398
        %v1607 = vpop.permute.xlu0 %1606
        %1610 = vset.pattern.permute.xlu0 0
        %1611 = vperm.xlu0 %1610, %v399
        %v1612 = vpop.permute.xlu0 %1611
        %1615 = vset.pattern.permute.xlu0 0
        %1616 = vperm.xlu0 %1615, %v400
        %v1617 = vpop.permute.xlu0 %1616
        %1620 = vset.pattern.permute.xlu0 0
        %1621 = vperm.xlu0 %1620, %v401
        %v1622 = vpop.permute.xlu0 %1621
        %1625 = vset.pattern.permute.xlu0 0
        %1626 = vperm.xlu0 %1625, %v402
        %v1627 = vpop.permute.xlu0 %1626
        %1630 = vset.pattern.permute.xlu0 0
        %1631 = vperm.xlu0 %1630, %v403
        %v1632 = vpop.permute.xlu0 %1631
        %1635 = vset.pattern.permute.xlu0 0
        %1636 = vperm.xlu0 %1635, %v404
        %v1637 = vpop.permute.xlu0 %1636
        %1640 = vset.pattern.permute.xlu0 0
        %1641 = vperm.xlu0 %1640, %v405
        %v1642 = vpop.permute.xlu0 %1641
        %1645 = vset.pattern.permute.xlu0 0
        %1646 = vperm.xlu0 %1645, %v406
        %v1647 = vpop.permute.xlu0 %1646
        %1650 = vset.pattern.permute.xlu0 0
        %1651 = vperm.xlu0 %1650, %v407
        %v1652 = vpop.permute.xlu0 %1651
        %1655 = vset.pattern.permute.xlu0 0
        %1656 = vperm.xlu0 %1655, %v408
        %v1657 = vpop.permute.xlu0 %1656
        %1660 = vset.pattern.permute.xlu0 0
        %1661 = vperm.xlu0 %1660, %v409
        %v1662 = vpop.permute.xlu0 %1661
        %1665 = vset.pattern.permute.xlu0 0
        %1666 = vperm.xlu0 %1665, %v410
        %v1667 = vpop.permute.xlu0 %1666
        %1670 = vset.pattern.permute.xlu0 0
        %1671 = vperm.xlu0 %1670, %v411
        %v1672 = vpop.permute.xlu0 %1671
        %1675 = vset.pattern.permute.xlu0 0
        %1676 = vperm.xlu0 %1675, %v412
        %v1677 = vpop.permute.xlu0 %1676
        %1680 = vset.pattern.permute.xlu0 0
        %1681 = vperm.xlu0 %1680, %v413
        %v1682 = vpop.permute.xlu0 %1681
        %1685 = vset.pattern.permute.xlu0 0
        %1686 = vperm.xlu0 %1685, %v414
        %v1687 = vpop.permute.xlu0 %1686
        %v1706 = vunpack.c.l.b16 %v1001
        %v1707 = vunpack.c.h.b16 %v1001
        %v1708 = vunpack.c.l.b16 %v1002
        %v1709 = vunpack.c.h.b16 %v1002
        %v1710 = vunpack.c.l.b16 %v1003
        %v1711 = vunpack.c.h.b16 %v1003
        %v1712 = vunpack.c.l.b16 %v1004
        %v1713 = vunpack.c.h.b16 %v1004
        %v1714 = vunpack.c.l.b16 %v1005
        %v1715 = vunpack.c.h.b16 %v1005
        %v1716 = vunpack.c.l.b16 %v1006
        %v1717 = vunpack.c.h.b16 %v1006
        %v1718 = vunpack.c.l.b16 %v1007
        %v1719 = vunpack.c.h.b16 %v1007
        %v1720 = vunpack.c.l.b16 %v1008
        %v1721 = vunpack.c.h.b16 %v1008
        %v1722 = vunpack.c.l.b16 %v1009
        %v1723 = vunpack.c.h.b16 %v1009
        %v1724 = vunpack.c.l.b16 %v1010
        %v1725 = vunpack.c.h.b16 %v1010
        %v1726 = vunpack.c.l.b16 %v1011
        %v1727 = vunpack.c.h.b16 %v1011
        %v1728 = vunpack.c.l.b16 %v1012
        %v1729 = vunpack.c.h.b16 %v1012
        %v1730 = vunpack.c.l.b16 %v1013
        %v1731 = vunpack.c.h.b16 %v1013
        %v1732 = vunpack.c.l.b16 %v1014
        %v1733 = vunpack.c.h.b16 %v1014
        %v1734 = vunpack.c.l.b16 %v1015
        %v1735 = vunpack.c.h.b16 %v1015
        %v1736 = vunpack.c.l.b16 %v1016
        %v1737 = vunpack.c.h.b16 %v1016
        %v1738 = vunpack.c.l.b16 %v1017
        %v1739 = vunpack.c.h.b16 %v1017
        %v1740 = vpack.c.b16 %v1708, %v1706
        %v1741 = vpack.c.b16 %v1709, %v1707
        %v1742 = vpack.c.b16 %v1712, %v1710
        %v1743 = vpack.c.b16 %v1713, %v1711
        %v1744 = vpack.c.b16 %v1716, %v1714
        %v1745 = vpack.c.b16 %v1717, %v1715
        %v1746 = vpack.c.b16 %v1720, %v1718
        %v1747 = vpack.c.b16 %v1721, %v1719
        %v1748 = vpack.c.b16 %v1724, %v1722
        %v1749 = vpack.c.b16 %v1725, %v1723
        %v1750 = vpack.c.b16 %v1728, %v1726
        %v1751 = vpack.c.b16 %v1729, %v1727
        %v1752 = vpack.c.b16 %v1732, %v1730
        %v1753 = vpack.c.b16 %v1733, %v1731
        %v1754 = vpack.c.b16 %v1736, %v1734
        %v1755 = vpack.c.b16 %v1737, %v1735
        %v1756 = vpack.c.b16 %v1738, %v1738
        %v1757 = vpack.c.b16 %v1739, %v1739
        %v1768 = vsel %vm1217, %v1741, 0
        %v1771 = vsel %vm1217, %v1743, 0
        %v1774 = vsel %vm1217, %v1745, 0
        %v1777 = vsel %vm1217, %v1747, 0
        %v1780 = vsel %vm1217, %v1749, 0
        %v1783 = vsel %vm1217, %v1751, 0
        %v1786 = vsel %vm1217, %v1753, 0
        %v1789 = vsel %vm1217, %v1755, 0
        %v1792 = vsel %vm1217, %v1757, 0
        %v1795 = vsel %vm1245, %v1600, 0
        %v1798 = vsel %vm1245, %v1601, 0
        %v1801 = vsel %vm1245, %v1602, 0
        %v1804 = vsel %vm1245, %v1603, 0
        %1806 = vmatprep.subr.bf16.mxu0 %v1569
        %1807 = vmatpush1.bf16.msra.mxu0 %v1568
        %1808 = vmatprep.subr.bf16.mxu0 %v1573
        %1809 = vmatpush1.bf16.msra.mxu0 %v1572
        %1810 = vmatprep.subr.bf16.mxu0 %v1577
        %1811 = vmatpush1.bf16.msra.mxu0 %v1576
        %1812 = vmatprep.subr.bf16.mxu0 %v1581
        %1813 = vmatpush1.bf16.msra.mxu0 %v1580
        %1814 = vmatprep.subr.bf16.mxu0 %v1585
        %1815 = vmatpush1.bf16.msra.mxu0 %v1584
        %1816 = vmatprep.subr.bf16.mxu0 %v1589
        %1817 = vmatpush1.bf16.msra.mxu0 %v1588
        %1818 = vmatprep.subr.bf16.mxu0 %v1593
        %1819 = vmatpush1.bf16.msra.mxu0 %v1592
        %1820 = vmatprep.subr.bf16.mxu0 %v1597
        %1821 = vmatpush1.bf16.msra.mxu0 %v1596
        %1822 = vmatprep.subr.bf16.mxu0 %v1798
        %1823 = vmatpush1.bf16.msra.mxu0 %v1795
        %1824 = vmatprep.subr.bf16.mxu0 0
        %1825 = vmatpush1.bf16.msra.mxu0 0
        %1826 = vmatprep.subr.bf16.mxu0 0
        %1827 = vmatpush1.bf16.msra.mxu0 0
        %1828 = vmatprep.subr.bf16.mxu0 0
        %1829 = vmatpush1.bf16.msra.mxu0 0
        %1830 = vmatprep.subr.bf16.mxu0 0
        %1831 = vmatpush1.bf16.msra.mxu0 0
        %1832 = vmatprep.subr.bf16.mxu0 0
        %1833 = vmatpush1.bf16.msra.mxu0 0
        %1834 = vmatprep.subr.bf16.mxu0 0
        %1835 = vmatpush1.bf16.msra.mxu0 0
        %1836 = vmatprep.subr.bf16.mxu0 0
        %1837 = vmatpush1.bf16.msra.mxu0 0
        %1838 = vmatprep.mubr.bf16.mxu0 %v1768
        %1839 = vmatmul.mubr.bf16.gmra.mrb[0].mxu0 %v1740
        %v1840 = vpop.f32.mrb[0].mxu0
        %v1841 = vadd.f32 %v1607, %v1840
        %v1842 = vpop.f32.mrb[0].mxu0
        %v1843 = vadd.f32 %v1607, %v1842
        %v1844 = vpop.f32.mrb[0].mxu0
        %v1845 = vadd.f32 %v1612, %v1844
        %v1846 = vpop.f32.mrb[0].mxu0
        %v1847 = vadd.f32 %v1612, %v1846
        %1848 = vmatprep.mubr.bf16.mxu0 %v1771
        %1849 = vmatmul.mubr.bf16.gmra.mrb[0].mxu0 %v1742
        %v1850 = vpop.f32.mrb[0].mxu0
        %v1851 = vadd.f32 %v1617, %v1850
        %v1852 = vpop.f32.mrb[0].mxu0
        %v1853 = vadd.f32 %v1617, %v1852
        %v1854 = vpop.f32.mrb[0].mxu0
        %v1855 = vadd.f32 %v1622, %v1854
        %v1856 = vpop.f32.mrb[0].mxu0
        %v1857 = vadd.f32 %v1622, %v1856
        %1858 = vmatprep.mubr.bf16.mxu0 %v1774
        %1859 = vmatmul.mubr.bf16.gmra.mrb[0].mxu0 %v1744
        %v1860 = vpop.f32.mrb[0].mxu0
        %v1861 = vadd.f32 %v1627, %v1860
        %v1862 = vpop.f32.mrb[0].mxu0
        %v1863 = vadd.f32 %v1627, %v1862
        %v1864 = vpop.f32.mrb[0].mxu0
        %v1865 = vadd.f32 %v1632, %v1864
        %v1866 = vpop.f32.mrb[0].mxu0
        %v1867 = vadd.f32 %v1632, %v1866
        %1868 = vmatprep.mubr.bf16.mxu0 %v1777
        %1869 = vmatmul.mubr.bf16.gmra.mrb[0].mxu0 %v1746
        %v1870 = vpop.f32.mrb[0].mxu0
        %v1871 = vadd.f32 %v1637, %v1870
        %v1872 = vpop.f32.mrb[0].mxu0
        %v1873 = vadd.f32 %v1637, %v1872
        %v1874 = vpop.f32.mrb[0].mxu0
        %v1875 = vadd.f32 %v1642, %v1874
        %v1876 = vpop.f32.mrb[0].mxu0
        %v1877 = vadd.f32 %v1642, %v1876
        %1878 = vmatprep.mubr.bf16.mxu0 %v1780
        %1879 = vmatmul.mubr.bf16.gmra.mrb[0].mxu0 %v1748
        %v1880 = vpop.f32.mrb[0].mxu0
        %v1881 = vadd.f32 %v1647, %v1880
        %v1882 = vpop.f32.mrb[0].mxu0
        %v1883 = vadd.f32 %v1647, %v1882
        %v1884 = vpop.f32.mrb[0].mxu0
        %v1885 = vadd.f32 %v1652, %v1884
        %v1886 = vpop.f32.mrb[0].mxu0
        %v1887 = vadd.f32 %v1652, %v1886
        %1888 = vmatprep.mubr.bf16.mxu0 %v1783
        %1889 = vmatmul.mubr.bf16.gmra.mrb[0].mxu0 %v1750
        %v1890 = vpop.f32.mrb[0].mxu0
        %v1891 = vadd.f32 %v1657, %v1890
        %v1892 = vpop.f32.mrb[0].mxu0
        %v1893 = vadd.f32 %v1657, %v1892
        %v1894 = vpop.f32.mrb[0].mxu0
        %v1895 = vadd.f32 %v1662, %v1894
        %v1896 = vpop.f32.mrb[0].mxu0
        %v1897 = vadd.f32 %v1662, %v1896
        %1898 = vmatprep.mubr.bf16.mxu0 %v1786
        %1899 = vmatmul.mubr.bf16.gmra.mrb[0].mxu0 %v1752
        %v1900 = vpop.f32.mrb[0].mxu0
        %v1901 = vadd.f32 %v1667, %v1900
        %v1902 = vpop.f32.mrb[0].mxu0
        %v1903 = vadd.f32 %v1667, %v1902
        %v1904 = vpop.f32.mrb[0].mxu0
        %v1905 = vadd.f32 %v1672, %v1904
        %v1906 = vpop.f32.mrb[0].mxu0
        %v1907 = vadd.f32 %v1672, %v1906
        %1908 = vmatprep.mubr.bf16.mxu0 %v1789
        %1909 = vmatmul.mubr.bf16.gmra.mrb[0].mxu0 %v1754
        %v1910 = vpop.f32.mrb[0].mxu0
        %v1911 = vadd.f32 %v1677, %v1910
        %v1912 = vpop.f32.mrb[0].mxu0
        %v1913 = vadd.f32 %v1677, %v1912
        %v1914 = vpop.f32.mrb[0].mxu0
        %v1915 = vadd.f32 %v1682, %v1914
        %v1916 = vpop.f32.mrb[0].mxu0
        %v1917 = vadd.f32 %v1682, %v1916
        %1918 = vmatprep.mubr.bf16.mxu0 %v1792
        %1919 = vmatmul.mubr.bf16.gmra.mrb[0].mxu0 %v1756
        %v1920 = vpop.f32.mrb[0].mxu0
        %v1921 = vadd.f32 %v1687, %v1920
        %v1922 = vpop.f32.mrb[0].mxu0
        %v1923 = vadd.f32 %v1687, %v1922
        %v1924 = vpop.f32.mrb[0].mxu0
        %v1925 = vpop.f32.mrb[0].mxu0
        %1926 = vdwg.mxu0
        %1927 = vmatprep.subr.bf16.mxu0 %v1571
        %1928 = vmatpush1.bf16.msra.mxu0 %v1570
        %1929 = vmatprep.subr.bf16.mxu0 %v1575
        %1930 = vmatpush1.bf16.msra.mxu0 %v1574
        %1931 = vmatprep.subr.bf16.mxu0 %v1579
        %1932 = vmatpush1.bf16.msra.mxu0 %v1578
        %1933 = vmatprep.subr.bf16.mxu0 %v1583
        %1934 = vmatpush1.bf16.msra.mxu0 %v1582
        %1935 = vmatprep.subr.bf16.mxu0 %v1587
        %1936 = vmatpush1.bf16.msra.mxu0 %v1586
        %1937 = vmatprep.subr.bf16.mxu0 %v1591
        %1938 = vmatpush1.bf16.msra.mxu0 %v1590
        %1939 = vmatprep.subr.bf16.mxu0 %v1595
        %1940 = vmatpush1.bf16.msra.mxu0 %v1594
        %1941 = vmatprep.subr.bf16.mxu0 %v1599
        %1942 = vmatpush1.bf16.msra.mxu0 %v1598
        %1943 = vmatprep.subr.bf16.mxu0 %v1804
        %1944 = vmatpush1.bf16.msra.mxu0 %v1801
        %1945 = vmatprep.subr.bf16.mxu0 0
        %1946 = vmatpush1.bf16.msra.mxu0 0
        %1947 = vmatprep.subr.bf16.mxu0 0
        %1948 = vmatpush1.bf16.msra.mxu0 0
        %1949 = vmatprep.subr.bf16.mxu0 0
        %1950 = vmatpush1.bf16.msra.mxu0 0
        %1951 = vmatprep.subr.bf16.mxu0 0
        %1952 = vmatpush1.bf16.msra.mxu0 0
        %1953 = vmatprep.subr.bf16.mxu0 0
        %1954 = vmatpush1.bf16.msra.mxu0 0
        %1955 = vmatprep.subr.bf16.mxu0 0
        %1956 = vmatpush1.bf16.msra.mxu0 0
        %1957 = vmatprep.subr.bf16.mxu0 0
        %1958 = vmatpush1.bf16.msra.mxu0 0
        %1959 = vmatprep.mubr.bf16.mxu0 %v1768
        %1960 = vmatmul.mubr.bf16.gmra.mrb[0].mxu0 %v1740
        %v1961 = vpop.f32.mrb[0].mxu0
        %v1962 = vadd.f32 %v1607, %v1961
        %v1963 = vpop.f32.mrb[0].mxu0
        %v1964 = vadd.f32 %v1607, %v1963
        %v1965 = vpop.f32.mrb[0].mxu0
        %v1966 = vadd.f32 %v1612, %v1965
        %v1967 = vpop.f32.mrb[0].mxu0
        %v1968 = vadd.f32 %v1612, %v1967
        %1969 = vmatprep.mubr.bf16.mxu0 %v1771
        %1970 = vmatmul.mubr.bf16.gmra.mrb[0].mxu0 %v1742
        %v1971 = vpop.f32.mrb[0].mxu0
        %v1972 = vadd.f32 %v1617, %v1971
        %v1973 = vpop.f32.mrb[0].mxu0
        %v1974 = vadd.f32 %v1617, %v1973
        %v1975 = vpop.f32.mrb[0].mxu0
        %v1976 = vadd.f32 %v1622, %v1975
        %v1977 = vpop.f32.mrb[0].mxu0
        %v1978 = vadd.f32 %v1622, %v1977
        %1979 = vmatprep.mubr.bf16.mxu0 %v1774
        %1980 = vmatmul.mubr.bf16.gmra.mrb[0].mxu0 %v1744
        %v1981 = vpop.f32.mrb[0].mxu0
        %v1982 = vadd.f32 %v1627, %v1981
        %v1983 = vpop.f32.mrb[0].mxu0
        %v1984 = vadd.f32 %v1627, %v1983
        %v1985 = vpop.f32.mrb[0].mxu0
        %v1986 = vadd.f32 %v1632, %v1985
        %v1987 = vpop.f32.mrb[0].mxu0
        %v1988 = vadd.f32 %v1632, %v1987
        %1989 = vmatprep.mubr.bf16.mxu0 %v1777
        %1990 = vmatmul.mubr.bf16.gmra.mrb[0].mxu0 %v1746
        %v1991 = vpop.f32.mrb[0].mxu0
        %v1992 = vadd.f32 %v1637, %v1991
        %v1993 = vpop.f32.mrb[0].mxu0
        %v1994 = vadd.f32 %v1637, %v1993
        %v1995 = vpop.f32.mrb[0].mxu0
        %v1996 = vadd.f32 %v1642, %v1995
        %v1997 = vpop.f32.mrb[0].mxu0
        %v1998 = vadd.f32 %v1642, %v1997
        %1999 = vmatprep.mubr.bf16.mxu0 %v1780
        %2000 = vmatmul.mubr.bf16.gmra.mrb[0].mxu0 %v1748
        %v2001 = vpop.f32.mrb[0].mxu0
        %v2002 = vadd.f32 %v1647, %v2001
        %v2003 = vpop.f32.mrb[0].mxu0
        %v2004 = vadd.f32 %v1647, %v2003
        %v2005 = vpop.f32.mrb[0].mxu0
        %v2006 = vadd.f32 %v1652, %v2005
        %v2007 = vpop.f32.mrb[0].mxu0
        %v2008 = vadd.f32 %v1652, %v2007
        %2009 = vmatprep.mubr.bf16.mxu0 %v1783
        %2010 = vmatmul.mubr.bf16.gmra.mrb[0].mxu0 %v1750
        %v2011 = vpop.f32.mrb[0].mxu0
        %v2012 = vadd.f32 %v1657, %v2011
        %v2013 = vpop.f32.mrb[0].mxu0
        %v2014 = vadd.f32 %v1657, %v2013
        %v2015 = vpop.f32.mrb[0].mxu0
        %v2016 = vadd.f32 %v1662, %v2015
        %v2017 = vpop.f32.mrb[0].mxu0
        %v2018 = vadd.f32 %v1662, %v2017
        %2019 = vmatprep.mubr.bf16.mxu0 %v1786
        %2020 = vmatmul.mubr.bf16.gmra.mrb[0].mxu0 %v1752
        %v2021 = vpop.f32.mrb[0].mxu0
        %v2022 = vadd.f32 %v1667, %v2021
        %v2023 = vpop.f32.mrb[0].mxu0
        %v2024 = vadd.f32 %v1667, %v2023
        %v2025 = vpop.f32.mrb[0].mxu0
        %v2026 = vadd.f32 %v1672, %v2025
        %v2027 = vpop.f32.mrb[0].mxu0
        %v2028 = vadd.f32 %v1672, %v2027
        %2029 = vmatprep.mubr.bf16.mxu0 %v1789
        %2030 = vmatmul.mubr.bf16.gmra.mrb[0].mxu0 %v1754
        %v2031 = vpop.f32.mrb[0].mxu0
        %v2032 = vadd.f32 %v1677, %v2031
        %v2033 = vpop.f32.mrb[0].mxu0
        %v2034 = vadd.f32 %v1677, %v2033
        %v2035 = vpop.f32.mrb[0].mxu0
        %v2036 = vadd.f32 %v1682, %v2035
        %v2037 = vpop.f32.mrb[0].mxu0
        %v2038 = vadd.f32 %v1682, %v2037
        %2039 = vmatprep.mubr.bf16.mxu0 %v1792
        %2040 = vmatmul.mubr.bf16.gmra.mrb[0].mxu0 %v1756
        %v2041 = vpop.f32.mrb[0].mxu0
        %v2042 = vadd.f32 %v1687, %v2041
        %v2043 = vpop.f32.mrb[0].mxu0
        %v2044 = vadd.f32 %v1687, %v2043
        %v2045 = vpop.f32.mrb[0].mxu0
        %v2046 = vpop.f32.mrb[0].mxu0
        %2047 = vdwg.mxu0
        %v2048 = vtanh.pop %v1841
        %v2049 = vtanh.pop %v1843
        %v2050 = vtanh.pop %v1962
        %v2051 = vtanh.pop %v1964
        %v2052 = vtanh.pop %v1845
        %v2053 = vtanh.pop %v1847
        %v2054 = vtanh.pop %v1966
        %v2055 = vtanh.pop %v1968
        %v2056 = vtanh.pop %v1851
        %v2057 = vtanh.pop %v1853
        %v2058 = vtanh.pop %v1972
        %v2059 = vtanh.pop %v1974
        %v2060 = vtanh.pop %v1855
        %v2061 = vtanh.pop %v1857
        %v2062 = vtanh.pop %v1976
        %v2063 = vtanh.pop %v1978
        %v2064 = vtanh.pop %v1861
        %v2065 = vtanh.pop %v1863
        %v2066 = vtanh.pop %v1982
        %v2067 = vtanh.pop %v1984
        %v2068 = vtanh.pop %v1865
        %v2069 = vtanh.pop %v1867
        %v2070 = vtanh.pop %v1986
        %v2071 = vtanh.pop %v1988
        %v2072 = vtanh.pop %v1871
        %v2073 = vtanh.pop %v1873
        %v2074 = vtanh.pop %v1992
        %v2075 = vtanh.pop %v1994
        %v2076 = vtanh.pop %v1875
        %v2077 = vtanh.pop %v1877
        %v2078 = vtanh.pop %v1996
        %v2079 = vtanh.pop %v1998
        %v2080 = vtanh.pop %v1881
        %v2081 = vtanh.pop %v1883
        %v2082 = vtanh.pop %v2002
        %v2083 = vtanh.pop %v2004
        %v2084 = vtanh.pop %v1885
        %v2085 = vtanh.pop %v1887
        %v2086 = vtanh.pop %v2006
        %v2087 = vtanh.pop %v2008
        %v2088 = vtanh.pop %v1891
        %v2089 = vtanh.pop %v1893
        %v2090 = vtanh.pop %v2012
        %v2091 = vtanh.pop %v2014
        %v2092 = vtanh.pop %v1895
        %v2093 = vtanh.pop %v1897
        %v2094 = vtanh.pop %v2016
        %v2095 = vtanh.pop %v2018
        %v2096 = vtanh.pop %v1901
        %v2097 = vtanh.pop %v1903
        %v2098 = vtanh.pop %v2022
        %v2099 = vtanh.pop %v2024
        %v2100 = vtanh.pop %v1905
        %v2101 = vtanh.pop %v1907
        %v2102 = vtanh.pop %v2026
        %v2103 = vtanh.pop %v2028
        %v2104 = vtanh.pop %v1911
        %v2105 = vtanh.pop %v1913
        %v2106 = vtanh.pop %v2032
        %v2107 = vtanh.pop %v2034
        %v2108 = vtanh.pop %v1915
        %v2109 = vtanh.pop %v1917
        %v2110 = vtanh.pop %v2036
        %v2111 = vtanh.pop %v2038
        %v2112 = vtanh.pop %v1921
        %v2113 = vtanh.pop %v1923
        %v2114 = vtanh.pop %v2042
        %v2115 = vtanh.pop %v2044
        %v2116 = vpack.c.bf16 %v2052, %v2048
        %v2117 = vpack.c.bf16 %v2053, %v2049
        %v2118 = vpack.c.bf16 %v2054, %v2050
        %v2119 = vpack.c.bf16 %v2055, %v2051
        %v2120 = vpack.c.bf16 %v2060, %v2056
        %v2121 = vpack.c.bf16 %v2061, %v2057
        %v2122 = vpack.c.bf16 %v2062, %v2058
        %v2123 = vpack.c.bf16 %v2063, %v2059
        %v2124 = vpack.c.bf16 %v2068, %v2064
        %v2125 = vpack.c.bf16 %v2069, %v2065
        %v2126 = vpack.c.bf16 %v2070, %v2066
        %v2127 = vpack.c.bf16 %v2071, %v2067
        %v2128 = vpack.c.bf16 %v2076, %v2072
        %v2129 = vpack.c.bf16 %v2077, %v2073
        %v2130 = vpack.c.bf16 %v2078, %v2074
        %v2131 = vpack.c.bf16 %v2079, %v2075
        %v2132 = vpack.c.bf16 %v2084, %v2080
        %v2133 = vpack.c.bf16 %v2085, %v2081
        %v2134 = vpack.c.bf16 %v2086, %v2082
        %v2135 = vpack.c.bf16 %v2087, %v2083
        %v2136 = vpack.c.bf16 %v2092, %v2088
        %v2137 = vpack.c.bf16 %v2093, %v2089
        %v2138 = vpack.c.bf16 %v2094, %v2090
        %v2139 = vpack.c.bf16 %v2095, %v2091
        %v2140 = vpack.c.bf16 %v2100, %v2096
        %v2141 = vpack.c.bf16 %v2101, %v2097
        %v2142 = vpack.c.bf16 %v2102, %v2098
        %v2143 = vpack.c.bf16 %v2103, %v2099
        %v2144 = vpack.c.bf16 %v2108, %v2104
        %v2145 = vpack.c.bf16 %v2109, %v2105
        %v2146 = vpack.c.bf16 %v2110, %v2106
        %v2147 = vpack.c.bf16 %v2111, %v2107
        %v2148 = vpack.c.bf16 %v2112, %v2112
        %v2149 = vpack.c.bf16 %v2113, %v2113
        %v2150 = vpack.c.bf16 %v2114, %v2114
        %v2151 = vpack.c.bf16 %v2115, %v2115
        %v2152 = vld [vmem:[%s8] sm:$0xf]
        %v2153 = vld [vmem:[%s9] sm:$0xff]
        %2155 = vset.pattern.permute.xlu0 0
        %2156 = vperm.xlu0 %2155, %v2153
        %v2157 = vpop.permute.xlu0 %2156
        %vm2159 = vcmask 654336
        %v2161 = vsel %vm2159, %v2152, 0
        %2163 = vmatprep.subr.bf16.mxu0 %v2117
        %2164 = vmatpush1.bf16.msra.mxu0 %v2116
        %2165 = vmatprep.subr.bf16.mxu0 %v2121
        %2166 = vmatpush1.bf16.msra.mxu0 %v2120
        %2167 = vmatprep.subr.bf16.mxu0 %v2125
        %2168 = vmatpush1.bf16.msra.mxu0 %v2124
        %2169 = vmatprep.subr.bf16.mxu0 %v2129
        %2170 = vmatpush1.bf16.msra.mxu0 %v2128
        %2171 = vmatprep.subr.bf16.mxu0 %v2133
        %2172 = vmatpush1.bf16.msra.mxu0 %v2132
        %2173 = vmatprep.subr.bf16.mxu0 0
        %2174 = vmatpush1.bf16.msra.mxu0 0
        %2175 = vmatprep.subr.bf16.mxu0 0
        %2176 = vmatpush1.bf16.msra.mxu0 0
        %2177 = vmatprep.subr.bf16.mxu0 0
        %2178 = vmatpush1.bf16.msra.mxu0 0
        %2179 = vmatprep.subr.bf16.mxu0 0
        %2180 = vmatpush1.bf16.msra.mxu0 0
        %2181 = vmatprep.subr.bf16.mxu0 0
        %2182 = vmatpush1.bf16.msra.mxu0 0
        %2183 = vmatprep.subr.bf16.mxu0 0
        %2184 = vmatpush1.bf16.msra.mxu0 0
        %2185 = vmatprep.subr.bf16.mxu0 0
        %2186 = vmatpush1.bf16.msra.mxu0 0
        %2187 = vmatprep.subr.bf16.mxu0 0
        %2188 = vmatpush1.bf16.msra.mxu0 0
        %2189 = vmatprep.subr.bf16.mxu0 0
        %2190 = vmatpush1.bf16.msra.mxu0 0
        %2191 = vmatprep.subr.bf16.mxu0 0
        %2192 = vmatpush1.bf16.msra.mxu0 0
        %2193 = vmatprep.subr.bf16.mxu0 0
        %2194 = vmatpush1.bf16.msra.mxu0 0
        %2195 = vmatprep.mubr.bf16.mxu0 0
        %2196 = vmatmul.mubr.bf16.gmra.mrb[0].mxu0 %v2161
        %v2197 = vpop.f32.mrb[0].mxu0
        %v2198 = vadd.f32 %v2157, %v2197
        %v2199 = vpop.f32.mrb[0].mxu0
        %v2200 = vadd.f32 %v2157, %v2199
        %v2201 = vpop.f32.mrb[0].mxu0
        %v2202 = vpop.f32.mrb[0].mxu0
        %2203 = vdwg.mxu0
        %2204 = vmatprep.subr.bf16.mxu0 %v2119
        %2205 = vmatpush1.bf16.msra.mxu0 %v2118
        %2206 = vmatprep.subr.bf16.mxu0 %v2123
        %2207 = vmatpush1.bf16.msra.mxu0 %v2122
        %2208 = vmatprep.subr.bf16.mxu0 %v2127
        %2209 = vmatpush1.bf16.msra.mxu0 %v2126
        %2210 = vmatprep.subr.bf16.mxu0 %v2131
        %2211 = vmatpush1.bf16.msra.mxu0 %v2130
        %2212 = vmatprep.subr.bf16.mxu0 %v2135
        %2213 = vmatpush1.bf16.msra.mxu0 %v2134
        %2214 = vmatprep.subr.bf16.mxu0 0
        %2215 = vmatpush1.bf16.msra.mxu0 0
        %2216 = vmatprep.subr.bf16.mxu0 0
        %2217 = vmatpush1.bf16.msra.mxu0 0
        %2218 = vmatprep.subr.bf16.mxu0 0
        %2219 = vmatpush1.bf16.msra.mxu0 0
        %2220 = vmatprep.subr.bf16.mxu0 0
        %2221 = vmatpush1.bf16.msra.mxu0 0
        %2222 = vmatprep.subr.bf16.mxu0 0
        %2223 = vmatpush1.bf16.msra.mxu0 0
        %2224 = vmatprep.subr.bf16.mxu0 0
        %2225 = vmatpush1.bf16.msra.mxu0 0
        %2226 = vmatprep.subr.bf16.mxu0 0
        %2227 = vmatpush1.bf16.msra.mxu0 0
        %2228 = vmatprep.subr.bf16.mxu0 0
        %2229 = vmatpush1.bf16.msra.mxu0 0
        %2230 = vmatprep.subr.bf16.mxu0 0
        %2231 = vmatpush1.bf16.msra.mxu0 0
        %2232 = vmatprep.subr.bf16.mxu0 0
        %2233 = vmatpush1.bf16.msra.mxu0 0
        %2234 = vmatprep.subr.bf16.mxu0 0
        %2235 = vmatpush1.bf16.msra.mxu0 0
        %2236 = vmatprep.mubr.bf16.mxu0 0
        %2237 = vmatmul.mubr.bf16.gmra.mrb[0].mxu0 %v2161
        %v2238 = vpop.f32.mrb[0].mxu0
        %v2239 = vadd.f32 %v2157, %v2238
        %v2240 = vpop.f32.mrb[0].mxu0
        %v2241 = vadd.f32 %v2157, %v2240
        %v2242 = vpop.f32.mrb[0].mxu0
        %v2243 = vpop.f32.mrb[0].mxu0
        %2244 = vdwg.mxu0
        %v2245 = vld [vmem:[%s4] sm:$0xf]
        %v2246 = vld [vmem:[%s4 + $0x4] sm:$0xf]
        %v2247 = vld [vmem:[%s4 + $0x8] sm:$0xf]
        %v2248 = vld [vmem:[%s4 + $0xc] sm:$0xf]
        %v2249 = vld [vmem:[%s4 + $0x10] sm:$0xf]
        %v2250 = vld [vmem:[%s4 + $0x14] sm:$0xf]
        %v2251 = vld [vmem:[%s4 + $0x18] sm:$0x1]
        %v2252 = vld [vmem:[%s5] sm:$0xff]
        %v2253 = vld [vmem:[%s5 + $0x8] sm:$0xff]
        %v2254 = vld [vmem:[%s5 + $0x10] sm:$0xff]
        %v2255 = vld [vmem:[%s5 + $0x18] sm:$0xff]
        %v2256 = vld [vmem:[%s5 + $0x20] sm:$0xff]
        %v2257 = vld [vmem:[%s5 + $0x28] sm:$0xff]
        %v2258 = vld [vmem:[%s5 + $0x30] sm:$0x3]
        %2260 = vset.pattern.permute.xlu0 0
        %2261 = vperm.xlu0 %2260, %v2252
        %v2262 = vpop.permute.xlu0 %2261
        %2265 = vset.pattern.permute.xlu0 0
        %2266 = vperm.xlu0 %2265, %v2253
        %v2267 = vpop.permute.xlu0 %2266
        %2270 = vset.pattern.permute.xlu0 0
        %2271 = vperm.xlu0 %2270, %v2254
        %v2272 = vpop.permute.xlu0 %2271
        %2275 = vset.pattern.permute.xlu0 0
        %2276 = vperm.xlu0 %2275, %v2255
        %v2277 = vpop.permute.xlu0 %2276
        %2280 = vset.pattern.permute.xlu0 0
        %2281 = vperm.xlu0 %2280, %v2256
        %v2282 = vpop.permute.xlu0 %2281
        %2285 = vset.pattern.permute.xlu0 0
        %2286 = vperm.xlu0 %2285, %v2257
        %v2287 = vpop.permute.xlu0 %2286
        %2290 = vset.pattern.permute.xlu0 0
        %2291 = vperm.xlu0 %2290, %v2258
        %v2292 = vpop.permute.xlu0 %2291
        %v2301 = vunpack.c.l.b16 %v2245
        %v2302 = vunpack.c.l.b16 %v2246
        %v2303 = vunpack.c.l.b16 %v2247
        %v2304 = vunpack.c.l.b16 %v2248
        %v2305 = vunpack.c.l.b16 %v2249
        %v2306 = vunpack.c.l.b16 %v2250
        %v2307 = vunpack.c.l.b16 %v2251
        %v2308 = vpack.c.b16 %v2302, %v2301
        %v2309 = vpack.c.b16 %v2304, %v2303
        %v2310 = vpack.c.b16 %v2306, %v2305
        %v2311 = vpack.c.b16 %v2307, %v2307
        %vm2312 = vcmask 408576
        %v2314 = vsel %vm2312, %v2308, 0
        %v2317 = vsel %vm2312, %v2309, 0
        %v2320 = vsel %vm2312, %v2310, 0
        %v2323 = vsel %vm2312, %v2311, 0
        %v2326 = vsel %vm1245, %v2148, 0
        %v2329 = vsel %vm1245, %v2149, 0
        %v2332 = vsel %vm1245, %v2150, 0
        %v2335 = vsel %vm1245, %v2151, 0
        %2337 = vmatprep.subr.bf16.mxu0 %v2137
        %2338 = vmatpush1.bf16.msra.mxu0 %v2136
        %2339 = vmatprep.subr.bf16.mxu0 %v2141
        %2340 = vmatpush1.bf16.msra.mxu0 %v2140
        %2341 = vmatprep.subr.bf16.mxu0 %v2145
        %2342 = vmatpush1.bf16.msra.mxu0 %v2144
        %2343 = vmatprep.subr.bf16.mxu0 %v2329
        %2344 = vmatpush1.bf16.msra.mxu0 %v2326
        %2345 = vmatprep.subr.bf16.mxu0 0
        %2346 = vmatpush1.bf16.msra.mxu0 0
        %2347 = vmatprep.subr.bf16.mxu0 0
        %2348 = vmatpush1.bf16.msra.mxu0 0
        %2349 = vmatprep.subr.bf16.mxu0 0
        %2350 = vmatpush1.bf16.msra.mxu0 0
        %2351 = vmatprep.subr.bf16.mxu0 0
        %2352 = vmatpush1.bf16.msra.mxu0 0
        %2353 = vmatprep.subr.bf16.mxu0 0
        %2354 = vmatpush1.bf16.msra.mxu0 0
        %2355 = vmatprep.subr.bf16.mxu0 0
        %2356 = vmatpush1.bf16.msra.mxu0 0
        %2357 = vmatprep.subr.bf16.mxu0 0
        %2358 = vmatpush1.bf16.msra.mxu0 0
        %2359 = vmatprep.subr.bf16.mxu0 0
        %2360 = vmatpush1.bf16.msra.mxu0 0
        %2361 = vmatprep.subr.bf16.mxu0 0
        %2362 = vmatpush1.bf16.msra.mxu0 0
        %2363 = vmatprep.subr.bf16.mxu0 0
        %2364 = vmatpush1.bf16.msra.mxu0 0
        %2365 = vmatprep.subr.bf16.mxu0 0
        %2366 = vmatpush1.bf16.msra.mxu0 0
        %2367 = vmatprep.subr.bf16.mxu0 0
        %2368 = vmatpush1.bf16.msra.mxu0 0
        %2369 = vmatprep.mubr.bf16.mxu0 0
        %2370 = vmatmul.mubr.bf16.gmra.mrb[0].mxu0 %v2314
        %v2371 = vpop.f32.mrb[0].mxu0
        %v2372 = vadd.f32 %v2262, %v2371
        %v2373 = vpop.f32.mrb[0].mxu0
        %v2374 = vadd.f32 %v2262, %v2373
        %v2375 = vpop.f32.mrb[0].mxu0
        %v2376 = vadd.f32 %v2267, %v2375
        %v2377 = vpop.f32.mrb[0].mxu0
        %v2378 = vadd.f32 %v2267, %v2377
        %2379 = vmatprep.mubr.bf16.mxu0 0
        %2380 = vmatmul.mubr.bf16.gmra.mrb[0].mxu0 %v2317
        %v2381 = vpop.f32.mrb[0].mxu0
        %v2382 = vadd.f32 %v2272, %v2381
        %v2383 = vpop.f32.mrb[0].mxu0
        %v2384 = vadd.f32 %v2272, %v2383
        %v2385 = vpop.f32.mrb[0].mxu0
        %v2386 = vadd.f32 %v2277, %v2385
        %v2387 = vpop.f32.mrb[0].mxu0
        %v2388 = vadd.f32 %v2277, %v2387
        %2389 = vmatprep.mubr.bf16.mxu0 0
        %2390 = vmatmul.mubr.bf16.gmra.mrb[0].mxu0 %v2320
        %v2391 = vpop.f32.mrb[0].mxu0
        %v2392 = vadd.f32 %v2282, %v2391
        %v2393 = vpop.f32.mrb[0].mxu0
        %v2394 = vadd.f32 %v2282, %v2393
        %v2395 = vpop.f32.mrb[0].mxu0
        %v2396 = vadd.f32 %v2287, %v2395
        %v2397 = vpop.f32.mrb[0].mxu0
        %v2398 = vadd.f32 %v2287, %v2397
        %2399 = vmatprep.mubr.bf16.mxu0 0
        %2400 = vmatmul.mubr.bf16.gmra.mrb[0].mxu0 %v2323
        %v2401 = vpop.f32.mrb[0].mxu0
        %v2402 = vadd.f32 %v2292, %v2401
        %v2403 = vpop.f32.mrb[0].mxu0
        %v2404 = vadd.f32 %v2292, %v2403
        %v2405 = vpop.f32.mrb[0].mxu0
        %v2406 = vpop.f32.mrb[0].mxu0
        %2407 = vdwg.mxu0
        %2408 = vmatprep.subr.bf16.mxu0 %v2139
        %2409 = vmatpush1.bf16.msra.mxu0 %v2138
        %2410 = vmatprep.subr.bf16.mxu0 %v2143
        %2411 = vmatpush1.bf16.msra.mxu0 %v2142
        %2412 = vmatprep.subr.bf16.mxu0 %v2147
        %2413 = vmatpush1.bf16.msra.mxu0 %v2146
        %2414 = vmatprep.subr.bf16.mxu0 %v2335
        %2415 = vmatpush1.bf16.msra.mxu0 %v2332
        %2416 = vmatprep.subr.bf16.mxu0 0
        %2417 = vmatpush1.bf16.msra.mxu0 0
        %2418 = vmatprep.subr.bf16.mxu0 0
        %2419 = vmatpush1.bf16.msra.mxu0 0
        %2420 = vmatprep.subr.bf16.mxu0 0
        %2421 = vmatpush1.bf16.msra.mxu0 0
        %2422 = vmatprep.subr.bf16.mxu0 0
        %2423 = vmatpush1.bf16.msra.mxu0 0
        %2424 = vmatprep.subr.bf16.mxu0 0
        %2425 = vmatpush1.bf16.msra.mxu0 0
        %2426 = vmatprep.subr.bf16.mxu0 0
        %2427 = vmatpush1.bf16.msra.mxu0 0
        %2428 = vmatprep.subr.bf16.mxu0 0
        %2429 = vmatpush1.bf16.msra.mxu0 0
        %2430 = vmatprep.subr.bf16.mxu0 0
        %2431 = vmatpush1.bf16.msra.mxu0 0
        %2432 = vmatprep.subr.bf16.mxu0 0
        %2433 = vmatpush1.bf16.msra.mxu0 0
        %2434 = vmatprep.subr.bf16.mxu0 0
        %2435 = vmatpush1.bf16.msra.mxu0 0
        %2436 = vmatprep.subr.bf16.mxu0 0
        %2437 = vmatpush1.bf16.msra.mxu0 0
        %2438 = vmatprep.subr.bf16.mxu0 0
        %2439 = vmatpush1.bf16.msra.mxu0 0
        %2440 = vmatprep.mubr.bf16.mxu0 0
        %2441 = vmatmul.mubr.bf16.gmra.mrb[0].mxu0 %v2314
        %v2442 = vpop.f32.mrb[0].mxu0
        %v2443 = vadd.f32 %v2262, %v2442
        %v2444 = vpop.f32.mrb[0].mxu0
        %v2445 = vadd.f32 %v2262, %v2444
        %v2446 = vpop.f32.mrb[0].mxu0
        %v2447 = vadd.f32 %v2267, %v2446
        %v2448 = vpop.f32.mrb[0].mxu0
        %v2449 = vadd.f32 %v2267, %v2448
        %2450 = vmatprep.mubr.bf16.mxu0 0
        %2451 = vmatmul.mubr.bf16.gmra.mrb[0].mxu0 %v2317
        %v2452 = vpop.f32.mrb[0].mxu0
        %v2453 = vadd.f32 %v2272, %v2452
        %v2454 = vpop.f32.mrb[0].mxu0
        %v2455 = vadd.f32 %v2272, %v2454
        %v2456 = vpop.f32.mrb[0].mxu0
        %v2457 = vadd.f32 %v2277, %v2456
        %v2458 = vpop.f32.mrb[0].mxu0
        %v2459 = vadd.f32 %v2277, %v2458
        %2460 = vmatprep.mubr.bf16.mxu0 0
        %2461 = vmatmul.mubr.bf16.gmra.mrb[0].mxu0 %v2320
        %v2462 = vpop.f32.mrb[0].mxu0
        %v2463 = vadd.f32 %v2282, %v2462
        %v2464 = vpop.f32.mrb[0].mxu0
        %v2465 = vadd.f32 %v2282, %v2464
        %v2466 = vpop.f32.mrb[0].mxu0
        %v2467 = vadd.f32 %v2287, %v2466
        %v2468 = vpop.f32.mrb[0].mxu0
        %v2469 = vadd.f32 %v2287, %v2468
        %2470 = vmatprep.mubr.bf16.mxu0 0
        %2471 = vmatmul.mubr.bf16.gmra.mrb[0].mxu0 %v2323
        %v2472 = vpop.f32.mrb[0].mxu0
        %v2473 = vadd.f32 %v2292, %v2472
        %v2474 = vpop.f32.mrb[0].mxu0
        %v2475 = vadd.f32 %v2292, %v2474
        %v2476 = vpop.f32.mrb[0].mxu0
        %v2477 = vpop.f32.mrb[0].mxu0
        %2478 = vdwg.mxu0
        %v2479 = vtanh.pop %v2372
        %v2480 = vtanh.pop %v2374
        %v2481 = vtanh.pop %v2443
        %v2482 = vtanh.pop %v2445
        %v2483 = vtanh.pop %v2376
        %v2484 = vtanh.pop %v2378
        %v2485 = vtanh.pop %v2447
        %v2486 = vtanh.pop %v2449
        %v2487 = vtanh.pop %v2382
        %v2488 = vtanh.pop %v2384
        %v2489 = vtanh.pop %v2453
        %v2490 = vtanh.pop %v2455
        %v2491 = vtanh.pop %v2386
        %v2492 = vtanh.pop %v2388
        %v2493 = vtanh.pop %v2457
        %v2494 = vtanh.pop %v2459
        %v2495 = vtanh.pop %v2392
        %v2496 = vtanh.pop %v2394
        %v2497 = vtanh.pop %v2463
        %v2498 = vtanh.pop %v2465
        %v2499 = vtanh.pop %v2396
        %v2500 = vtanh.pop %v2398
        %v2501 = vtanh.pop %v2467
        %v2502 = vtanh.pop %v2469
        %v2503 = vtanh.pop %v2402
        %v2504 = vtanh.pop %v2404
        %v2505 = vtanh.pop %v2473
        %v2506 = vtanh.pop %v2475
        %v2507 = vld [vmem:[%s6] sm:$0x3]
        %v2508 = vpack.c.bf16 %v2483, %v2479
        %v2509 = vpack.c.bf16 %v2484, %v2480
        %v2510 = vpack.c.bf16 %v2485, %v2481
        %v2511 = vpack.c.bf16 %v2486, %v2482
        %v2512 = vpack.c.bf16 %v2491, %v2487
        %v2513 = vpack.c.bf16 %v2492, %v2488
        %v2514 = vpack.c.bf16 %v2493, %v2489
        %v2515 = vpack.c.bf16 %v2494, %v2490
        %v2516 = vpack.c.bf16 %v2499, %v2495
        %v2517 = vpack.c.bf16 %v2500, %v2496
        %v2518 = vpack.c.bf16 %v2501, %v2497
        %v2519 = vpack.c.bf16 %v2502, %v2498
        %v2520 = vpack.c.bf16 %v2503, %v2503
        %v2521 = vpack.c.bf16 %v2504, %v2504
        %v2522 = vpack.c.bf16 %v2505, %v2505
        %v2523 = vpack.c.bf16 %v2506, %v2506
        %v2524 = vld [vmem:[%s7] sm:$0x7]
        %2526 = vset.pattern.permute.xlu0 0
        %2527 = vperm.xlu0 %2526, %v2524
        %v2528 = vpop.permute.xlu0 %2527
        %v2531 = vsel %vm2312, %v2507, 0
        %v2534 = vsel %vm1245, %v2520, 0
        %v2537 = vsel %vm1245, %v2521, 0
        %v2540 = vsel %vm1245, %v2522, 0
        %v2543 = vsel %vm1245, %v2523, 0
        %2545 = vmatprep.subr.bf16.mxu0 %v2509
        %2546 = vmatpush1.bf16.msra.mxu0 %v2508
        %2547 = vmatprep.subr.bf16.mxu0 %v2513
        %2548 = vmatpush1.bf16.msra.mxu0 %v2512
        %2549 = vmatprep.subr.bf16.mxu0 %v2517
        %2550 = vmatpush1.bf16.msra.mxu0 %v2516
        %2551 = vmatprep.subr.bf16.mxu0 %v2537
        %2552 = vmatpush1.bf16.msra.mxu0 %v2534
        %2553 = vmatprep.subr.bf16.mxu0 0
        %2554 = vmatpush1.bf16.msra.mxu0 0
        %2555 = vmatprep.subr.bf16.mxu0 0
        %2556 = vmatpush1.bf16.msra.mxu0 0
        %2557 = vmatprep.subr.bf16.mxu0 0
        %2558 = vmatpush1.bf16.msra.mxu0 0
        %2559 = vmatprep.subr.bf16.mxu0 0
        %2560 = vmatpush1.bf16.msra.mxu0 0
        %2561 = vmatprep.subr.bf16.mxu0 0
        %2562 = vmatpush1.bf16.msra.mxu0 0
        %2563 = vmatprep.subr.bf16.mxu0 0
        %2564 = vmatpush1.bf16.msra.mxu0 0
        %2565 = vmatprep.subr.bf16.mxu0 0
        %2566 = vmatpush1.bf16.msra.mxu0 0
        %2567 = vmatprep.subr.bf16.mxu0 0
        %2568 = vmatpush1.bf16.msra.mxu0 0
        %2569 = vmatprep.subr.bf16.mxu0 0
        %2570 = vmatpush1.bf16.msra.mxu0 0
        %2571 = vmatprep.subr.bf16.mxu0 0
        %2572 = vmatpush1.bf16.msra.mxu0 0
        %2573 = vmatprep.subr.bf16.mxu0 0
        %2574 = vmatpush1.bf16.msra.mxu0 0
        %2575 = vmatprep.subr.bf16.mxu0 0
        %2576 = vmatpush1.bf16.msra.mxu0 0
        %2577 = vmatprep.mubr.bf16.mxu0 0
        %2578 = vmatmul.mubr.bf16.gmra.mrb[0].mxu0 %v2531
        %v2579 = vpop.f32.mrb[0].mxu0
        %v2580 = vadd.f32 %v2528, %v2579
        %v2581 = vpop.f32.mrb[0].mxu0
        %v2582 = vadd.f32 %v2528, %v2581
        %v2583 = vpop.f32.mrb[0].mxu0
        %v2584 = vpop.f32.mrb[0].mxu0
        %2585 = vdwg.mxu0
        %2586 = vmatprep.subr.bf16.mxu0 %v2511
        %2587 = vmatpush1.bf16.msra.mxu0 %v2510
        %2588 = vmatprep.subr.bf16.mxu0 %v2515
        %2589 = vmatpush1.bf16.msra.mxu0 %v2514
        %2590 = vmatprep.subr.bf16.mxu0 %v2519
        %2591 = vmatpush1.bf16.msra.mxu0 %v2518
        %2592 = vmatprep.subr.bf16.mxu0 %v2543
        %2593 = vmatpush1.bf16.msra.mxu0 %v2540
        %2594 = vmatprep.subr.bf16.mxu0 0
        %2595 = vmatpush1.bf16.msra.mxu0 0
        %2596 = vmatprep.subr.bf16.mxu0 0
        %2597 = vmatpush1.bf16.msra.mxu0 0
        %2598 = vmatprep.subr.bf16.mxu0 0
        %2599 = vmatpush1.bf16.msra.mxu0 0
        %2600 = vmatprep.subr.bf16.mxu0 0
        %2601 = vmatpush1.bf16.msra.mxu0 0
        %2602 = vmatprep.subr.bf16.mxu0 0
        %2603 = vmatpush1.bf16.msra.mxu0 0
        %2604 = vmatprep.subr.bf16.mxu0 0
        %2605 = vmatpush1.bf16.msra.mxu0 0
        %2606 = vmatprep.subr.bf16.mxu0 0
        %2607 = vmatpush1.bf16.msra.mxu0 0
        %2608 = vmatprep.subr.bf16.mxu0 0
        %2609 = vmatpush1.bf16.msra.mxu0 0
        %2610 = vmatprep.subr.bf16.mxu0 0
        %2611 = vmatpush1.bf16.msra.mxu0 0
        %2612 = vmatprep.subr.bf16.mxu0 0
        %2613 = vmatpush1.bf16.msra.mxu0 0
        %2614 = vmatprep.subr.bf16.mxu0 0
        %2615 = vmatpush1.bf16.msra.mxu0 0
        %2616 = vmatprep.subr.bf16.mxu0 0
        %2617 = vmatpush1.bf16.msra.mxu0 0
        %2618 = vmatprep.mubr.bf16.mxu0 0
        %2619 = vmatmul.mubr.bf16.gmra.mrb[0].mxu0 %v2531
        %v2620 = vpop.f32.mrb[0].mxu0
        %v2621 = vadd.f32 %v2528, %v2620
        %v2622 = vpop.f32.mrb[0].mxu0
        %v2623 = vadd.f32 %v2528, %v2622
        %v2624 = vpop.f32.mrb[0].mxu0
        %v2625 = vpop.f32.mrb[0].mxu0
        %2626 = vdwg.mxu0
        %v2627 = vsel %vm1245, 2.0, 1.0
        %2629 = vset.pattern.permute.xlu0 0
        %2630 = vperm.xlu0 %2629, %v2627
        %v2631 = vpop.permute.xlu0 %2630
        %v2635 = vsub.f32 %v2631, %v362
        %v2636 = vsub.f32 %v2631, %v519
        %v2637 = vsub.f32 %v2631, %v363
        %v2638 = vsub.f32 %v2631, %v520
        %v2643 = vrot.slane %v2635, 6
        %v2644 = vrot.slane %v2636, 6
        %v2645 = vrot.slane %v2637, 6
        %v2646 = vrot.slane %v2638, 6
        %vm2651 = vcmask 1041408
        %v2652 = vsel %vm2651, %v362, %v2643
        %v2653 = vsel %vm2651, %v519, %v2644
        %v2654 = vsel %vm2651, %v363, %v2645
        %v2655 = vsel %vm2651, %v520, %v2646
        %v2656 = vmul.f32 %v2652, -4.0
        %v2657 = vmul.f32 %v2653, -4.0
        %v2658 = vmul.f32 %v2654, -4.0
        %v2659 = vmul.f32 %v2655, -4.0
        %vm2660 = vcmask 1043456
        %v2661 = vsel %vm2660, %v2656, -inf
        %v2662 = vrot.slane %v2661, 4
        %v2663 = vmax.f32 %v2661, %v2662
        %v2664 = vrot.slane %v2663, 2
        %v2665 = vmax.f32 %v2663, %v2664
        %v2666 = vrot.slane %v2665, 1
        %v2667 = vmax.f32 %v2665, %v2666
        %v2668 = vsel %vm2660, %v2657, -inf
        %v2669 = vrot.slane %v2668, 4
        %v2670 = vmax.f32 %v2668, %v2669
        %v2671 = vrot.slane %v2670, 2
        %v2672 = vmax.f32 %v2670, %v2671
        %v2673 = vrot.slane %v2672, 1
        %v2674 = vmax.f32 %v2672, %v2673
        %v2675 = vsel %vm2660, %v2658, -inf
        %v2676 = vrot.slane %v2675, 4
        %v2677 = vmax.f32 %v2675, %v2676
        %v2678 = vrot.slane %v2677, 2
        %v2679 = vmax.f32 %v2677, %v2678
        %v2680 = vrot.slane %v2679, 1
        %v2681 = vmax.f32 %v2679, %v2680
        %v2682 = vsel %vm2660, %v2659, -inf
        %v2683 = vrot.slane %v2682, 4
        %v2684 = vmax.f32 %v2682, %v2683
        %v2685 = vrot.slane %v2684, 2
        %v2686 = vmax.f32 %v2684, %v2685
        %v2687 = vrot.slane %v2686, 1
        %v2688 = vmax.f32 %v2686, %v2687
        %v2689 = vsub.f32 %v2656, %v2667
        %v2690 = vsub.f32 %v2657, %v2674
        %v2691 = vsub.f32 %v2658, %v2681
        %v2692 = vsub.f32 %v2659, %v2688
        %v2693 = vmul.f32 %v2689, 1.442695
        %v2694 = vpow.pop %v2693
        %v2695 = vmul.f32 %v2690, 1.442695
        %v2696 = vpow.pop %v2695
        %v2697 = vmul.f32 %v2691, 1.442695
        %v2698 = vpow.pop %v2697
        %v2699 = vmul.f32 %v2692, 1.442695
        %v2700 = vpow.pop %v2699
        %v2701 = vsel %vm2660, %v2694, 0.0
        %v2702 = vrot.slane %v2701, 4
        %v2703 = vadd.f32 %v2701, %v2702
        %v2704 = vrot.slane %v2703, 2
        %v2705 = vadd.f32 %v2703, %v2704
        %v2706 = vrot.slane %v2705, 1
        %v2707 = vadd.f32 %v2705, %v2706
        %v2708 = vsel %vm2660, %v2696, 0.0
        %v2709 = vrot.slane %v2708, 4
        %v2710 = vadd.f32 %v2708, %v2709
        %v2711 = vrot.slane %v2710, 2
        %v2712 = vadd.f32 %v2710, %v2711
        %v2713 = vrot.slane %v2712, 1
        %v2714 = vadd.f32 %v2712, %v2713
        %v2715 = vsel %vm2660, %v2698, 0.0
        %v2716 = vrot.slane %v2715, 4
        %v2717 = vadd.f32 %v2715, %v2716
        %v2718 = vrot.slane %v2717, 2
        %v2719 = vadd.f32 %v2717, %v2718
        %v2720 = vrot.slane %v2719, 1
        %v2721 = vadd.f32 %v2719, %v2720
        %v2722 = vsel %vm2660, %v2700, 0.0
        %v2723 = vrot.slane %v2722, 4
        %v2724 = vadd.f32 %v2722, %v2723
        %v2725 = vrot.slane %v2724, 2
        %v2726 = vadd.f32 %v2724, %v2725
        %v2727 = vrot.slane %v2726, 1
        %v2728 = vadd.f32 %v2726, %v2727
        %v2729 = vrcp.pop %v2707
        %v2730 = vrcp.pop %v2714
        %v2731 = vrcp.pop %v2721
        %v2732 = vrcp.pop %v2728
        %v2733 = vlog2.pop %v2707
        %v2734 = vmul.f32 %v2733, 0.6931472
        %v2735 = vlog2.pop %v2714
        %v2736 = vmul.f32 %v2735, 0.6931472
        %v2737 = vlog2.pop %v2721
        %v2738 = vmul.f32 %v2737, 0.6931472
        %v2739 = vlog2.pop %v2728
        %v2740 = vmul.f32 %v2739, 0.6931472
        %v2741 = vadd.f32 %v2667, %v2734
        %v2742 = vadd.f32 %v2674, %v2736
        %v2743 = vadd.f32 %v2681, %v2738
        %v2744 = vadd.f32 %v2688, %v2740
        %v2745 = vmul.f32 %v2741, -0.25
        %v2746 = vmul.f32 %v2742, -0.25
        %v2747 = vmul.f32 %v2743, -0.25
        %v2748 = vmul.f32 %v2744, -0.25
        %v2753 = vrot.slane %v2694, 6
        %v2754 = vrot.slane %v2696, 6
        %v2755 = vrot.slane %v2698, 6
        %v2756 = vrot.slane %v2700, 6
        %v2761 = vsub.f32 %v2694, %v2753
        %v2762 = vsub.f32 %v2696, %v2754
        %v2763 = vsub.f32 %v2698, %v2755
        %v2764 = vsub.f32 %v2700, %v2756
        %v2765 = vmul.f32 %v2761, %v2729
        %v2766 = vmul.f32 %v2762, %v2730
        %v2767 = vmul.f32 %v2763, %v2731
        %v2768 = vmul.f32 %v2764, %v2732
        %v2769 = vmul.f32 %v2765, %v2765
        %v2770 = vmul.f32 %v2766, %v2766
        %v2771 = vmul.f32 %v2767, %v2767
        %v2772 = vmul.f32 %v2768, %v2768
        %v2777 = vrot.slane %v2769, 2
        %v2778 = vrot.slane %v2770, 2
        %v2779 = vrot.slane %v2771, 2
        %v2780 = vrot.slane %v2772, 2
        %v2785 = vsel %vm2651, %v2777, 0.0
        %v2786 = vrot.slane %v2785, 4
        %v2787 = vadd.f32 %v2785, %v2786
        %v2788 = vrot.slane %v2787, 2
        %v2789 = vadd.f32 %v2787, %v2788
        %v2790 = vrot.slane %v2789, 1
        %v2791 = vadd.f32 %v2789, %v2790
        %v2792 = vsel %vm2651, %v2778, 0.0
        %v2793 = vrot.slane %v2792, 4
        %v2794 = vadd.f32 %v2792, %v2793
        %v2795 = vrot.slane %v2794, 2
        %v2796 = vadd.f32 %v2794, %v2795
        %v2797 = vrot.slane %v2796, 1
        %v2798 = vadd.f32 %v2796, %v2797
        %v2799 = vsel %vm2651, %v2779, 0.0
        %v2800 = vrot.slane %v2799, 4
        %v2801 = vadd.f32 %v2799, %v2800
        %v2802 = vrot.slane %v2801, 2
        %v2803 = vadd.f32 %v2801, %v2802
        %v2804 = vrot.slane %v2803, 1
        %v2805 = vadd.f32 %v2803, %v2804
        %v2806 = vsel %vm2651, %v2780, 0.0
        %v2807 = vrot.slane %v2806, 4
        %v2808 = vadd.f32 %v2806, %v2807
        %v2809 = vrot.slane %v2808, 2
        %v2810 = vadd.f32 %v2808, %v2809
        %v2811 = vrot.slane %v2810, 1
        %v2812 = vadd.f32 %v2810, %v2811
        %v2813 = vadd.f32 %v2791, 1e-12
        %v2814 = vadd.f32 %v2798, 1e-12
        %v2815 = vadd.f32 %v2805, 1e-12
        %v2816 = vadd.f32 %v2812, 1e-12
        %v2817 = vrsqrt.pop %v2813
        %v2818 = vrsqrt.pop %v2814
        %v2819 = vrsqrt.pop %v2815
        %v2820 = vrsqrt.pop %v2816
        %v2821 = vmul.f32 %v2765, %v2817
        %v2822 = vmul.f32 %v2766, %v2818
        %v2823 = vmul.f32 %v2767, %v2819
        %v2824 = vmul.f32 %v2768, %v2820
        %v2825 = vsel %vm1245, 0.5, 1.0
        %v2826 = vsel %vm2651, %v2825, 1.5
        %v2827 = vlaneseq
        %v2828 = vshrl.u32 %v2827, 7
        %v2829 = vsub.s32 0, %v2828
        %v2830 = vrot.slane %v362, %v2829
        %v2831 = vlaneseq
        %v2832 = vshrl.u32 %v2831, 7
        %v2833 = vsub.s32 4, %v2832
        %v2834 = vrot.slane %v362, %v2833
        %v2835 = vlaneseq
        %v2836 = vshrl.u32 %v2835, 7
        %v2837 = vsub.s32 0, %v2836
        %v2838 = vrot.slane %v363, %v2837
        %v2839 = vlaneseq
        %v2840 = vshrl.u32 %v2839, 7
        %v2841 = vsub.s32 4, %v2840
        %v2842 = vrot.slane %v363, %v2841
        %v2847 = vlaneseq
        %v2848 = vshrl.u32 %v2847, 7
        %v2849 = vsub.s32 0, %v2848
        %v2850 = vrot.slane %v2830, %v2849
        %v2851 = vlaneseq
        %v2852 = vshrl.u32 %v2851, 7
        %v2853 = vsub.s32 0, %v2852
        %v2854 = vrot.slane %v2834, %v2853
        %v2855 = vlaneseq
        %v2856 = vshrl.u32 %v2855, 7
        %v2857 = vsub.s32 0, %v2856
        %v2858 = vrot.slane %v2838, %v2857
        %v2859 = vlaneseq
        %v2860 = vshrl.u32 %v2859, 7
        %v2861 = vsub.s32 0, %v2860
        %v2862 = vrot.slane %v2842, %v2861
        %2864 = vset.pattern.permute.xlu0 0
        %2865 = vperm.xlu0 %2864, %v2826
        %v2866 = vpop.permute.xlu0 %2865
        %v2868 = vsub.f32 %v2850, %v2866
        %v2869 = vsub.f32 %v2854, %v2866
        %v2870 = vsub.f32 %v2858, %v2866
        %v2871 = vsub.f32 %v2862, %v2866
        %v2872 = vlaneseq
        %v2873 = vshrl.u32 %v2872, 7
        %v2874 = vsub.s32 1, %v2873
        %v2875 = vrot.slane %v362, %v2874
        %v2876 = vlaneseq
        %v2877 = vshrl.u32 %v2876, 7
        %v2878 = vsub.s32 5, %v2877
        %v2879 = vrot.slane %v362, %v2878
        %v2880 = vlaneseq
        %v2881 = vshrl.u32 %v2880, 7
        %v2882 = vsub.s32 1, %v2881
        %v2883 = vrot.slane %v363, %v2882
        %v2884 = vlaneseq
        %v2885 = vshrl.u32 %v2884, 7
        %v2886 = vsub.s32 5, %v2885
        %v2887 = vrot.slane %v363, %v2886
        %v2892 = vlaneseq
        %v2893 = vshrl.u32 %v2892, 7
        %v2894 = vsub.s32 1, %v2893
        %v2895 = vrot.slane %v2875, %v2894
        %v2896 = vlaneseq
        %v2897 = vshrl.u32 %v2896, 7
        %v2898 = vsub.s32 1, %v2897
        %v2899 = vrot.slane %v2879, %v2898
        %v2900 = vlaneseq
        %v2901 = vshrl.u32 %v2900, 7
        %v2902 = vsub.s32 1, %v2901
        %v2903 = vrot.slane %v2883, %v2902
        %v2904 = vlaneseq
        %v2905 = vshrl.u32 %v2904, 7
        %v2906 = vsub.s32 1, %v2905
        %v2907 = vrot.slane %v2887, %v2906
        %2909 = vset.pattern.permute.xlu0 0
        %2910 = vperm.xlu0 %2909, 0.5
        %v2911 = vpop.permute.xlu0 %2910
        %v2913 = vsub.f32 %v2895, %v2911
        %v2914 = vsub.f32 %v2899, %v2911
        %v2915 = vsub.f32 %v2903, %v2911
        %v2916 = vsub.f32 %v2907, %v2911
        %v2917 = vmul.f32 %v2868, %v2868
        %v2918 = vmul.f32 %v2869, %v2869
        %v2919 = vmul.f32 %v2870, %v2870
        %v2920 = vmul.f32 %v2871, %v2871
        %v2921 = vmul.f32 %v2913, %v2913
        %v2922 = vmul.f32 %v2914, %v2914
        %v2923 = vmul.f32 %v2915, %v2915
        %v2924 = vmul.f32 %v2916, %v2916
        %v2925 = vadd.f32 %v2917, %v2921
        %v2926 = vadd.f32 %v2918, %v2922
        %v2927 = vadd.f32 %v2919, %v2923
        %v2928 = vadd.f32 %v2920, %v2924
        %v2929 = vadd.f32 %v2925, 1e-12
        %v2930 = vadd.f32 %v2926, 1e-12
        %v2931 = vadd.f32 %v2927, 1e-12
        %v2932 = vadd.f32 %v2928, 1e-12
        %v2933 = vrsqrt.pop %v2929
        %v2934 = vrsqrt.pop %v2930
        %v2935 = vrsqrt.pop %v2931
        %v2936 = vrsqrt.pop %v2932
        %v2937 = vmul.f32 %v2925, %v2933
        %v2938 = vmul.f32 %v2926, %v2934
        %v2939 = vmul.f32 %v2927, %v2935
        %v2940 = vmul.f32 %v2928, %v2936
        %v2941 = vsub.f32 %v2937, 0.1
        %v2942 = vsub.f32 %v2938, 0.1
        %v2943 = vsub.f32 %v2939, 0.1
        %v2944 = vsub.f32 %v2940, 0.1
        %v2945 = vand.u32 2147483647, %v2941
        %v2946 = vand.u32 2147483647, %v2942
        %v2947 = vand.u32 2147483647, %v2943
        %v2948 = vand.u32 2147483647, %v2944
        %v2949 = vmul.f32 %v2868, %v2933
        %v2950 = vmul.f32 %v2869, %v2934
        %v2951 = vmul.f32 %v2870, %v2935
        %v2952 = vmul.f32 %v2871, %v2936
        %v2953 = vmul.f32 %v2913, %v2933
        %v2954 = vmul.f32 %v2914, %v2934
        %v2955 = vmul.f32 %v2915, %v2935
        %v2956 = vmul.f32 %v2916, %v2936
        %v2961 = vrot.slane %v2945, 7
        %v2962 = vrot.slane %v2946, 7
        %v2963 = vrot.slane %v2947, 7
        %v2964 = vrot.slane %v2948, 7
        %v2969 = vsel %vm1245, %v2745, %v2961
        %v2970 = vsel %vm1245, %v2746, %v2962
        %v2971 = vsel %vm1245, %v2747, %v2963
        %v2972 = vsel %vm1245, %v2748, %v2964
        %v2977 = vrot.slane %v2821, 2
        %v2978 = vrot.slane %v2822, 2
        %v2979 = vrot.slane %v2823, 2
        %v2980 = vrot.slane %v2824, 2
        %v2989 = vrot.slane %v2949, 7
        %v2990 = vrot.slane %v2950, 7
        %v2991 = vrot.slane %v2951, 7
        %v2992 = vrot.slane %v2952, 7
        %v2997 = vsel %vm1245, %v2977, %v2989
        %v2998 = vsel %vm1245, %v2978, %v2990
        %v2999 = vsel %vm1245, %v2979, %v2991
        %v3000 = vsel %vm1245, %v2980, %v2992
        %v3001 = vrot.slane %v2821, 3
        %v3002 = vrot.slane %v2822, 3
        %v3003 = vrot.slane %v2823, 3
        %v3004 = vrot.slane %v2824, 3
        %v3013 = vrot.slane %v2953, 7
        %v3014 = vrot.slane %v2954, 7
        %v3015 = vrot.slane %v2955, 7
        %v3016 = vrot.slane %v2956, 7
        %v3021 = vsel %vm1245, %v3001, %v3013
        %v3022 = vsel %vm1245, %v3002, %v3014
        %v3023 = vsel %vm1245, %v3003, %v3015
        %v3024 = vsel %vm1245, %v3004, %v3016
        %v3025 = vmul.f32 %v2969, -4.0
        %v3026 = vmul.f32 %v2970, -4.0
        %v3027 = vmul.f32 %v2971, -4.0
        %v3028 = vmul.f32 %v2972, -4.0
        %v3029 = vsel %vm2660, %v3025, -inf
        %v3030 = vrot.slane %v3029, 4
        %v3031 = vmax.f32 %v3029, %v3030
        %v3032 = vrot.slane %v3031, 2
        %v3033 = vmax.f32 %v3031, %v3032
        %v3034 = vrot.slane %v3033, 1
        %v3035 = vmax.f32 %v3033, %v3034
        %v3036 = vsel %vm2660, %v3026, -inf
        %v3037 = vrot.slane %v3036, 4
        %v3038 = vmax.f32 %v3036, %v3037
        %v3039 = vrot.slane %v3038, 2
        %v3040 = vmax.f32 %v3038, %v3039
        %v3041 = vrot.slane %v3040, 1
        %v3042 = vmax.f32 %v3040, %v3041
        %v3043 = vsel %vm2660, %v3027, -inf
        %v3044 = vrot.slane %v3043, 4
        %v3045 = vmax.f32 %v3043, %v3044
        %v3046 = vrot.slane %v3045, 2
        %v3047 = vmax.f32 %v3045, %v3046
        %v3048 = vrot.slane %v3047, 1
        %v3049 = vmax.f32 %v3047, %v3048
        %v3050 = vsel %vm2660, %v3028, -inf
        %v3051 = vrot.slane %v3050, 4
        %v3052 = vmax.f32 %v3050, %v3051
        %v3053 = vrot.slane %v3052, 2
        %v3054 = vmax.f32 %v3052, %v3053
        %v3055 = vrot.slane %v3054, 1
        %v3056 = vmax.f32 %v3054, %v3055
        %v3057 = vsub.f32 %v3025, %v3035
        %v3058 = vsub.f32 %v3026, %v3042
        %v3059 = vsub.f32 %v3027, %v3049
        %v3060 = vsub.f32 %v3028, %v3056
        %v3061 = vmul.f32 %v3057, 1.442695
        %v3062 = vpow.pop %v3061
        %v3063 = vmul.f32 %v3058, 1.442695
        %v3064 = vpow.pop %v3063
        %v3065 = vmul.f32 %v3059, 1.442695
        %v3066 = vpow.pop %v3065
        %v3067 = vmul.f32 %v3060, 1.442695
        %v3068 = vpow.pop %v3067
        %v3069 = vsel %vm2660, %v3062, 0.0
        %v3070 = vrot.slane %v3069, 4
        %v3071 = vadd.f32 %v3069, %v3070
        %v3072 = vrot.slane %v3071, 2
        %v3073 = vadd.f32 %v3071, %v3072
        %v3074 = vrot.slane %v3073, 1
        %v3075 = vadd.f32 %v3073, %v3074
        %v3076 = vsel %vm2660, %v3064, 0.0
        %v3077 = vrot.slane %v3076, 4
        %v3078 = vadd.f32 %v3076, %v3077
        %v3079 = vrot.slane %v3078, 2
        %v3080 = vadd.f32 %v3078, %v3079
        %v3081 = vrot.slane %v3080, 1
        %v3082 = vadd.f32 %v3080, %v3081
        %v3083 = vsel %vm2660, %v3066, 0.0
        %v3084 = vrot.slane %v3083, 4
        %v3085 = vadd.f32 %v3083, %v3084
        %v3086 = vrot.slane %v3085, 2
        %v3087 = vadd.f32 %v3085, %v3086
        %v3088 = vrot.slane %v3087, 1
        %v3089 = vadd.f32 %v3087, %v3088
        %v3090 = vsel %vm2660, %v3068, 0.0
        %v3091 = vrot.slane %v3090, 4
        %v3092 = vadd.f32 %v3090, %v3091
        %v3093 = vrot.slane %v3092, 2
        %v3094 = vadd.f32 %v3092, %v3093
        %v3095 = vrot.slane %v3094, 1
        %v3096 = vadd.f32 %v3094, %v3095
        %v3097 = vlog2.pop %v3075
        %v3098 = vmul.f32 %v3097, 0.6931472
        %v3099 = vlog2.pop %v3082
        %v3100 = vmul.f32 %v3099, 0.6931472
        %v3101 = vlog2.pop %v3089
        %v3102 = vmul.f32 %v3101, 0.6931472
        %v3103 = vlog2.pop %v3096
        %v3104 = vmul.f32 %v3103, 0.6931472
        %v3105 = vadd.f32 %v3035, %v3098
        %v3106 = vadd.f32 %v3042, %v3100
        %v3107 = vadd.f32 %v3049, %v3102
        %v3108 = vadd.f32 %v3056, %v3104
        %v3109 = vmul.f32 %v3105, -0.25
        %v3110 = vmul.f32 %v3106, -0.25
        %v3111 = vmul.f32 %v3107, -0.25
        %v3112 = vmul.f32 %v3108, -0.25
        %v3113 = vrcp.pop %v3075
        %v3114 = vrcp.pop %v3082
        %v3115 = vrcp.pop %v3089
        %v3116 = vrcp.pop %v3096
        %v3117 = vmul.f32 %v3062, %v3113
        %v3118 = vmul.f32 %v3064, %v3114
        %v3119 = vmul.f32 %v3066, %v3115
        %v3120 = vmul.f32 %v3068, %v3116
        %v3121 = vsel %vm1245, 0.1, 5.0
        %v3122 = vsel %vm2651, %v3121, 5.0
        %v3123 = vsel %vm573, %v3122, 1.0
        %v3124 = vmul.f32 %v2198, %v2997
        %v3125 = vmul.f32 %v2200, %v2998
        %v3126 = vmul.f32 %v2239, %v2999
        %v3127 = vmul.f32 %v2241, %v3000
        %v3132 = vrot.slane %v3021, 4
        %v3133 = vrot.slane %v3022, 4
        %v3134 = vrot.slane %v3023, 4
        %v3135 = vrot.slane %v3024, 4
        %v3140 = vmul.f32 %v2198, %v3132
        %v3141 = vmul.f32 %v2200, %v3133
        %v3142 = vmul.f32 %v2239, %v3134
        %v3143 = vmul.f32 %v2241, %v3135
        %v3148 = vrot.slane %v3140, 4
        %v3149 = vrot.slane %v3141, 4
        %v3150 = vrot.slane %v3142, 4
        %v3151 = vrot.slane %v3143, 4
        %v3156 = vadd.f32 %v3124, %v3148
        %v3157 = vadd.f32 %v3125, %v3149
        %v3158 = vadd.f32 %v3126, %v3150
        %v3159 = vadd.f32 %v3127, %v3151
        %3161 = vset.pattern.permute.xlu0 0
        %3162 = vperm.xlu0 %3161, %v3123
        %v3163 = vpop.permute.xlu0 %3162
        %v3165 = vsub.f32 %v3163, %v3156
        %v3166 = vsub.f32 %v3163, %v3157
        %v3167 = vsub.f32 %v3163, %v3158
        %v3168 = vsub.f32 %v3163, %v3159
        %v3169 = vmul.f32 %v3117, %v3165
        %v3170 = vmul.f32 %v3118, %v3166
        %v3171 = vmul.f32 %v3119, %v3167
        %v3172 = vmul.f32 %v3120, %v3168
        %v3173 = vsel %vm2660, %v3169, 0.0
        %v3174 = vrot.slane %v3173, 4
        %v3175 = vadd.f32 %v3173, %v3174
        %v3176 = vrot.slane %v3175, 2
        %v3177 = vadd.f32 %v3175, %v3176
        %v3178 = vrot.slane %v3177, 1
        %v3179 = vadd.f32 %v3177, %v3178
        %v3180 = vsel %vm2660, %v3170, 0.0
        %v3181 = vrot.slane %v3180, 4
        %v3182 = vadd.f32 %v3180, %v3181
        %v3183 = vrot.slane %v3182, 2
        %v3184 = vadd.f32 %v3182, %v3183
        %v3185 = vrot.slane %v3184, 1
        %v3186 = vadd.f32 %v3184, %v3185
        %v3187 = vsel %vm2660, %v3171, 0.0
        %v3188 = vrot.slane %v3187, 4
        %v3189 = vadd.f32 %v3187, %v3188
        %v3190 = vrot.slane %v3189, 2
        %v3191 = vadd.f32 %v3189, %v3190
        %v3192 = vrot.slane %v3191, 1
        %v3193 = vadd.f32 %v3191, %v3192
        %v3194 = vsel %vm2660, %v3172, 0.0
        %v3195 = vrot.slane %v3194, 4
        %v3196 = vadd.f32 %v3194, %v3195
        %v3197 = vrot.slane %v3196, 2
        %v3198 = vadd.f32 %v3196, %v3197
        %v3199 = vrot.slane %v3198, 1
        %v3200 = vadd.f32 %v3198, %v3199
        %v3201 = vmul.f32 %v3117, %v2198
        %v3202 = vmul.f32 %v3118, %v2200
        %v3203 = vmul.f32 %v3119, %v2239
        %v3204 = vmul.f32 %v3120, %v2241
        %v3205 = vsel %vm2660, %v3201, 0.0
        %v3206 = vrot.slane %v3205, 4
        %v3207 = vadd.f32 %v3205, %v3206
        %v3208 = vrot.slane %v3207, 2
        %v3209 = vadd.f32 %v3207, %v3208
        %v3210 = vrot.slane %v3209, 1
        %v3211 = vadd.f32 %v3209, %v3210
        %v3212 = vsel %vm2660, %v3202, 0.0
        %v3213 = vrot.slane %v3212, 4
        %v3214 = vadd.f32 %v3212, %v3213
        %v3215 = vrot.slane %v3214, 2
        %v3216 = vadd.f32 %v3214, %v3215
        %v3217 = vrot.slane %v3216, 1
        %v3218 = vadd.f32 %v3216, %v3217
        %v3219 = vsel %vm2660, %v3203, 0.0
        %v3220 = vrot.slane %v3219, 4
        %v3221 = vadd.f32 %v3219, %v3220
        %v3222 = vrot.slane %v3221, 2
        %v3223 = vadd.f32 %v3221, %v3222
        %v3224 = vrot.slane %v3223, 1
        %v3225 = vadd.f32 %v3223, %v3224
        %v3226 = vsel %vm2660, %v3204, 0.0
        %v3227 = vrot.slane %v3226, 4
        %v3228 = vadd.f32 %v3226, %v3227
        %v3229 = vrot.slane %v3228, 2
        %v3230 = vadd.f32 %v3228, %v3229
        %v3231 = vrot.slane %v3230, 1
        %v3232 = vadd.f32 %v3230, %v3231
        %v3237 = vrot.slane %v2198, 4
        %v3238 = vrot.slane %v2200, 4
        %v3239 = vrot.slane %v2239, 4
        %v3240 = vrot.slane %v2241, 4
        %v3245 = vmul.f32 %v3117, %v3237
        %v3246 = vmul.f32 %v3118, %v3238
        %v3247 = vmul.f32 %v3119, %v3239
        %v3248 = vmul.f32 %v3120, %v3240
        %v3249 = vsel %vm2660, %v3245, 0.0
        %v3250 = vrot.slane %v3249, 4
        %v3251 = vadd.f32 %v3249, %v3250
        %v3252 = vrot.slane %v3251, 2
        %v3253 = vadd.f32 %v3251, %v3252
        %v3254 = vrot.slane %v3253, 1
        %v3255 = vadd.f32 %v3253, %v3254
        %v3256 = vsel %vm2660, %v3246, 0.0
        %v3257 = vrot.slane %v3256, 4
        %v3258 = vadd.f32 %v3256, %v3257
        %v3259 = vrot.slane %v3258, 2
        %v3260 = vadd.f32 %v3258, %v3259
        %v3261 = vrot.slane %v3260, 1
        %v3262 = vadd.f32 %v3260, %v3261
        %v3263 = vsel %vm2660, %v3247, 0.0
        %v3264 = vrot.slane %v3263, 4
        %v3265 = vadd.f32 %v3263, %v3264
        %v3266 = vrot.slane %v3265, 2
        %v3267 = vadd.f32 %v3265, %v3266
        %v3268 = vrot.slane %v3267, 1
        %v3269 = vadd.f32 %v3267, %v3268
        %v3270 = vsel %vm2660, %v3248, 0.0
        %v3271 = vrot.slane %v3270, 4
        %v3272 = vadd.f32 %v3270, %v3271
        %v3273 = vrot.slane %v3272, 2
        %v3274 = vadd.f32 %v3272, %v3273
        %v3275 = vrot.slane %v3274, 1
        %v3276 = vadd.f32 %v3274, %v3275
        %v3277 = vmul.f32 %v3109, %v2580
        %v3278 = vmul.f32 %v3110, %v2582
        %v3279 = vmul.f32 %v3111, %v2621
        %v3280 = vmul.f32 %v3112, %v2623
        %v3281 = vadd.f32 %v3277, %v3179
        %v3282 = vadd.f32 %v3278, %v3186
        %v3283 = vadd.f32 %v3279, %v3193
        %v3284 = vadd.f32 %v3280, %v3200
        %v3285 = vmul.f32 %v362, -10.0
        %v3286 = vmul.f32 %v363, -10.0
        %v3287 = vmul.f32 %v3285, 1.442695
        %v3288 = vpow.pop %v3287
        %v3289 = vmul.f32 %v3286, 1.442695
        %v3290 = vpow.pop %v3289
        %v3291 = vsub.f32 1.0, %v3288
        %v3292 = vsub.f32 1.0, %v3290
        %v3295 = vlaneseq
        %v3296 = vshrl.u32 %v3295, 7
        %v3297 = vsub.s32 2, %v3296
        %v3298 = vrot.slane %v3291, %v3297
        %v3299 = vlaneseq
        %v3300 = vshrl.u32 %v3299, 7
        %v3301 = vsub.s32 6, %v3300
        %v3302 = vrot.slane %v3291, %v3301
        %v3303 = vlaneseq
        %v3304 = vshrl.u32 %v3303, 7
        %v3305 = vsub.s32 2, %v3304
        %v3306 = vrot.slane %v3292, %v3305
        %v3307 = vlaneseq
        %v3308 = vshrl.u32 %v3307, 7
        %v3309 = vsub.s32 6, %v3308
        %v3310 = vrot.slane %v3292, %v3309
        %v3315 = vmul.f32 %v3281, %v3298
        %v3316 = vmul.f32 %v3282, %v3302
        %v3317 = vmul.f32 %v3283, %v3306
        %v3318 = vmul.f32 %v3284, %v3310
        %v3319 = vmul.f32 %v3288, 0.1
        %v3320 = vmul.f32 %v3290, 0.1
        %v3323 = vlaneseq
        %v3324 = vshrl.u32 %v3323, 7
        %v3325 = vsub.s32 2, %v3324
        %v3326 = vrot.slane %v3319, %v3325
        %v3327 = vlaneseq
        %v3328 = vshrl.u32 %v3327, 7
        %v3329 = vsub.s32 6, %v3328
        %v3330 = vrot.slane %v3319, %v3329
        %v3331 = vlaneseq
        %v3332 = vshrl.u32 %v3331, 7
        %v3333 = vsub.s32 2, %v3332
        %v3334 = vrot.slane %v3320, %v3333
        %v3335 = vlaneseq
        %v3336 = vshrl.u32 %v3335, 7
        %v3337 = vsub.s32 6, %v3336
        %v3338 = vrot.slane %v3320, %v3337
        %v3343 = vadd.f32 %v3315, %v3326
        %v3344 = vadd.f32 %v3316, %v3330
        %v3345 = vadd.f32 %v3317, %v3334
        %v3346 = vadd.f32 %v3318, %v3338
        %v3351 = vcombine.low %v3343, %v3344
        %v3352 = vcombine.low %v3345, %v3346
        %v3354 = vunpack.c.l.s4 1966171168
        %v3355 = vunpack.c.0.s8 %v3354
        %v3356 = vlaneseq
        %v3357 = vshrl.u32 %v3356, 7
        %v3358 = vsub.s32 %v3355, %v3357
        %v3359 = vrot.slane %v3351, %v3358
        %v3361 = vunpack.c.l.s4 1966171168
        %v3362 = vunpack.c.0.s8 %v3361
        %v3363 = vlaneseq
        %v3364 = vshrl.u32 %v3363, 7
        %v3365 = vsub.s32 %v3362, %v3364
        %v3366 = vrot.slane %v3352, %v3365
        %v3367 = vcombine.low %v3359, %v3366
        %v3369 = vunpack.c.l.s4 1966171168
        %v3370 = vunpack.c.0.s8 %v3369
        %v3371 = vlaneseq
        %v3372 = vshrl.u32 %v3371, 7
        %v3373 = vsub.s32 %v3370, %v3372
        %v3374 = vrot.slane %v3367, %v3373
        %v3376 = vlaneseq
        %vm3377 = vcmp.ge.s32.totalorder %v3376, 0
        %vm3378 = vcmp.lt.s32.totalorder %v3376, 512
        %vm3379 = vmand %vm3377, %vm3378
        %3380 = vst.msk [vmem:[%s353] ss:$4 sm:$0xf] %vm3379, %v3374
        %v3381 = vadd.f32 %v3277, %v3211
        %v3382 = vadd.f32 %v3278, %v3218
        %v3383 = vadd.f32 %v3279, %v3225
        %v3384 = vadd.f32 %v3280, %v3232
        %v3389 = vcombine.low %v3381, %v3382
        %v3390 = vcombine.low %v3383, %v3384
        %v3392 = vunpack.c.l.s4 1966171168
        %v3393 = vunpack.c.0.s8 %v3392
        %v3394 = vlaneseq
        %v3395 = vshrl.u32 %v3394, 7
        %v3396 = vsub.s32 %v3393, %v3395
        %v3397 = vrot.slane %v3389, %v3396
        %v3399 = vunpack.c.l.s4 1966171168
        %v3400 = vunpack.c.0.s8 %v3399
        %v3401 = vlaneseq
        %v3402 = vshrl.u32 %v3401, 7
        %v3403 = vsub.s32 %v3400, %v3402
        %v3404 = vrot.slane %v3390, %v3403
        %v3405 = vcombine.high %v3397, %v3404
        %v3407 = vunpack.c.l.s4 1966171168
        %v3408 = vunpack.c.0.s8 %v3407
        %v3409 = vlaneseq
        %v3410 = vshrl.u32 %v3409, 7
        %v3411 = vsub.s32 %v3408, %v3410
        %v3412 = vrot.slane %v3405, %v3411
        %s3414 = scalar_lea.vmem %s353, 1 [#allocation2]
        %3415 = vst.msk [vmem:[%s3414] ss:$4 sm:$0xf] %vm3379, %v3412
        %v3416 = vadd.f32 %v3277, %v3255
        %v3417 = vadd.f32 %v3278, %v3262
        %v3418 = vadd.f32 %v3279, %v3269
        %v3419 = vadd.f32 %v3280, %v3276
        %v3424 = vcombine.low %v3416, %v3417
        %v3425 = vcombine.low %v3418, %v3419
        %v3427 = vunpack.c.l.s4 1966171168
        %v3428 = vunpack.c.0.s8 %v3427
        %v3429 = vlaneseq
        %v3430 = vshrl.u32 %v3429, 7
        %v3431 = vsub.s32 %v3428, %v3430
        %v3432 = vrot.slane %v3424, %v3431
        %v3434 = vunpack.c.l.s4 1966171168
        %v3435 = vunpack.c.0.s8 %v3434
        %v3436 = vlaneseq
        %v3437 = vshrl.u32 %v3436, 7
        %v3438 = vsub.s32 %v3435, %v3437
        %v3439 = vrot.slane %v3425, %v3438
        %v3440 = vcombine.low %v3432, %v3439
        %v3442 = vunpack.c.l.s4 1966171168
        %v3443 = vunpack.c.0.s8 %v3442
        %v3444 = vlaneseq
        %v3445 = vshrl.u32 %v3444, 7
        %v3446 = vsub.s32 %v3443, %v3445
        %v3447 = vrot.slane %v3440, %v3446
        %v3448 = vcombine.high %v3447, %v3447
        %s3450 = scalar_lea.vmem %s353, 2 [#allocation2]
        %3451 = vst.msk [vmem:[%s3450] ss:$4 sm:$0xf] %vm3379, %v3448
        %s3452 = sand.u32 %s247, 1
        %s3453 = scalar_lea.sflag [#allocation3], %s3452
        %s3454 = sand.u32 %s247, 1
        %s3455 = smul.addr %s3454, 16
        %s3456 = scalar_lea.vmem [#allocation2], %s3455
        // Predicated region
        $region61: #{tpu_custom_call.1} parent=59 // pred_check
          %p3457 = pneg %p257
        $region62: #{tpu_custom_call.1} parent=59 // pred_check_branch
          %3459 = sbr.rel (%p3457) target = $region64
        $region63: #{tpu_custom_call.1} parent=59 // pred_region
          %s3460 = smul.u32 4, %s24
          %s3462 = ssub.s32 256, 256
          %3463 = vsyncadd %s3453, %s3462
          %s3464 = smul.addr %s3460, 64
          %s3465 = scalar_lea.hbm %s10, %s3464
          %s3467 = sshll.u32 %s3456, 4
          %s3468 = int_to_ptr.vmem [resolvable:$true] %s3467
          %3470 = dma.vmem_to_hbm [thread:$0]  %s3468, 256, %s3465, %s3453
        $region64: #{tpu_custom_call.1} parent=59 // pred_fallthru
          _
      $region60: #{tpu_custom_call.1} parent=5 // pred_fallthru
        _
      %p3471 = scmp.le.s32.totalorder 2, %s19
      // Predicated region
      $region65: #{tpu_custom_call.1} parent=5 // pred_check
        %p3472 = pneg %p3471
      $region66: #{tpu_custom_call.1} parent=5 // pred_check_branch
        %3474 = sbr.rel (%p3472) target = $region68
      $region67: #{tpu_custom_call.1} parent=5 // pred_region
        %s3475 = ssub.s32 %s19, 2
        // Predicated region
        $region69: #{tpu_custom_call.1} parent=67 // pred_check
          %p3476 = pneg %p263
        $region70: #{tpu_custom_call.1} parent=67 // pred_check_branch
          %3478 = sbr.rel (%p3476) target = $region72
        $region71: #{tpu_custom_call.1} parent=67 // pred_region
          %s3479 = sand.u32 %s248, 1
          %s3480 = scalar_lea.sflag [#allocation3], %s3479
          %s3481 = sand.u32 %s248, 1
          %s3482 = smul.addr %s3481, 16
          %s3483 = scalar_lea.vmem [#allocation2], %s3482
          %3484 = dma.done %s3480, 256
        $region72: #{tpu_custom_call.1} parent=67 // pred_fallthru
          _
      $region68: #{tpu_custom_call.1} parent=5 // pred_fallthru
        _
    $region6: #{tpu_custom_call.1} parent=1 // loop_footer
      %s23 = sadd.s32 1, %s19
    $region7: #{tpu_custom_call.1} parent=1 // loop_footer_branch
      %18 = sbr.rel target = $region3
    $region8: #{tpu_custom_call.1} parent=1 // loop_exit
      _
    %3485 = vsyncpa [#allocation3], 1
    %s3486 = scalar_lea.sflag [#allocation3], 1
    %3487 = vsyncpa %s3486, 1

</llo_original>
